<compile_context>
chip_gen: v7x
topology: tpu7x:2x2x1
jax: 0.10.0
libtpu: 0.0.40
codegen_flags: <defaults>
</compile_context>

<pallas_src>
import jax
import jax.numpy as jnp
from jax import lax
from jax.experimental import pallas as pl
from jax.experimental.pallas import tpu as pltpu

# ----------------------- tiny synthetic config (lane-dense) -------------------------
HIDDEN = 128                 # multiple of 128 -> lane-dense activations & weights
N_HEADS = 2
HEAD_DIM = HIDDEN // N_HEADS
N_LAYERS = 2
FFN = 4 * HIDDEN             # 512
VOCAB = 100
MAX_POS = 32
SEQ = 8
BATCH = 2
B_TOTAL = 2 * BATCH          # both sentences batched through one encoder pass
M_ROWS = B_TOTAL * SEQ
LN_EPS = 1e-5
COS_EPS = 1e-6               # nn.CosineSimilarity(dim=1, eps=1e-06)
PAD_ID = 1                   # RoBERTa padding_idx


# --------------------------------- in-kernel helpers --------------------------------

def _layernorm(x, g, b):
    mu = jnp.mean(x, axis=-1, keepdims=True)
    xc = x - mu
    var = jnp.mean(xc * xc, axis=-1, keepdims=True)
    return xc * lax.rsqrt(var + LN_EPS) * g + b


def _gelu(x):
    # TODO(synk): HF RoBERTa uses the exact erf GELU; tanh approximation kept because
    # erf has no guaranteed Mosaic lowering at this JAX version.
    return 0.5 * x * (1.0 + jnp.tanh(0.7978845608028654 * (x + 0.044715 * x * x * x)))


def _bf(x):
    return x.astype(jnp.bfloat16)


# --------------------------------- fused encoder kernel -----------------------------

def _encoder_kernel(
    # inputs
    x_emb_ref, bias_ref, label_ref,
    emb_g_ref, emb_b_ref,
    wqkv_ref, bqkv_ref, wo_ref, bo_ref, ln1_g_ref, ln1_b_ref,
    w1_ref, b1_ref, w2_ref, b2_ref, ln2_g_ref, ln2_b_ref,
    pool_w_ref, pool_b_ref,
    # outputs
    cos_ref, loss_ref,
):
    f32 = jnp.float32

    # Embedding layernorm once; activations stay in registers for the whole encoder.
    x = _layernorm(x_emb_ref[...], emb_g_ref[...], emb_b_ref[...])   # (M, H) f32
    bias = bias_ref[...]            # (M, M) additive block-diagonal + padding bias
    scale = 1.0 / float(HEAD_DIM) ** 0.5

    # ---------------- encoder layers: in-kernel loop, weights VMEM-resident ---------
    for layer in range(N_LAYERS):
        # fused QKV projection: one MXU push (bf16 operands, f32 accumulate)
        qkv = jnp.dot(_bf(x), wqkv_ref[layer],
                      preferred_element_type=f32) + bqkv_ref[layer]   # (M, 3H)

        # attention: per head, ALL sentences batched into one scores matmul and one
        # P@V matmul; the block-diag bias keeps sentences from attending each other.
        ctx_heads = []
        for h in range(N_HEADS):
            c = h * HEAD_DIM
            q = qkv[:, c:c + HEAD_DIM]
            k = qkv[:, HIDDEN + c:HIDDEN + c + HEAD_DIM]
            v = qkv[:, 2 * HIDDEN + c:2 * HIDDEN + c + HEAD_DIM]
            s = lax.dot_general(_bf(q), _bf(k), (((1,), (1,)), ((), ())),
                                preferred_element_type=f32) * scale + bias   # (M, M)
            s = s - jnp.max(s, axis=-1, keepdims=True)
            p = jnp.exp(s)
            # NOTE: approx reciprocal (EUP) -> ~1e-3 rel. error vs torch.softmax.
            p = p * pl.reciprocal(jnp.sum(p, axis=-1, keepdims=True), approx=True)
            ctx_heads.append(jnp.dot(_bf(p), _bf(v), preferred_element_type=f32))
        ctx = jnp.concatenate(ctx_heads, axis=-1)        # (M, H) built in registers

        # output projection + residual + LN1
        attn = jnp.dot(_bf(ctx), wo_ref[layer],
                       preferred_element_type=f32) + bo_ref[layer]
        x = _layernorm(attn + x, ln1_g_ref[layer], ln1_b_ref[layer])

        # FFN + residual + LN2
        h1 = _gelu(jnp.dot(_bf(x), w1_ref[layer],
                           preferred_element_type=f32) + b1_ref[layer])
        h2 = jnp.dot(_bf(h1), w2_ref[layer],
                     preferred_element_type=f32) + b2_ref[layer]
        x = _layernorm(h2 + x, ln2_g_ref[layer], ln2_b_ref[layer])

    # ---------------- pooler: CLS rows gathered in registers (no masked stores) -----
    cls = jnp.concatenate([x[b * SEQ:b * SEQ + 1, :] for b in range(B_TOTAL)], axis=0)
    pooled = jnp.tanh(jnp.dot(_bf(cls), pool_w_ref[...],
                              preferred_element_type=f32) + pool_b_ref[...])
    e1 = pooled[:BATCH, :]                       # sentence 1 pooler_output
    e2 = pooled[BATCH:, :]                       # sentence 2 pooler_output

    # cosine similarity (dim=1, eps=1e-6): dot / max(||e1||*||e2||, eps)
    d12 = jnp.sum(e1 * e2, axis=-1, keepdims=True)
    n1 = jnp.sum(e1 * e1, axis=-1, keepdims=True)
    n2 = jnp.sum(e2 * e2, axis=-1, keepdims=True)
    cos = d12 * lax.rsqrt(jnp.maximum(n1 * n2, COS_EPS * COS_EPS))
    cos_ref[...] = cos

    # CosineEmbeddingLoss(margin=0, reduction='mean'); labels are SMEM scalars.
    y = jnp.concatenate(
        [jnp.full((1, 1), label_ref[b], jnp.float32) for b in range(BATCH)], axis=0)
    per = jnp.where(y > 0, 1.0 - cos, jnp.maximum(cos, 0.0))
    loss_ref[...] = jnp.sum(per, axis=0, keepdims=True) * (1.0 / BATCH)


def fused_encoder(params, x_emb, bias, label):
    f32 = jnp.float32
    vmem = pl.BlockSpec(memory_space=pltpu.MemorySpace.VMEM)
    smem = pl.BlockSpec(memory_space=pltpu.MemorySpace.SMEM)

    in_specs = [vmem, vmem, smem] + [vmem] * 16
    out_specs = [vmem, vmem]
    out_shape = [
        jax.ShapeDtypeStruct((BATCH, 1), f32),   # cosine similarity per pair
        jax.ShapeDtypeStruct((1, 1), f32),       # CosineEmbeddingLoss (mean)
    ]
    # TODO(synk): at real roberta-small sizes, re-introduce a layer grid with
    # Buffered weight prefetch + a parallel batch/seq axis (v7x 2nd TensorCore) and
    # an explicit vmem_limit_bytes for v7x's 64 MiB VMEM.
    cos, loss = pl.pallas_call(
        _encoder_kernel,
        in_specs=in_specs,
        out_specs=out_specs,
        out_shape=out_shape,
    )(
        x_emb, bias, label.astype(f32),
        params["emb_ln_g"], params["emb_ln_b"],
        params["wqkv"], params["bqkv"], params["wo"], params["bo"],
        params["ln1_g"], params["ln1_b"],
        params["w1"], params["b1"], params["w2"], params["b2"],
        params["ln2_g"], params["ln2_b"],
        params["pool_w"], params["pool_b"],
    )
    return cos, loss


# ------------------------------------- parameters -----------------------------------

def init_params(key):
    keys = jax.random.split(key, 8)
    it = iter(keys)
    bf16, f32 = jnp.bfloat16, jnp.float32

    def rnd(shape, dtype=f32, scale=0.02):
        return (scale * jax.random.normal(next(it), shape)).astype(dtype)

    return {
        "word_emb": rnd((VOCAB, HIDDEN)),
        "pos_emb": rnd((MAX_POS, HIDDEN)),
        "type_emb": rnd((1, HIDDEN)),
        "emb_ln_g": jnp.ones((1, HIDDEN), f32),
        "emb_ln_b": jnp.zeros((1, HIDDEN), f32),
        # per-layer matmul weights stacked on a leading layer dim, stored bf16 (MXU)
        "wqkv": rnd((N_LAYERS, HIDDEN, 3 * HIDDEN), bf16),
        "bqkv": jnp.zeros((N_LAYERS, 1, 3 * HIDDEN), f32),
        "wo": rnd((N_LAYERS, HIDDEN, HIDDEN), bf16),
        "bo": jnp.zeros((N_LAYERS, 1, HIDDEN), f32),
        "ln1_g": jnp.ones((N_LAYERS, 1, HIDDEN), f32),
        "ln1_b": jnp.zeros((N_LAYERS, 1, HIDDEN), f32),
        "w1": rnd((N_LAYERS, HIDDEN, FFN), bf16),
        "b1": jnp.zeros((N_LAYERS, 1, FFN), f32),
        "w2": rnd((N_LAYERS, FFN, HIDDEN), bf16),
        "b2": jnp.zeros((N_LAYERS, 1, HIDDEN), f32),
        "ln2_g": jnp.ones((N_LAYERS, 1, HIDDEN), f32),
        "ln2_b": jnp.zeros((N_LAYERS, 1, HIDDEN), f32),
        "pool_w": rnd((HIDDEN, HIDDEN), bf16),
        "pool_b": jnp.zeros((1, HIDDEN), f32),
    }


# ------------------------------------- model forward --------------------------------

def embed(params, input_ids):
    """Embedding gathers are data-dependent glue (not the hot path) -> plain JAX."""
    B, S = input_ids.shape
    not_pad = (input_ids != PAD_ID).astype(jnp.int32)
    # HF RoBERTa create_position_ids_from_input_ids: cumsum over non-pad + padding_idx
    pos_ids = jnp.cumsum(not_pad, axis=-1) * not_pad + PAD_ID
    we = jnp.take(params["word_emb"], input_ids, axis=0)          # (B, S, H)
    pe = jnp.take(params["pos_emb"], pos_ids, axis=0)             # (B, S, H)
    te = params["type_emb"][0][None, None, :]                     # (1, 1, H)
    return (we + pe + te).reshape(B * S, HIDDEN)


def roberta_forward(params, st1, st2, label):
    # Both sentences batched through one encoder pass: halves launches, doubles rows.
    ids = jnp.concatenate([st1["input_ids"], st2["input_ids"]], axis=0)
    amask = jnp.concatenate([st1["attention_mask"], st2["attention_mask"]], axis=0)
    x_emb = embed(params, ids)                                    # (M_ROWS, H)

    # Block-diagonal (per-sentence) + key-padding additive bias, built once in XLA,
    # consumed in f32 inside the kernel so the bf16 matmul path never sees -1e9.
    row_batch = jnp.arange(M_ROWS, dtype=jnp.int32) // SEQ
    same = row_batch[:, None] == row_batch[None, :]
    key_ok = (amask.reshape(M_ROWS) > 0)[None, :]
    bias = jnp.where(same & key_ok, 0.0, -1e9).astype(jnp.float32)   # (M, M)

    cos, loss = fused_encoder(params, x_emb, bias, label)
    # TODO(synk): _back_propagation (loss.backward + AdamW step) is a training
    # side-effect with no forward-kernel equivalent; forward-only here.
    return cos[:, 0], loss[0, 0], label


# ----------------------------------------- main --------------------------------------

if __name__ == "__main__":
    key = jax.random.PRNGKey(0)
    kp, k1, k2 = jax.random.split(key, 3)

    params = init_params(kp)

    st1 = {
        "input_ids": jax.random.randint(k1, (BATCH, SEQ), 0, VOCAB, dtype=jnp.int32),
        "attention_mask": jnp.ones((BATCH, SEQ), jnp.int32),
    }
    st2 = {
        "input_ids": jax.random.randint(k2, (BATCH, SEQ), 0, VOCAB, dtype=jnp.int32),
        "attention_mask": jnp.ones((BATCH, SEQ), jnp.int32),
    }
    label = jnp.array([1.0, -1.0], jnp.float32)

    fwd = jax.jit(roberta_forward)
    cos, loss, lab = fwd(params, st1, st2, label)
    jax.block_until_ready((cos, loss, lab))

    assert cos.shape == (BATCH,) and loss.shape == ()
    print("KERNEL_OK")
</pallas_src>

<mosaic_0001>
module attributes {stable_mosaic.version = 11 : i64} {
  func.func @_encoder_kernel(%arg0: memref<32x128xf32, #tpu.memory_space<vmem>>, %arg1: memref<32x32xf32, #tpu.memory_space<vmem>>, %arg2: memref<2xf32, #tpu.memory_space<smem>>, %arg3: memref<1x128xf32, #tpu.memory_space<vmem>>, %arg4: memref<1x128xf32, #tpu.memory_space<vmem>>, %arg5: memref<2x128x384xbf16, #tpu.memory_space<vmem>>, %arg6: memref<2x1x384xf32, #tpu.memory_space<vmem>>, %arg7: memref<2x128x128xbf16, #tpu.memory_space<vmem>>, %arg8: memref<2x1x128xf32, #tpu.memory_space<vmem>>, %arg9: memref<2x1x128xf32, #tpu.memory_space<vmem>>, %arg10: memref<2x1x128xf32, #tpu.memory_space<vmem>>, %arg11: memref<2x128x512xbf16, #tpu.memory_space<vmem>>, %arg12: memref<2x1x512xf32, #tpu.memory_space<vmem>>, %arg13: memref<2x512x128xbf16, #tpu.memory_space<vmem>>, %arg14: memref<2x1x128xf32, #tpu.memory_space<vmem>>, %arg15: memref<2x1x128xf32, #tpu.memory_space<vmem>>, %arg16: memref<2x1x128xf32, #tpu.memory_space<vmem>>, %arg17: memref<128x128xbf16, #tpu.memory_space<vmem>>, %arg18: memref<1x128xf32, #tpu.memory_space<vmem>>, %arg19: memref<2x1xf32, #tpu.memory_space<vmem>>, %arg20: memref<1x1xf32, #tpu.memory_space<vmem>>) attributes {dimension_semantics = [], scalar_prefetch = 0 : i64, scratch_operands = 0 : i64, tpu.core_type = #tpu.core_type<tc>} {
    %c0 = arith.constant 0 : index
    %c0_0 = arith.constant 0 : index
    %0 = vector.load %arg0[%c0, %c0_0] : memref<32x128xf32, #tpu.memory_space<vmem>>, vector<32x128xf32>
    %c0_1 = arith.constant 0 : index
    %c0_2 = arith.constant 0 : index
    %1 = vector.load %arg3[%c0_1, %c0_2] : memref<1x128xf32, #tpu.memory_space<vmem>>, vector<1x128xf32>
    %c0_3 = arith.constant 0 : index
    %c0_4 = arith.constant 0 : index
    %2 = vector.load %arg4[%c0_3, %c0_4] : memref<1x128xf32, #tpu.memory_space<vmem>>, vector<1x128xf32>
    %cst = arith.constant dense<0.000000e+00> : vector<32xf32>
    %3 = vector.multi_reduction <add>, %0, %cst [1] : vector<32x128xf32> to vector<32xf32>
    %4 = vector.shape_cast %3 : vector<32xf32> to vector<32x1xf32>
    %cst_5 = arith.constant 1.280000e+02 : f32
    %5 = vector.broadcast %cst_5 : f32 to vector<32x1xf32>
    %6 = arith.divf %4, %5 : vector<32x1xf32>
    %7 = vector.broadcast %6 : vector<32x1xf32> to vector<32x128xf32>
    %8 = arith.subf %0, %7 : vector<32x128xf32>
    %9 = arith.mulf %8, %8 : vector<32x128xf32>
    %cst_6 = arith.constant dense<0.000000e+00> : vector<32xf32>
    %10 = vector.multi_reduction <add>, %9, %cst_6 [1] : vector<32x128xf32> to vector<32xf32>
    %11 = vector.shape_cast %10 : vector<32xf32> to vector<32x1xf32>
    %cst_7 = arith.constant 1.280000e+02 : f32
    %12 = vector.broadcast %cst_7 : f32 to vector<32x1xf32>
    %13 = arith.divf %11, %12 : vector<32x1xf32>
    %cst_8 = arith.constant 9.99999974E-6 : f32
    %14 = vector.broadcast %cst_8 : f32 to vector<32x1xf32>
    %15 = arith.addf %13, %14 : vector<32x1xf32>
    %16 = math.rsqrt %15 : vector<32x1xf32>
    %17 = vector.broadcast %16 : vector<32x1xf32> to vector<32x128xf32>
    %18 = arith.mulf %8, %17 : vector<32x128xf32>
    %19 = vector.broadcast %1 : vector<1x128xf32> to vector<32x128xf32>
    %20 = arith.mulf %18, %19 : vector<32x128xf32>
    %21 = vector.broadcast %2 : vector<1x128xf32> to vector<32x128xf32>
    %22 = arith.addf %20, %21 : vector<32x128xf32>
    %c0_9 = arith.constant 0 : index
    %c0_10 = arith.constant 0 : index
    %23 = vector.load %arg1[%c0_9, %c0_10] : memref<32x32xf32, #tpu.memory_space<vmem>>, vector<32x32xf32>
    %24 = arith.truncf %22 : vector<32x128xf32> to vector<32x128xbf16>
    %c0_11 = arith.constant 0 : index
    %c0_12 = arith.constant 0 : index
    %c0_13 = arith.constant 0 : index
    %25 = vector.load %arg5[%c0_11, %c0_12, %c0_13] : memref<2x128x384xbf16, #tpu.memory_space<vmem>>, vector<1x128x384xbf16>
    %26 = vector.shape_cast %25 : vector<1x128x384xbf16> to vector<128x384xbf16>
    %cst_14 = arith.constant dense<0.000000e+00> : vector<32x384xf32>
    %27 = tpu.matmul %24, %26, %cst_14 {dimension_numbers = #tpu.dot_dimension_numbers<[1], [0], [0], [1], [0, 0, 1, 1], [], []>} : vector<32x128xbf16>, vector<128x384xbf16>, vector<32x384xf32> -> vector<32x384xf32>
    %c0_15 = arith.constant 0 : index
    %c0_16 = arith.constant 0 : index
    %c0_17 = arith.constant 0 : index
    %28 = vector.load %arg6[%c0_15, %c0_16, %c0_17] : memref<2x1x384xf32, #tpu.memory_space<vmem>>, vector<1x1x384xf32>
    %29 = vector.shape_cast %28 : vector<1x1x384xf32> to vector<1x384xf32>
    %30 = vector.broadcast %29 : vector<1x384xf32> to vector<32x384xf32>
    %31 = arith.addf %27, %30 : vector<32x384xf32>
    %32 = vector.extract_strided_slice %31 {offsets = [0, 0], sizes = [32, 64], strides = [1, 1]} : vector<32x384xf32> to vector<32x64xf32>
    %33 = vector.extract_strided_slice %31 {offsets = [0, 128], sizes = [32, 64], strides = [1, 1]} : vector<32x384xf32> to vector<32x64xf32>
    %34 = vector.extract_strided_slice %31 {offsets = [0, 256], sizes = [32, 64], strides = [1, 1]} : vector<32x384xf32> to vector<32x64xf32>
    %35 = arith.truncf %32 : vector<32x64xf32> to vector<32x64xbf16>
    %36 = arith.truncf %33 : vector<32x64xf32> to vector<32x64xbf16>
    %cst_18 = arith.constant dense<0.000000e+00> : vector<32x32xf32>
    %37 = tpu.matmul %35, %36, %cst_18 {dimension_numbers = #tpu.dot_dimension_numbers<[1], [1], [0], [0], [0, 0, 1, 0], [], []>} : vector<32x64xbf16>, vector<32x64xbf16>, vector<32x32xf32> -> vector<32x32xf32>
    %cst_19 = arith.constant 1.250000e-01 : f32
    %38 = vector.broadcast %cst_19 : f32 to vector<32x32xf32>
    %39 = arith.mulf %37, %38 : vector<32x32xf32>
    %40 = arith.addf %39, %23 : vector<32x32xf32>
    %cst_20 = arith.constant dense<0xFF800000> : vector<32xf32>
    %41 = vector.multi_reduction <maximumf>, %40, %cst_20 [1] : vector<32x32xf32> to vector<32xf32>
    %42 = vector.shape_cast %41 : vector<32xf32> to vector<32x1xf32>
    %43 = vector.broadcast %42 : vector<32x1xf32> to vector<32x32xf32>
    %44 = arith.subf %40, %43 : vector<32x32xf32>
    %45 = math.exp %44 : vector<32x32xf32>
    %cst_21 = arith.constant dense<0.000000e+00> : vector<32xf32>
    %46 = vector.multi_reduction <add>, %45, %cst_21 [1] : vector<32x32xf32> to vector<32xf32>
    %47 = vector.shape_cast %46 : vector<32xf32> to vector<32x1xf32>
    %48 = tpu.reciprocal %47 {approx = true} : vector<32x1xf32> -> vector<32x1xf32>
    %49 = vector.broadcast %48 : vector<32x1xf32> to vector<32x32xf32>
    %50 = arith.mulf %45, %49 : vector<32x32xf32>
    %51 = arith.truncf %50 : vector<32x32xf32> to vector<32x32xbf16>
    %52 = arith.truncf %34 : vector<32x64xf32> to vector<32x64xbf16>
    %cst_22 = arith.constant dense<0.000000e+00> : vector<32x64xf32>
    %53 = tpu.matmul %51, %52, %cst_22 {dimension_numbers = #tpu.dot_dimension_numbers<[1], [0], [0], [1], [0, 0, 1, 1], [], []>} : vector<32x32xbf16>, vector<32x64xbf16>, vector<32x64xf32> -> vector<32x64xf32>
    %54 = vector.extract_strided_slice %31 {offsets = [0, 64], sizes = [32, 64], strides = [1, 1]} : vector<32x384xf32> to vector<32x64xf32>
    %55 = vector.extract_strided_slice %31 {offsets = [0, 192], sizes = [32, 64], strides = [1, 1]} : vector<32x384xf32> to vector<32x64xf32>
    %56 = vector.extract_strided_slice %31 {offsets = [0, 320], sizes = [32, 64], strides = [1, 1]} : vector<32x384xf32> to vector<32x64xf32>
    %57 = arith.truncf %54 : vector<32x64xf32> to vector<32x64xbf16>
    %58 = arith.truncf %55 : vector<32x64xf32> to vector<32x64xbf16>
    %cst_23 = arith.constant dense<0.000000e+00> : vector<32x32xf32>
    %59 = tpu.matmul %57, %58, %cst_23 {dimension_numbers = #tpu.dot_dimension_numbers<[1], [1], [0], [0], [0, 0, 1, 0], [], []>} : vector<32x64xbf16>, vector<32x64xbf16>, vector<32x32xf32> -> vector<32x32xf32>
    %cst_24 = arith.constant 1.250000e-01 : f32
    %60 = vector.broadcast %cst_24 : f32 to vector<32x32xf32>
    %61 = arith.mulf %59, %60 : vector<32x32xf32>
    %62 = arith.addf %61, %23 : vector<32x32xf32>
    %cst_25 = arith.constant dense<0xFF800000> : vector<32xf32>
    %63 = vector.multi_reduction <maximumf>, %62, %cst_25 [1] : vector<32x32xf32> to vector<32xf32>
    %64 = vector.shape_cast %63 : vector<32xf32> to vector<32x1xf32>
    %65 = vector.broadcast %64 : vector<32x1xf32> to vector<32x32xf32>
    %66 = arith.subf %62, %65 : vector<32x32xf32>
    %67 = math.exp %66 : vector<32x32xf32>
    %cst_26 = arith.constant dense<0.000000e+00> : vector<32xf32>
    %68 = vector.multi_reduction <add>, %67, %cst_26 [1] : vector<32x32xf32> to vector<32xf32>
    %69 = vector.shape_cast %68 : vector<32xf32> to vector<32x1xf32>
    %70 = tpu.reciprocal %69 {approx = true} : vector<32x1xf32> -> vector<32x1xf32>
    %71 = vector.broadcast %70 : vector<32x1xf32> to vector<32x32xf32>
    %72 = arith.mulf %67, %71 : vector<32x32xf32>
    %73 = arith.truncf %72 : vector<32x32xf32> to vector<32x32xbf16>
    %74 = arith.truncf %56 : vector<32x64xf32> to vector<32x64xbf16>
    %cst_27 = arith.constant dense<0.000000e+00> : vector<32x64xf32>
    %75 = tpu.matmul %73, %74, %cst_27 {dimension_numbers = #tpu.dot_dimension_numbers<[1], [0], [0], [1], [0, 0, 1, 1], [], []>} : vector<32x32xbf16>, vector<32x64xbf16>, vector<32x64xf32> -> vector<32x64xf32>
    %76 = tpu.concatenate %53, %75 in 1 : vector<32x64xf32>, vector<32x64xf32> -> vector<32x128xf32>
    %77 = arith.truncf %76 : vector<32x128xf32> to vector<32x128xbf16>
    %c0_28 = arith.constant 0 : index
    %c0_29 = arith.constant 0 : index
    %c0_30 = arith.constant 0 : index
    %78 = vector.load %arg7[%c0_28, %c0_29, %c0_30] : memref<2x128x128xbf16, #tpu.memory_space<vmem>>, vector<1x128x128xbf16>
    %79 = vector.shape_cast %78 : vector<1x128x128xbf16> to vector<128x128xbf16>
    %cst_31 = arith.constant dense<0.000000e+00> : vector<32x128xf32>
    %80 = tpu.matmul %77, %79, %cst_31 {dimension_numbers = #tpu.dot_dimension_numbers<[1], [0], [0], [1], [0, 0, 1, 1], [], []>} : vector<32x128xbf16>, vector<128x128xbf16>, vector<32x128xf32> -> vector<32x128xf32>
    %c0_32 = arith.constant 0 : index
    %c0_33 = arith.constant 0 : index
    %c0_34 = arith.constant 0 : index
    %81 = vector.load %arg8[%c0_32, %c0_33, %c0_34] : memref<2x1x128xf32, #tpu.memory_space<vmem>>, vector<1x1x128xf32>
    %82 = vector.shape_cast %81 : vector<1x1x128xf32> to vector<1x128xf32>
    %83 = vector.broadcast %82 : vector<1x128xf32> to vector<32x128xf32>
    %84 = arith.addf %80, %83 : vector<32x128xf32>
    %85 = arith.addf %84, %22 : vector<32x128xf32>
    %c0_35 = arith.constant 0 : index
    %c0_36 = arith.constant 0 : index
    %c0_37 = arith.constant 0 : index
    %86 = vector.load %arg9[%c0_35, %c0_36, %c0_37] : memref<2x1x128xf32, #tpu.memory_space<vmem>>, vector<1x1x128xf32>
    %87 = vector.shape_cast %86 : vector<1x1x128xf32> to vector<1x128xf32>
    %c0_38 = arith.constant 0 : index
    %c0_39 = arith.constant 0 : index
    %c0_40 = arith.constant 0 : index
    %88 = vector.load %arg10[%c0_38, %c0_39, %c0_40] : memref<2x1x128xf32, #tpu.memory_space<vmem>>, vector<1x1x128xf32>
    %89 = vector.shape_cast %88 : vector<1x1x128xf32> to vector<1x128xf32>
    %cst_41 = arith.constant dense<0.000000e+00> : vector<32xf32>
    %90 = vector.multi_reduction <add>, %85, %cst_41 [1] : vector<32x128xf32> to vector<32xf32>
    %91 = vector.shape_cast %90 : vector<32xf32> to vector<32x1xf32>
    %cst_42 = arith.constant 1.280000e+02 : f32
    %92 = vector.broadcast %cst_42 : f32 to vector<32x1xf32>
    %93 = arith.divf %91, %92 : vector<32x1xf32>
    %94 = vector.broadcast %93 : vector<32x1xf32> to vector<32x128xf32>
    %95 = arith.subf %85, %94 : vector<32x128xf32>
    %96 = arith.mulf %95, %95 : vector<32x128xf32>
    %cst_43 = arith.constant dense<0.000000e+00> : vector<32xf32>
    %97 = vector.multi_reduction <add>, %96, %cst_43 [1] : vector<32x128xf32> to vector<32xf32>
    %98 = vector.shape_cast %97 : vector<32xf32> to vector<32x1xf32>
    %cst_44 = arith.constant 1.280000e+02 : f32
    %99 = vector.broadcast %cst_44 : f32 to vector<32x1xf32>
    %100 = arith.divf %98, %99 : vector<32x1xf32>
    %cst_45 = arith.constant 9.99999974E-6 : f32
    %101 = vector.broadcast %cst_45 : f32 to vector<32x1xf32>
    %102 = arith.addf %100, %101 : vector<32x1xf32>
    %103 = math.rsqrt %102 : vector<32x1xf32>
    %104 = vector.broadcast %103 : vector<32x1xf32> to vector<32x128xf32>
    %105 = arith.mulf %95, %104 : vector<32x128xf32>
    %106 = vector.broadcast %87 : vector<1x128xf32> to vector<32x128xf32>
    %107 = arith.mulf %105, %106 : vector<32x128xf32>
    %108 = vector.broadcast %89 : vector<1x128xf32> to vector<32x128xf32>
    %109 = arith.addf %107, %108 : vector<32x128xf32>
    %110 = arith.truncf %109 : vector<32x128xf32> to vector<32x128xbf16>
    %c0_46 = arith.constant 0 : index
    %c0_47 = arith.constant 0 : index
    %c0_48 = arith.constant 0 : index
    %111 = vector.load %arg11[%c0_46, %c0_47, %c0_48] : memref<2x128x512xbf16, #tpu.memory_space<vmem>>, vector<1x128x512xbf16>
    %112 = vector.shape_cast %111 : vector<1x128x512xbf16> to vector<128x512xbf16>
    %cst_49 = arith.constant dense<0.000000e+00> : vector<32x512xf32>
    %113 = tpu.matmul %110, %112, %cst_49 {dimension_numbers = #tpu.dot_dimension_numbers<[1], [0], [0], [1], [0, 0, 1, 1], [], []>} : vector<32x128xbf16>, vector<128x512xbf16>, vector<32x512xf32> -> vector<32x512xf32>
    %c0_50 = arith.constant 0 : index
    %c0_51 = arith.constant 0 : index
    %c0_52 = arith.constant 0 : index
    %114 = vector.load %arg12[%c0_50, %c0_51, %c0_52] : memref<2x1x512xf32, #tpu.memory_space<vmem>>, vector<1x1x512xf32>
    %115 = vector.shape_cast %114 : vector<1x1x512xf32> to vector<1x512xf32>
    %116 = vector.broadcast %115 : vector<1x512xf32> to vector<32x512xf32>
    %117 = arith.addf %113, %116 : vector<32x512xf32>
    %cst_53 = arith.constant 5.000000e-01 : f32
    %118 = vector.broadcast %cst_53 : f32 to vector<32x512xf32>
    %119 = arith.mulf %118, %117 : vector<32x512xf32>
    %cst_54 = arith.constant 4.471500e-02 : f32
    %120 = vector.broadcast %cst_54 : f32 to vector<32x512xf32>
    %121 = arith.mulf %120, %117 : vector<32x512xf32>
    %122 = arith.mulf %121, %117 : vector<32x512xf32>
    %123 = arith.mulf %122, %117 : vector<32x512xf32>
    %124 = arith.addf %117, %123 : vector<32x512xf32>
    %cst_55 = arith.constant 0.797884583 : f32
    %125 = vector.broadcast %cst_55 : f32 to vector<32x512xf32>
    %126 = arith.mulf %125, %124 : vector<32x512xf32>
    %127 = math.tanh %126 : vector<32x512xf32>
    %cst_56 = arith.constant 1.000000e+00 : f32
    %128 = vector.broadcast %cst_56 : f32 to vector<32x512xf32>
    %129 = arith.addf %128, %127 : vector<32x512xf32>
    %130 = arith.mulf %119, %129 : vector<32x512xf32>
    %131 = arith.truncf %130 : vector<32x512xf32> to vector<32x512xbf16>
    %c0_57 = arith.constant 0 : index
    %c0_58 = arith.constant 0 : index
    %c0_59 = arith.constant 0 : index
    %132 = vector.load %arg13[%c0_57, %c0_58, %c0_59] : memref<2x512x128xbf16, #tpu.memory_space<vmem>>, vector<1x512x128xbf16>
    %133 = vector.shape_cast %132 : vector<1x512x128xbf16> to vector<512x128xbf16>
    %cst_60 = arith.constant dense<0.000000e+00> : vector<32x128xf32>
    %134 = tpu.matmul %131, %133, %cst_60 {dimension_numbers = #tpu.dot_dimension_numbers<[1], [0], [0], [1], [0, 0, 1, 1], [], []>} : vector<32x512xbf16>, vector<512x128xbf16>, vector<32x128xf32> -> vector<32x128xf32>
    %c0_61 = arith.constant 0 : index
    %c0_62 = arith.constant 0 : index
    %c0_63 = arith.constant 0 : index
    %135 = vector.load %arg14[%c0_61, %c0_62, %c0_63] : memref<2x1x128xf32, #tpu.memory_space<vmem>>, vector<1x1x128xf32>
    %136 = vector.shape_cast %135 : vector<1x1x128xf32> to vector<1x128xf32>
    %137 = vector.broadcast %136 : vector<1x128xf32> to vector<32x128xf32>
    %138 = arith.addf %134, %137 : vector<32x128xf32>
    %139 = arith.addf %138, %109 : vector<32x128xf32>
    %c0_64 = arith.constant 0 : index
    %c0_65 = arith.constant 0 : index
    %c0_66 = arith.constant 0 : index
    %140 = vector.load %arg15[%c0_64, %c0_65, %c0_66] : memref<2x1x128xf32, #tpu.memory_space<vmem>>, vector<1x1x128xf32>
    %141 = vector.shape_cast %140 : vector<1x1x128xf32> to vector<1x128xf32>
    %c0_67 = arith.constant 0 : index
    %c0_68 = arith.constant 0 : index
    %c0_69 = arith.constant 0 : index
    %142 = vector.load %arg16[%c0_67, %c0_68, %c0_69] : memref<2x1x128xf32, #tpu.memory_space<vmem>>, vector<1x1x128xf32>
    %143 = vector.shape_cast %142 : vector<1x1x128xf32> to vector<1x128xf32>
    %cst_70 = arith.constant dense<0.000000e+00> : vector<32xf32>
    %144 = vector.multi_reduction <add>, %139, %cst_70 [1] : vector<32x128xf32> to vector<32xf32>
    %145 = vector.shape_cast %144 : vector<32xf32> to vector<32x1xf32>
    %cst_71 = arith.constant 1.280000e+02 : f32
    %146 = vector.broadcast %cst_71 : f32 to vector<32x1xf32>
    %147 = arith.divf %145, %146 : vector<32x1xf32>
    %148 = vector.broadcast %147 : vector<32x1xf32> to vector<32x128xf32>
    %149 = arith.subf %139, %148 : vector<32x128xf32>
    %150 = arith.mulf %149, %149 : vector<32x128xf32>
    %cst_72 = arith.constant dense<0.000000e+00> : vector<32xf32>
    %151 = vector.multi_reduction <add>, %150, %cst_72 [1] : vector<32x128xf32> to vector<32xf32>
    %152 = vector.shape_cast %151 : vector<32xf32> to vector<32x1xf32>
    %cst_73 = arith.constant 1.280000e+02 : f32
    %153 = vector.broadcast %cst_73 : f32 to vector<32x1xf32>
    %154 = arith.divf %152, %153 : vector<32x1xf32>
    %cst_74 = arith.constant 9.99999974E-6 : f32
    %155 = vector.broadcast %cst_74 : f32 to vector<32x1xf32>
    %156 = arith.addf %154, %155 : vector<32x1xf32>
    %157 = math.rsqrt %156 : vector<32x1xf32>
    %158 = vector.broadcast %157 : vector<32x1xf32> to vector<32x128xf32>
    %159 = arith.mulf %149, %158 : vector<32x128xf32>
    %160 = vector.broadcast %141 : vector<1x128xf32> to vector<32x128xf32>
    %161 = arith.mulf %159, %160 : vector<32x128xf32>
    %162 = vector.broadcast %143 : vector<1x128xf32> to vector<32x128xf32>
    %163 = arith.addf %161, %162 : vector<32x128xf32>
    %164 = arith.truncf %163 : vector<32x128xf32> to vector<32x128xbf16>
    %c1 = arith.constant 1 : index
    %c0_75 = arith.constant 0 : index
    %c0_76 = arith.constant 0 : index
    %165 = vector.load %arg5[%c1, %c0_75, %c0_76] : memref<2x128x384xbf16, #tpu.memory_space<vmem>>, vector<1x128x384xbf16>
    %166 = vector.shape_cast %165 : vector<1x128x384xbf16> to vector<128x384xbf16>
    %cst_77 = arith.constant dense<0.000000e+00> : vector<32x384xf32>
    %167 = tpu.matmul %164, %166, %cst_77 {dimension_numbers = #tpu.dot_dimension_numbers<[1], [0], [0], [1], [0, 0, 1, 1], [], []>} : vector<32x128xbf16>, vector<128x384xbf16>, vector<32x384xf32> -> vector<32x384xf32>
    %c1_78 = arith.constant 1 : index
    %c0_79 = arith.constant 0 : index
    %c0_80 = arith.constant 0 : index
    %168 = vector.load %arg6[%c1_78, %c0_79, %c0_80] : memref<2x1x384xf32, #tpu.memory_space<vmem>>, vector<1x1x384xf32>
    %169 = vector.shape_cast %168 : vector<1x1x384xf32> to vector<1x384xf32>
    %170 = vector.broadcast %169 : vector<1x384xf32> to vector<32x384xf32>
    %171 = arith.addf %167, %170 : vector<32x384xf32>
    %172 = vector.extract_strided_slice %171 {offsets = [0, 0], sizes = [32, 64], strides = [1, 1]} : vector<32x384xf32> to vector<32x64xf32>
    %173 = vector.extract_strided_slice %171 {offsets = [0, 128], sizes = [32, 64], strides = [1, 1]} : vector<32x384xf32> to vector<32x64xf32>
    %174 = vector.extract_strided_slice %171 {offsets = [0, 256], sizes = [32, 64], strides = [1, 1]} : vector<32x384xf32> to vector<32x64xf32>
    %175 = arith.truncf %172 : vector<32x64xf32> to vector<32x64xbf16>
    %176 = arith.truncf %173 : vector<32x64xf32> to vector<32x64xbf16>
    %cst_81 = arith.constant dense<0.000000e+00> : vector<32x32xf32>
    %177 = tpu.matmul %175, %176, %cst_81 {dimension_numbers = #tpu.dot_dimension_numbers<[1], [1], [0], [0], [0, 0, 1, 0], [], []>} : vector<32x64xbf16>, vector<32x64xbf16>, vector<32x32xf32> -> vector<32x32xf32>
    %cst_82 = arith.constant 1.250000e-01 : f32
    %178 = vector.broadcast %cst_82 : f32 to vector<32x32xf32>
    %179 = arith.mulf %177, %178 : vector<32x32xf32>
    %180 = arith.addf %179, %23 : vector<32x32xf32>
    %cst_83 = arith.constant dense<0xFF800000> : vector<32xf32>
    %181 = vector.multi_reduction <maximumf>, %180, %cst_83 [1] : vector<32x32xf32> to vector<32xf32>
    %182 = vector.shape_cast %181 : vector<32xf32> to vector<32x1xf32>
    %183 = vector.broadcast %182 : vector<32x1xf32> to vector<32x32xf32>
    %184 = arith.subf %180, %183 : vector<32x32xf32>
    %185 = math.exp %184 : vector<32x32xf32>
    %cst_84 = arith.constant dense<0.000000e+00> : vector<32xf32>
    %186 = vector.multi_reduction <add>, %185, %cst_84 [1] : vector<32x32xf32> to vector<32xf32>
    %187 = vector.shape_cast %186 : vector<32xf32> to vector<32x1xf32>
    %188 = tpu.reciprocal %187 {approx = true} : vector<32x1xf32> -> vector<32x1xf32>
    %189 = vector.broadcast %188 : vector<32x1xf32> to vector<32x32xf32>
    %190 = arith.mulf %185, %189 : vector<32x32xf32>
    %191 = arith.truncf %190 : vector<32x32xf32> to vector<32x32xbf16>
    %192 = arith.truncf %174 : vector<32x64xf32> to vector<32x64xbf16>
    %cst_85 = arith.constant dense<0.000000e+00> : vector<32x64xf32>
    %193 = tpu.matmul %191, %192, %cst_85 {dimension_numbers = #tpu.dot_dimension_numbers<[1], [0], [0], [1], [0, 0, 1, 1], [], []>} : vector<32x32xbf16>, vector<32x64xbf16>, vector<32x64xf32> -> vector<32x64xf32>
    %194 = vector.extract_strided_slice %171 {offsets = [0, 64], sizes = [32, 64], strides = [1, 1]} : vector<32x384xf32> to vector<32x64xf32>
    %195 = vector.extract_strided_slice %171 {offsets = [0, 192], sizes = [32, 64], strides = [1, 1]} : vector<32x384xf32> to vector<32x64xf32>
    %196 = vector.extract_strided_slice %171 {offsets = [0, 320], sizes = [32, 64], strides = [1, 1]} : vector<32x384xf32> to vector<32x64xf32>
    %197 = arith.truncf %194 : vector<32x64xf32> to vector<32x64xbf16>
    %198 = arith.truncf %195 : vector<32x64xf32> to vector<32x64xbf16>
    %cst_86 = arith.constant dense<0.000000e+00> : vector<32x32xf32>
    %199 = tpu.matmul %197, %198, %cst_86 {dimension_numbers = #tpu.dot_dimension_numbers<[1], [1], [0], [0], [0, 0, 1, 0], [], []>} : vector<32x64xbf16>, vector<32x64xbf16>, vector<32x32xf32> -> vector<32x32xf32>
    %cst_87 = arith.constant 1.250000e-01 : f32
    %200 = vector.broadcast %cst_87 : f32 to vector<32x32xf32>
    %201 = arith.mulf %199, %200 : vector<32x32xf32>
    %202 = arith.addf %201, %23 : vector<32x32xf32>
    %cst_88 = arith.constant dense<0xFF800000> : vector<32xf32>
    %203 = vector.multi_reduction <maximumf>, %202, %cst_88 [1] : vector<32x32xf32> to vector<32xf32>
    %204 = vector.shape_cast %203 : vector<32xf32> to vector<32x1xf32>
    %205 = vector.broadcast %204 : vector<32x1xf32> to vector<32x32xf32>
    %206 = arith.subf %202, %205 : vector<32x32xf32>
    %207 = math.exp %206 : vector<32x32xf32>
    %cst_89 = arith.constant dense<0.000000e+00> : vector<32xf32>
    %208 = vector.multi_reduction <add>, %207, %cst_89 [1] : vector<32x32xf32> to vector<32xf32>
    %209 = vector.shape_cast %208 : vector<32xf32> to vector<32x1xf32>
    %210 = tpu.reciprocal %209 {approx = true} : vector<32x1xf32> -> vector<32x1xf32>
    %211 = vector.broadcast %210 : vector<32x1xf32> to vector<32x32xf32>
    %212 = arith.mulf %207, %211 : vector<32x32xf32>
    %213 = arith.truncf %212 : vector<32x32xf32> to vector<32x32xbf16>
    %214 = arith.truncf %196 : vector<32x64xf32> to vector<32x64xbf16>
    %cst_90 = arith.constant dense<0.000000e+00> : vector<32x64xf32>
    %215 = tpu.matmul %213, %214, %cst_90 {dimension_numbers = #tpu.dot_dimension_numbers<[1], [0], [0], [1], [0, 0, 1, 1], [], []>} : vector<32x32xbf16>, vector<32x64xbf16>, vector<32x64xf32> -> vector<32x64xf32>
    %216 = tpu.concatenate %193, %215 in 1 : vector<32x64xf32>, vector<32x64xf32> -> vector<32x128xf32>
    %217 = arith.truncf %216 : vector<32x128xf32> to vector<32x128xbf16>
    %c1_91 = arith.constant 1 : index
    %c0_92 = arith.constant 0 : index
    %c0_93 = arith.constant 0 : index
    %218 = vector.load %arg7[%c1_91, %c0_92, %c0_93] : memref<2x128x128xbf16, #tpu.memory_space<vmem>>, vector<1x128x128xbf16>
    %219 = vector.shape_cast %218 : vector<1x128x128xbf16> to vector<128x128xbf16>
    %cst_94 = arith.constant dense<0.000000e+00> : vector<32x128xf32>
    %220 = tpu.matmul %217, %219, %cst_94 {dimension_numbers = #tpu.dot_dimension_numbers<[1], [0], [0], [1], [0, 0, 1, 1], [], []>} : vector<32x128xbf16>, vector<128x128xbf16>, vector<32x128xf32> -> vector<32x128xf32>
    %c1_95 = arith.constant 1 : index
    %c0_96 = arith.constant 0 : index
    %c0_97 = arith.constant 0 : index
    %221 = vector.load %arg8[%c1_95, %c0_96, %c0_97] : memref<2x1x128xf32, #tpu.memory_space<vmem>>, vector<1x1x128xf32>
    %222 = vector.shape_cast %221 : vector<1x1x128xf32> to vector<1x128xf32>
    %223 = vector.broadcast %222 : vector<1x128xf32> to vector<32x128xf32>
    %224 = arith.addf %220, %223 : vector<32x128xf32>
    %225 = arith.addf %224, %163 : vector<32x128xf32>
    %c1_98 = arith.constant 1 : index
    %c0_99 = arith.constant 0 : index
    %c0_100 = arith.constant 0 : index
    %226 = vector.load %arg9[%c1_98, %c0_99, %c0_100] : memref<2x1x128xf32, #tpu.memory_space<vmem>>, vector<1x1x128xf32>
    %227 = vector.shape_cast %226 : vector<1x1x128xf32> to vector<1x128xf32>
    %c1_101 = arith.constant 1 : index
    %c0_102 = arith.constant 0 : index
    %c0_103 = arith.constant 0 : index
    %228 = vector.load %arg10[%c1_101, %c0_102, %c0_103] : memref<2x1x128xf32, #tpu.memory_space<vmem>>, vector<1x1x128xf32>
    %229 = vector.shape_cast %228 : vector<1x1x128xf32> to vector<1x128xf32>
    %cst_104 = arith.constant dense<0.000000e+00> : vector<32xf32>
    %230 = vector.multi_reduction <add>, %225, %cst_104 [1] : vector<32x128xf32> to vector<32xf32>
    %231 = vector.shape_cast %230 : vector<32xf32> to vector<32x1xf32>
    %cst_105 = arith.constant 1.280000e+02 : f32
    %232 = vector.broadcast %cst_105 : f32 to vector<32x1xf32>
    %233 = arith.divf %231, %232 : vector<32x1xf32>
    %234 = vector.broadcast %233 : vector<32x1xf32> to vector<32x128xf32>
    %235 = arith.subf %225, %234 : vector<32x128xf32>
    %236 = arith.mulf %235, %235 : vector<32x128xf32>
    %cst_106 = arith.constant dense<0.000000e+00> : vector<32xf32>
    %237 = vector.multi_reduction <add>, %236, %cst_106 [1] : vector<32x128xf32> to vector<32xf32>
    %238 = vector.shape_cast %237 : vector<32xf32> to vector<32x1xf32>
    %cst_107 = arith.constant 1.280000e+02 : f32
    %239 = vector.broadcast %cst_107 : f32 to vector<32x1xf32>
    %240 = arith.divf %238, %239 : vector<32x1xf32>
    %cst_108 = arith.constant 9.99999974E-6 : f32
    %241 = vector.broadcast %cst_108 : f32 to vector<32x1xf32>
    %242 = arith.addf %240, %241 : vector<32x1xf32>
    %243 = math.rsqrt %242 : vector<32x1xf32>
    %244 = vector.broadcast %243 : vector<32x1xf32> to vector<32x128xf32>
    %245 = arith.mulf %235, %244 : vector<32x128xf32>
    %246 = vector.broadcast %227 : vector<1x128xf32> to vector<32x128xf32>
    %247 = arith.mulf %245, %246 : vector<32x128xf32>
    %248 = vector.broadcast %229 : vector<1x128xf32> to vector<32x128xf32>
    %249 = arith.addf %247, %248 : vector<32x128xf32>
    %250 = arith.truncf %249 : vector<32x128xf32> to vector<32x128xbf16>
    %c1_109 = arith.constant 1 : index
    %c0_110 = arith.constant 0 : index
    %c0_111 = arith.constant 0 : index
    %251 = vector.load %arg11[%c1_109, %c0_110, %c0_111] : memref<2x128x512xbf16, #tpu.memory_space<vmem>>, vector<1x128x512xbf16>
    %252 = vector.shape_cast %251 : vector<1x128x512xbf16> to vector<128x512xbf16>
    %cst_112 = arith.constant dense<0.000000e+00> : vector<32x512xf32>
    %253 = tpu.matmul %250, %252, %cst_112 {dimension_numbers = #tpu.dot_dimension_numbers<[1], [0], [0], [1], [0, 0, 1, 1], [], []>} : vector<32x128xbf16>, vector<128x512xbf16>, vector<32x512xf32> -> vector<32x512xf32>
    %c1_113 = arith.constant 1 : index
    %c0_114 = arith.constant 0 : index
    %c0_115 = arith.constant 0 : index
    %254 = vector.load %arg12[%c1_113, %c0_114, %c0_115] : memref<2x1x512xf32, #tpu.memory_space<vmem>>, vector<1x1x512xf32>
    %255 = vector.shape_cast %254 : vector<1x1x512xf32> to vector<1x512xf32>
    %256 = vector.broadcast %255 : vector<1x512xf32> to vector<32x512xf32>
    %257 = arith.addf %253, %256 : vector<32x512xf32>
    %cst_116 = arith.constant 5.000000e-01 : f32
    %258 = vector.broadcast %cst_116 : f32 to vector<32x512xf32>
    %259 = arith.mulf %258, %257 : vector<32x512xf32>
    %cst_117 = arith.constant 4.471500e-02 : f32
    %260 = vector.broadcast %cst_117 : f32 to vector<32x512xf32>
    %261 = arith.mulf %260, %257 : vector<32x512xf32>
    %262 = arith.mulf %261, %257 : vector<32x512xf32>
    %263 = arith.mulf %262, %257 : vector<32x512xf32>
    %264 = arith.addf %257, %263 : vector<32x512xf32>
    %cst_118 = arith.constant 0.797884583 : f32
    %265 = vector.broadcast %cst_118 : f32 to vector<32x512xf32>
    %266 = arith.mulf %265, %264 : vector<32x512xf32>
    %267 = math.tanh %266 : vector<32x512xf32>
    %cst_119 = arith.constant 1.000000e+00 : f32
    %268 = vector.broadcast %cst_119 : f32 to vector<32x512xf32>
    %269 = arith.addf %268, %267 : vector<32x512xf32>
    %270 = arith.mulf %259, %269 : vector<32x512xf32>
    %271 = arith.truncf %270 : vector<32x512xf32> to vector<32x512xbf16>
    %c1_120 = arith.constant 1 : index
    %c0_121 = arith.constant 0 : index
    %c0_122 = arith.constant 0 : index
    %272 = vector.load %arg13[%c1_120, %c0_121, %c0_122] : memref<2x512x128xbf16, #tpu.memory_space<vmem>>, vector<1x512x128xbf16>
    %273 = vector.shape_cast %272 : vector<1x512x128xbf16> to vector<512x128xbf16>
    %cst_123 = arith.constant dense<0.000000e+00> : vector<32x128xf32>
    %274 = tpu.matmul %271, %273, %cst_123 {dimension_numbers = #tpu.dot_dimension_numbers<[1], [0], [0], [1], [0, 0, 1, 1], [], []>} : vector<32x512xbf16>, vector<512x128xbf16>, vector<32x128xf32> -> vector<32x128xf32>
    %c1_124 = arith.constant 1 : index
    %c0_125 = arith.constant 0 : index
    %c0_126 = arith.constant 0 : index
    %275 = vector.load %arg14[%c1_124, %c0_125, %c0_126] : memref<2x1x128xf32, #tpu.memory_space<vmem>>, vector<1x1x128xf32>
    %276 = vector.shape_cast %275 : vector<1x1x128xf32> to vector<1x128xf32>
    %277 = vector.broadcast %276 : vector<1x128xf32> to vector<32x128xf32>
    %278 = arith.addf %274, %277 : vector<32x128xf32>
    %279 = arith.addf %278, %249 : vector<32x128xf32>
    %c1_127 = arith.constant 1 : index
    %c0_128 = arith.constant 0 : index
    %c0_129 = arith.constant 0 : index
    %280 = vector.load %arg15[%c1_127, %c0_128, %c0_129] : memref<2x1x128xf32, #tpu.memory_space<vmem>>, vector<1x1x128xf32>
    %281 = vector.shape_cast %280 : vector<1x1x128xf32> to vector<1x128xf32>
    %c1_130 = arith.constant 1 : index
    %c0_131 = arith.constant 0 : index
    %c0_132 = arith.constant 0 : index
    %282 = vector.load %arg16[%c1_130, %c0_131, %c0_132] : memref<2x1x128xf32, #tpu.memory_space<vmem>>, vector<1x1x128xf32>
    %283 = vector.shape_cast %282 : vector<1x1x128xf32> to vector<1x128xf32>
    %cst_133 = arith.constant dense<0.000000e+00> : vector<32xf32>
    %284 = vector.multi_reduction <add>, %279, %cst_133 [1] : vector<32x128xf32> to vector<32xf32>
    %285 = vector.shape_cast %284 : vector<32xf32> to vector<32x1xf32>
    %cst_134 = arith.constant 1.280000e+02 : f32
    %286 = vector.broadcast %cst_134 : f32 to vector<32x1xf32>
    %287 = arith.divf %285, %286 : vector<32x1xf32>
    %288 = vector.broadcast %287 : vector<32x1xf32> to vector<32x128xf32>
    %289 = arith.subf %279, %288 : vector<32x128xf32>
    %290 = arith.mulf %289, %289 : vector<32x128xf32>
    %cst_135 = arith.constant dense<0.000000e+00> : vector<32xf32>
    %291 = vector.multi_reduction <add>, %290, %cst_135 [1] : vector<32x128xf32> to vector<32xf32>
    %292 = vector.shape_cast %291 : vector<32xf32> to vector<32x1xf32>
    %cst_136 = arith.constant 1.280000e+02 : f32
    %293 = vector.broadcast %cst_136 : f32 to vector<32x1xf32>
    %294 = arith.divf %292, %293 : vector<32x1xf32>
    %cst_137 = arith.constant 9.99999974E-6 : f32
    %295 = vector.broadcast %cst_137 : f32 to vector<32x1xf32>
    %296 = arith.addf %294, %295 : vector<32x1xf32>
    %297 = math.rsqrt %296 : vector<32x1xf32>
    %298 = vector.broadcast %297 : vector<32x1xf32> to vector<32x128xf32>
    %299 = arith.mulf %289, %298 : vector<32x128xf32>
    %300 = vector.broadcast %281 : vector<1x128xf32> to vector<32x128xf32>
    %301 = arith.mulf %299, %300 : vector<32x128xf32>
    %302 = vector.broadcast %283 : vector<1x128xf32> to vector<32x128xf32>
    %303 = arith.addf %301, %302 : vector<32x128xf32>
    %304 = vector.extract_strided_slice %303 {offsets = [0, 0], sizes = [1, 128], strides = [1, 1]} : vector<32x128xf32> to vector<1x128xf32>
    %305 = vector.extract_strided_slice %303 {offsets = [8, 0], sizes = [1, 128], strides = [1, 1]} : vector<32x128xf32> to vector<1x128xf32>
    %306 = vector.extract_strided_slice %303 {offsets = [16, 0], sizes = [1, 128], strides = [1, 1]} : vector<32x128xf32> to vector<1x128xf32>
    %307 = vector.extract_strided_slice %303 {offsets = [24, 0], sizes = [1, 128], strides = [1, 1]} : vector<32x128xf32> to vector<1x128xf32>
    %308 = tpu.concatenate %304, %305, %306, %307 in 0 : vector<1x128xf32>, vector<1x128xf32>, vector<1x128xf32>, vector<1x128xf32> -> vector<4x128xf32>
    %309 = arith.truncf %308 : vector<4x128xf32> to vector<4x128xbf16>
    %c0_138 = arith.constant 0 : index
    %c0_139 = arith.constant 0 : index
    %310 = vector.load %arg17[%c0_138, %c0_139] : memref<128x128xbf16, #tpu.memory_space<vmem>>, vector<128x128xbf16>
    %cst_140 = arith.constant dense<0.000000e+00> : vector<4x128xf32>
    %311 = tpu.matmul %309, %310, %cst_140 {dimension_numbers = #tpu.dot_dimension_numbers<[1], [0], [0], [1], [0, 0, 1, 1], [], []>} : vector<4x128xbf16>, vector<128x128xbf16>, vector<4x128xf32> -> vector<4x128xf32>
    %c0_141 = arith.constant 0 : index
    %c0_142 = arith.constant 0 : index
    %312 = vector.load %arg18[%c0_141, %c0_142] : memref<1x128xf32, #tpu.memory_space<vmem>>, vector<1x128xf32>
    %313 = vector.broadcast %312 : vector<1x128xf32> to vector<4x128xf32>
    %314 = arith.addf %311, %313 : vector<4x128xf32>
    %315 = math.tanh %314 : vector<4x128xf32>
    %316 = vector.extract_strided_slice %315 {offsets = [0, 0], sizes = [2, 128], strides = [1, 1]} : vector<4x128xf32> to vector<2x128xf32>
    %317 = vector.extract_strided_slice %315 {offsets = [2, 0], sizes = [2, 128], strides = [1, 1]} : vector<4x128xf32> to vector<2x128xf32>
    %318 = arith.mulf %316, %317 : vector<2x128xf32>
    %cst_143 = arith.constant dense<0.000000e+00> : vector<2xf32>
    %319 = vector.multi_reduction <add>, %318, %cst_143 [1] : vector<2x128xf32> to vector<2xf32>
    %320 = vector.shape_cast %319 : vector<2xf32> to vector<2x1xf32>
    %321 = arith.mulf %316, %316 : vector<2x128xf32>
    %cst_144 = arith.constant dense<0.000000e+00> : vector<2xf32>
    %322 = vector.multi_reduction <add>, %321, %cst_144 [1] : vector<2x128xf32> to vector<2xf32>
    %323 = vector.shape_cast %322 : vector<2xf32> to vector<2x1xf32>
    %324 = arith.mulf %317, %317 : vector<2x128xf32>
    %cst_145 = arith.constant dense<0.000000e+00> : vector<2xf32>
    %325 = vector.multi_reduction <add>, %324, %cst_145 [1] : vector<2x128xf32> to vector<2xf32>
    %326 = vector.shape_cast %325 : vector<2xf32> to vector<2x1xf32>
    %327 = arith.mulf %323, %326 : vector<2x1xf32>
    %cst_146 = arith.constant 9.99999996E-13 : f32
    %328 = vector.broadcast %cst_146 : f32 to vector<2x1xf32>
    %329 = arith.maximumf %327, %328 : vector<2x1xf32>
    %330 = math.rsqrt %329 : vector<2x1xf32>
    %331 = arith.mulf %320, %330 : vector<2x1xf32>
    %c0_147 = arith.constant 0 : index
    %c0_148 = arith.constant 0 : index
    %332 = vector.load %arg19[%c0_147, %c0_148] : memref<2x1xf32, #tpu.memory_space<vmem>>, vector<2x1xf32>
    tpu.vector_store %arg19[%c0_147, %c0_148], %331 {strides = array<i32>} : memref<2x1xf32, #tpu.memory_space<vmem>>, vector<2x1xf32>,
    %c0_149 = arith.constant 0 : index
    %333 = memref.load %arg2[%c0_149] : memref<2xf32, #tpu.memory_space<smem>>
    %334 = vector.broadcast %333 : f32 to vector<1x1xf32>
    %c1_150 = arith.constant 1 : index
    %335 = memref.load %arg2[%c1_150] : memref<2xf32, #tpu.memory_space<smem>>
    %336 = vector.broadcast %335 : f32 to vector<1x1xf32>
    %337 = tpu.concatenate %334, %336 in 0 : vector<1x1xf32>, vector<1x1xf32> -> vector<2x1xf32>
    %cst_151 = arith.constant 0.000000e+00 : f32
    %338 = vector.broadcast %cst_151 : f32 to vector<2x1xf32>
    %339 = arith.cmpf ogt, %337, %338 : vector<2x1xf32>
    %cst_152 = arith.constant 1.000000e+00 : f32
    %340 = vector.broadcast %cst_152 : f32 to vector<2x1xf32>
    %341 = arith.subf %340, %331 : vector<2x1xf32>
    %cst_153 = arith.constant 0.000000e+00 : f32
    %342 = vector.broadcast %cst_153 : f32 to vector<2x1xf32>
    %343 = arith.maximumf %331, %342 : vector<2x1xf32>
    %344 = arith.select %339, %341, %343 : vector<2x1xi1>, vector<2x1xf32>
    %cst_154 = arith.constant dense<0.000000e+00> : vector<1xf32>
    %345 = vector.multi_reduction <add>, %344, %cst_154 [0] : vector<2x1xf32> to vector<1xf32>
    %346 = vector.shape_cast %345 : vector<1xf32> to vector<1x1xf32>
    %cst_155 = arith.constant 5.000000e-01 : f32
    %347 = vector.broadcast %cst_155 : f32 to vector<1x1xf32>
    %348 = arith.mulf %346, %347 : vector<1x1xf32>
    %c0_156 = arith.constant 0 : index
    %c0_157 = arith.constant 0 : index
    %349 = vector.load %arg20[%c0_156, %c0_157] : memref<1x1xf32, #tpu.memory_space<vmem>>, vector<1x1xf32>
    tpu.vector_store %arg20[%c0_156, %c0_157], %348 {strides = array<i32>} : memref<1x1xf32, #tpu.memory_space<vmem>>, vector<1x1xf32>,
    return
  }
}

</mosaic_0001>

<llo_original>
// kernel: roberta_forward.1
$region0: #{roberta_forward.1}
  #allocation0 [shape = 'u32[]', space=smem, size = 0x4, offset = 0x4, fixed_abs, tag = 'smem constant byte address 0x4 - core index']
  #allocation1 [shape = 'u32[144,128]{1,0:T(1,128)}', space=vmem, size = 0x12000, scoped, tag = 'internal scratch']
  %s0 = inlined_call_operand.vmem [shape: f32[32,128], index: 0, kind: input, shape index: {}]
  %s1 = inlined_call_operand.vmem [shape: f32[32,32], index: 1, kind: input, shape index: {}]
  %s2 = inlined_call_operand.vmem [shape: f32[2], index: 2, kind: input, shape index: {}]
  %s3 = inlined_call_operand.vmem [shape: f32[1,128], index: 3, kind: input, shape index: {}]
  %s4 = inlined_call_operand.vmem [shape: f32[1,128], index: 4, kind: input, shape index: {}]
  %s5 = inlined_call_operand.hbm [shape: bf16[2,128,384], index: 5, kind: input, shape index: {}]
  %s6 = inlined_call_operand.vmem [shape: f32[2,1,384], index: 6, kind: input, shape index: {}]
  %s7 = inlined_call_operand.vmem [shape: bf16[2,128,128], index: 7, kind: input, shape index: {}]
  %s8 = inlined_call_operand.vmem [shape: f32[2,1,128], index: 8, kind: input, shape index: {}]
  %s9 = inlined_call_operand.vmem [shape: f32[2,1,128], index: 9, kind: input, shape index: {}]
  %s10 = inlined_call_operand.vmem [shape: f32[2,1,128], index: 10, kind: input, shape index: {}]
  %s11 = inlined_call_operand.vmem [shape: bf16[2,128,512], index: 11, kind: input, shape index: {}]
  %s12 = inlined_call_operand.vmem [shape: f32[2,1,512], index: 12, kind: input, shape index: {}]
  %s13 = inlined_call_operand.hbm [shape: bf16[2,512,128], index: 13, kind: input, shape index: {}]
  %s14 = inlined_call_operand.vmem [shape: f32[2,1,128], index: 14, kind: input, shape index: {}]
  %s15 = inlined_call_operand.vmem [shape: f32[2,1,128], index: 15, kind: input, shape index: {}]
  %s16 = inlined_call_operand.vmem [shape: f32[2,1,128], index: 16, kind: input, shape index: {}]
  %s17 = inlined_call_operand.vmem [shape: bf16[128,128], index: 17, kind: input, shape index: {}]
  %s18 = inlined_call_operand.vmem [shape: f32[1,128], index: 18, kind: input, shape index: {}]
  %s19 = inlined_call_operand.vmem [shape: f32[2,1], index: 19, kind: output, shape index: {0}]
  %s20 = inlined_call_operand.hbm [shape: f32[1,1], index: 20, kind: output, shape index: {1}]
  %21 = xla_tuple %s19, %s20
  %s22 = sld [smem:[#allocation0]]
  $region106: #{roberta_forward.1} parent=0
    _
  %s24 = ssub.s32 1, %s22
  %s25 = scalar_select 0, %s24, %s22
  $region1: #{roberta_forward.1} parent=0
    #allocation2 [shape = 'u8[512]{0}', space=smem, size = 0x200, scoped, tag = 'input window, operand 2, single buffered']
    #allocation3 [shape = 's32[1]{0}', space=sflag, size = 0x4, scoped, tag = 'scoped memory for roberta_forward.1']
    #allocation4 [shape = 's32[1]{0}', space=sflag, size = 0x4, scoped, tag = 'scoped memory for roberta_forward.1']
    #allocation5 [shape = 's32[1]{0}', space=sflag, size = 0x4, scoped, tag = 'scoped memory for roberta_forward.1']
    #allocation6 [shape = 'u8[196608]{0}', space=vmem, size = 0x30000, scoped, tag = 'input window, operand 5, single buffered']
    #allocation7 [shape = 'u8[262144]{0}', space=vmem, size = 0x40000, scoped, tag = 'input window, operand 13, single buffered']
    #allocation8 [shape = 's32[1]{0}', space=sflag, size = 0x4, scoped, tag = 'scoped memory for roberta_forward.1']
    #allocation9 [shape = 'u8[512]{0}', space=vmem, size = 0x400, scoped, tag = 'output window, operand 1, single buffered']
    %26 = vsyncpa [#allocation5], 0
    %27 = vsyncpa [#allocation3], 0
    %28 = vsyncpa [#allocation8], 0
    %29 = vsyncpa [#allocation4], 0
    // Predicated region
    $region2: #{roberta_forward.1} parent=1 // pred_check
      _
    $region3: #{roberta_forward.1} parent=1 // pred_check_branch
      %31 = sbr.rel (0) target = $region5
    $region4: #{roberta_forward.1} parent=1 // pred_region
      _
    $region5: #{roberta_forward.1} parent=1 // pred_fallthru
      _
    // Predicated region
    $region6: #{roberta_forward.1} parent=1 // pred_check
      _
    $region7: #{roberta_forward.1} parent=1 // pred_check_branch
      %33 = sbr.rel (0) target = $region9
    $region8: #{roberta_forward.1} parent=1 // pred_region
      _
    $region9: #{roberta_forward.1} parent=1 // pred_fallthru
      _
    // Predicated region
    $region10: #{roberta_forward.1} parent=1 // pred_check
      _
    $region11: #{roberta_forward.1} parent=1 // pred_check_branch
      %35 = sbr.rel (0) target = $region13
    $region12: #{roberta_forward.1} parent=1 // pred_region
      %s37 = ssub.s32 16, 16
      %38 = vsyncadd [#allocation5], %s37
      %s40 = sshll.u32 %s2, 4
      %s41 = int_to_ptr.vmem [resolvable:$true] %s40
      %43 = dma.vmem_to_smem %s41, 16, [#allocation2], [#allocation5]
    $region13: #{roberta_forward.1} parent=1 // pred_fallthru
      _
    // Predicated region
    $region14: #{roberta_forward.1} parent=1 // pred_check
      _
    $region15: #{roberta_forward.1} parent=1 // pred_check_branch
      %45 = sbr.rel (0) target = $region17
    $region16: #{roberta_forward.1} parent=1 // pred_region
      _
    $region17: #{roberta_forward.1} parent=1 // pred_fallthru
      _
    // Predicated region
    $region18: #{roberta_forward.1} parent=1 // pred_check
      _
    $region19: #{roberta_forward.1} parent=1 // pred_check_branch
      %47 = sbr.rel (0) target = $region21
    $region20: #{roberta_forward.1} parent=1 // pred_region
      _
    $region21: #{roberta_forward.1} parent=1 // pred_fallthru
      _
    // Predicated region
    $region22: #{roberta_forward.1} parent=1 // pred_check
      _
    $region23: #{roberta_forward.1} parent=1 // pred_check_branch
      %49 = sbr.rel (0) target = $region25
    $region24: #{roberta_forward.1} parent=1 // pred_region
      %s51 = ssub.s32 6144, 6144
      %52 = vsyncadd [#allocation3], %s51
      %s53 = sshll.u32 [#allocation6], 4
      %s54 = int_to_ptr.vmem [resolvable:$true] %s53
      %59 = dma.hbm_to_vmem [thread:$0]  %s5, 6144, %s54, [#allocation3], 192, 192, 12
    $region25: #{roberta_forward.1} parent=1 // pred_fallthru
      _
    // Predicated region
    $region26: #{roberta_forward.1} parent=1 // pred_check
      _
    $region27: #{roberta_forward.1} parent=1 // pred_check_branch
      %61 = sbr.rel (0) target = $region29
    $region28: #{roberta_forward.1} parent=1 // pred_region
      _
    $region29: #{roberta_forward.1} parent=1 // pred_fallthru
      _
    // Predicated region
    $region30: #{roberta_forward.1} parent=1 // pred_check
      _
    $region31: #{roberta_forward.1} parent=1 // pred_check_branch
      %63 = sbr.rel (0) target = $region33
    $region32: #{roberta_forward.1} parent=1 // pred_region
      _
    $region33: #{roberta_forward.1} parent=1 // pred_fallthru
      _
    // Predicated region
    $region34: #{roberta_forward.1} parent=1 // pred_check
      _
    $region35: #{roberta_forward.1} parent=1 // pred_check_branch
      %65 = sbr.rel (0) target = $region37
    $region36: #{roberta_forward.1} parent=1 // pred_region
      _
    $region37: #{roberta_forward.1} parent=1 // pred_fallthru
      _
    // Predicated region
    $region38: #{roberta_forward.1} parent=1 // pred_check
      _
    $region39: #{roberta_forward.1} parent=1 // pred_check_branch
      %67 = sbr.rel (0) target = $region41
    $region40: #{roberta_forward.1} parent=1 // pred_region
      _
    $region41: #{roberta_forward.1} parent=1 // pred_fallthru
      _
    // Predicated region
    $region42: #{roberta_forward.1} parent=1 // pred_check
      _
    $region43: #{roberta_forward.1} parent=1 // pred_check_branch
      %69 = sbr.rel (0) target = $region45
    $region44: #{roberta_forward.1} parent=1 // pred_region
      _
    $region45: #{roberta_forward.1} parent=1 // pred_fallthru
      _
    // Predicated region
    $region46: #{roberta_forward.1} parent=1 // pred_check
      _
    $region47: #{roberta_forward.1} parent=1 // pred_check_branch
      %71 = sbr.rel (0) target = $region49
    $region48: #{roberta_forward.1} parent=1 // pred_region
      _
    $region49: #{roberta_forward.1} parent=1 // pred_fallthru
      _
    // Predicated region
    $region50: #{roberta_forward.1} parent=1 // pred_check
      _
    $region51: #{roberta_forward.1} parent=1 // pred_check_branch
      %73 = sbr.rel (0) target = $region53
    $region52: #{roberta_forward.1} parent=1 // pred_region
      _
    $region53: #{roberta_forward.1} parent=1 // pred_fallthru
      _
    // Predicated region
    $region54: #{roberta_forward.1} parent=1 // pred_check
      _
    $region55: #{roberta_forward.1} parent=1 // pred_check_branch
      %75 = sbr.rel (0) target = $region57
    $region56: #{roberta_forward.1} parent=1 // pred_region
      %s77 = ssub.s32 8192, 8192
      %78 = vsyncadd [#allocation8], %s77
      %s79 = sshll.u32 [#allocation7], 4
      %s80 = int_to_ptr.vmem [resolvable:$true] %s79
      %85 = dma.hbm_to_vmem [thread:$0]  %s13, 8192, %s80, [#allocation8], 64, 64, 4
    $region57: #{roberta_forward.1} parent=1 // pred_fallthru
      _
    // Predicated region
    $region58: #{roberta_forward.1} parent=1 // pred_check
      _
    $region59: #{roberta_forward.1} parent=1 // pred_check_branch
      %87 = sbr.rel (0) target = $region61
    $region60: #{roberta_forward.1} parent=1 // pred_region
      _
    $region61: #{roberta_forward.1} parent=1 // pred_fallthru
      _
    // Predicated region
    $region62: #{roberta_forward.1} parent=1 // pred_check
      _
    $region63: #{roberta_forward.1} parent=1 // pred_check_branch
      %89 = sbr.rel (0) target = $region65
    $region64: #{roberta_forward.1} parent=1 // pred_region
      _
    $region65: #{roberta_forward.1} parent=1 // pred_fallthru
      _
    // Predicated region
    $region66: #{roberta_forward.1} parent=1 // pred_check
      _
    $region67: #{roberta_forward.1} parent=1 // pred_check_branch
      %91 = sbr.rel (0) target = $region69
    $region68: #{roberta_forward.1} parent=1 // pred_region
      _
    $region69: #{roberta_forward.1} parent=1 // pred_fallthru
      _
    // Predicated region
    $region70: #{roberta_forward.1} parent=1 // pred_check
      _
    $region71: #{roberta_forward.1} parent=1 // pred_check_branch
      %93 = sbr.rel (0) target = $region73
    $region72: #{roberta_forward.1} parent=1 // pred_region
      _
    $region73: #{roberta_forward.1} parent=1 // pred_fallthru
      _
    // Predicated region
    $region74: #{roberta_forward.1} parent=1 // pred_check
      _
    $region75: #{roberta_forward.1} parent=1 // pred_check_branch
      %95 = sbr.rel (0) target = $region77
    $region76: #{roberta_forward.1} parent=1 // pred_region
      _
    $region77: #{roberta_forward.1} parent=1 // pred_fallthru
      _
    // Predicated region
    $region78: #{roberta_forward.1} parent=1 // pred_check
      _
    $region79: #{roberta_forward.1} parent=1 // pred_check_branch
      %97 = sbr.rel (0) target = $region81
    $region80: #{roberta_forward.1} parent=1 // pred_region
      %98 = dma.done [#allocation5], 16
    $region81: #{roberta_forward.1} parent=1 // pred_fallthru
      _
    // Predicated region
    $region82: #{roberta_forward.1} parent=1 // pred_check
      _
    $region83: #{roberta_forward.1} parent=1 // pred_check_branch
      %100 = sbr.rel (0) target = $region85
    $region84: #{roberta_forward.1} parent=1 // pred_region
      %101 = dma.done [#allocation3], 6144
    $region85: #{roberta_forward.1} parent=1 // pred_fallthru
      _
    // Predicated region
    $region86: #{roberta_forward.1} parent=1 // pred_check
      _
    $region87: #{roberta_forward.1} parent=1 // pred_check_branch
      %103 = sbr.rel (0) target = $region89
    $region88: #{roberta_forward.1} parent=1 // pred_region
      %104 = dma.done [#allocation8], 8192
    $region89: #{roberta_forward.1} parent=1 // pred_fallthru
      _
    %105 = sfence
    %v107 = vld [vmem:[%s0] sm:$0xff]
    %v108 = vld [vmem:[%s0 + $0x8] sm:$0xff]
    %v109 = vld [vmem:[%s0 + $0x10] sm:$0xff]
    %v110 = vld [vmem:[%s0 + $0x18] sm:$0xff]
    %v111 = vld [vmem:[%s3] sm:$0x1]
    %v112 = vld [vmem:[%s4] sm:$0x1]
    %113 = vadd.xlane.f32.xlu0 %v107
    %v114 = vpop.xlane.xlu0 %113
    %115 = vadd.xlane.f32.xlu0 %v108
    %v116 = vpop.xlane.xlu0 %115
    %117 = vadd.xlane.f32.xlu0 %v109
    %v118 = vpop.xlane.xlu0 %117
    %119 = vadd.xlane.f32.xlu0 %v110
    %v120 = vpop.xlane.xlu0 %119
    %v121 = vrcp.pop 128.0
    %v122 = vmul.f32 %v114, %v121
    %v123 = vmul.f32 %v116, %v121
    %v124 = vmul.f32 %v118, %v121
    %v125 = vmul.f32 %v120, %v121
    %v126 = vsub.f32 %v107, %v122
    %v127 = vsub.f32 %v108, %v123
    %v128 = vsub.f32 %v109, %v124
    %v129 = vsub.f32 %v110, %v125
    %v130 = vmul.f32 %v126, %v126
    %v131 = vmul.f32 %v127, %v127
    %v132 = vmul.f32 %v128, %v128
    %v133 = vmul.f32 %v129, %v129
    %134 = vadd.xlane.f32.xlu0 %v130
    %v135 = vpop.xlane.xlu0 %134
    %136 = vadd.xlane.f32.xlu0 %v131
    %v137 = vpop.xlane.xlu0 %136
    %138 = vadd.xlane.f32.xlu0 %v132
    %v139 = vpop.xlane.xlu0 %138
    %140 = vadd.xlane.f32.xlu0 %v133
    %v141 = vpop.xlane.xlu0 %140
    %v142 = vmul.f32 %v135, %v121
    %v143 = vmul.f32 %v137, %v121
    %v144 = vmul.f32 %v139, %v121
    %v145 = vmul.f32 %v141, %v121
    %v146 = vadd.f32 %v142, 1e-05
    %v147 = vadd.f32 %v143, 1e-05
    %v148 = vadd.f32 %v144, 1e-05
    %v149 = vadd.f32 %v145, 1e-05
    %v150 = vrsqrt.pop %v146
    %v151 = vrsqrt.pop %v147
    %v152 = vrsqrt.pop %v148
    %v153 = vrsqrt.pop %v149
    %v154 = vmul.f32 %v126, %v150
    %v155 = vmul.f32 %v127, %v151
    %v156 = vmul.f32 %v128, %v152
    %v157 = vmul.f32 %v129, %v153
    %v159 = vlaneseq
    %v160 = vshrl.u32 %v159, 7
    %v161 = vsub.s32 0, %v160
    %v162 = vrot.slane %v111, %v161
    %v164 = vmul.f32 %v154, %v162
    %v165 = vmul.f32 %v155, %v162
    %v166 = vmul.f32 %v156, %v162
    %v167 = vmul.f32 %v157, %v162
    %v169 = vlaneseq
    %v170 = vshrl.u32 %v169, 7
    %v171 = vsub.s32 0, %v170
    %v172 = vrot.slane %v112, %v171
    %v174 = vadd.f32 %v164, %v172
    %v175 = vadd.f32 %v165, %v172
    %v176 = vadd.f32 %v166, %v172
    %v177 = vadd.f32 %v167, %v172
    %v178 = vld [vmem:[%s1] sm:$0xff]
    %v179 = vld [vmem:[%s1 + $0x8] sm:$0xff]
    %v180 = vld [vmem:[%s1 + $0x10] sm:$0xff]
    %v181 = vld [vmem:[%s1 + $0x18] sm:$0xff]
    %v182 = vpack.c.bf16 %v175, %v174
    %v183 = vpack.c.bf16 %v177, %v176
    %v184 = vld [vmem:[#allocation6] sm:$0xff]
    %v185 = vld [vmem:[#allocation6 + $0x8] sm:$0xf]
    %v186 = vld [vmem:[#allocation6 + $0xc] sm:$0xff]
    %v187 = vld [vmem:[#allocation6 + $0x14] sm:$0xf]
    %v188 = vld [vmem:[#allocation6 + $0x18] sm:$0xff]
    %v189 = vld [vmem:[#allocation6 + $0x20] sm:$0xf]
    %v190 = vld [vmem:[#allocation6 + $0x24] sm:$0xff]
    %v191 = vld [vmem:[#allocation6 + $0x2c] sm:$0xf]
    %v192 = vld [vmem:[#allocation6 + $0x30] sm:$0xff]
    %v193 = vld [vmem:[#allocation6 + $0x38] sm:$0xf]
    %v194 = vld [vmem:[#allocation6 + $0x3c] sm:$0xff]
    %v195 = vld [vmem:[#allocation6 + $0x44] sm:$0xf]
    %v196 = vld [vmem:[#allocation6 + $0x48] sm:$0xff]
    %v197 = vld [vmem:[#allocation6 + $0x50] sm:$0xf]
    %v198 = vld [vmem:[#allocation6 + $0x54] sm:$0xff]
    %v199 = vld [vmem:[#allocation6 + $0x5c] sm:$0xf]
    %v200 = vld [vmem:[#allocation6 + $0x60] sm:$0xff]
    %v201 = vld [vmem:[#allocation6 + $0x68] sm:$0xf]
    %v202 = vld [vmem:[#allocation6 + $0x6c] sm:$0xff]
    %v203 = vld [vmem:[#allocation6 + $0x74] sm:$0xf]
    %v204 = vld [vmem:[#allocation6 + $0x78] sm:$0xff]
    %v205 = vld [vmem:[#allocation6 + $0x80] sm:$0xf]
    %v206 = vld [vmem:[#allocation6 + $0x84] sm:$0xff]
    %v207 = vld [vmem:[#allocation6 + $0x8c] sm:$0xf]
    %v208 = vld [vmem:[#allocation6 + $0x90] sm:$0xff]
    %v209 = vld [vmem:[#allocation6 + $0x98] sm:$0xf]
    %v210 = vld [vmem:[#allocation6 + $0x9c] sm:$0xff]
    %v211 = vld [vmem:[#allocation6 + $0xa4] sm:$0xf]
    %v212 = vld [vmem:[#allocation6 + $0xa8] sm:$0xff]
    %v213 = vld [vmem:[#allocation6 + $0xb0] sm:$0xf]
    %v214 = vld [vmem:[#allocation6 + $0xb4] sm:$0xff]
    %v215 = vld [vmem:[#allocation6 + $0xbc] sm:$0xf]
    %v216 = vld [vmem:[%s6] sm:$0x7]
    %v218 = vlaneseq
    %v219 = vshrl.u32 %v218, 7
    %v220 = vsub.s32 0, %v219
    %v221 = vrot.slane %v216, %v220
    %v222 = vlaneseq
    %v223 = vshrl.u32 %v222, 7
    %v224 = vsub.s32 1, %v223
    %v225 = vrot.slane %v216, %v224
    %v226 = vlaneseq
    %v227 = vshrl.u32 %v226, 7
    %v228 = vsub.s32 2, %v227
    %v229 = vrot.slane %v216, %v228
    %v265 = vunpack.c.l.b16 %v184
    %v266 = vunpack.c.h.b16 %v184
    %v267 = vunpack.c.l.b16 %v185
    %v268 = vunpack.c.l.b16 %v186
    %v269 = vunpack.c.h.b16 %v186
    %v270 = vunpack.c.l.b16 %v187
    %v271 = vunpack.c.l.b16 %v188
    %v272 = vunpack.c.h.b16 %v188
    %v273 = vunpack.c.l.b16 %v189
    %v274 = vunpack.c.l.b16 %v190
    %v275 = vunpack.c.h.b16 %v190
    %v276 = vunpack.c.l.b16 %v191
    %v277 = vunpack.c.l.b16 %v192
    %v278 = vunpack.c.h.b16 %v192
    %v279 = vunpack.c.l.b16 %v193
    %v280 = vunpack.c.l.b16 %v194
    %v281 = vunpack.c.h.b16 %v194
    %v282 = vunpack.c.l.b16 %v195
    %v283 = vunpack.c.l.b16 %v196
    %v284 = vunpack.c.h.b16 %v196
    %v285 = vunpack.c.l.b16 %v197
    %v286 = vunpack.c.l.b16 %v198
    %v287 = vunpack.c.h.b16 %v198
    %v288 = vunpack.c.l.b16 %v199
    %v289 = vunpack.c.l.b16 %v200
    %v290 = vunpack.c.h.b16 %v200
    %v291 = vunpack.c.l.b16 %v201
    %v292 = vunpack.c.l.b16 %v202
    %v293 = vunpack.c.h.b16 %v202
    %v294 = vunpack.c.l.b16 %v203
    %v295 = vunpack.c.l.b16 %v204
    %v296 = vunpack.c.h.b16 %v204
    %v297 = vunpack.c.l.b16 %v205
    %v298 = vunpack.c.l.b16 %v206
    %v299 = vunpack.c.h.b16 %v206
    %v300 = vunpack.c.l.b16 %v207
    %v301 = vunpack.c.l.b16 %v208
    %v302 = vunpack.c.h.b16 %v208
    %v303 = vunpack.c.l.b16 %v209
    %v304 = vunpack.c.l.b16 %v210
    %v305 = vunpack.c.h.b16 %v210
    %v306 = vunpack.c.l.b16 %v211
    %v307 = vunpack.c.l.b16 %v212
    %v308 = vunpack.c.h.b16 %v212
    %v309 = vunpack.c.l.b16 %v213
    %v310 = vunpack.c.l.b16 %v214
    %v311 = vunpack.c.h.b16 %v214
    %v312 = vunpack.c.l.b16 %v215
    %v313 = vpack.c.b16 %v268, %v265
    %v314 = vpack.c.b16 %v269, %v266
    %v315 = vpack.c.b16 %v270, %v267
    %v316 = vpack.c.b16 %v274, %v271
    %v317 = vpack.c.b16 %v275, %v272
    %v318 = vpack.c.b16 %v276, %v273
    %v319 = vpack.c.b16 %v280, %v277
    %v320 = vpack.c.b16 %v281, %v278
    %v321 = vpack.c.b16 %v282, %v279
    %v322 = vpack.c.b16 %v286, %v283
    %v323 = vpack.c.b16 %v287, %v284
    %v324 = vpack.c.b16 %v288, %v285
    %v325 = vpack.c.b16 %v292, %v289
    %v326 = vpack.c.b16 %v293, %v290
    %v327 = vpack.c.b16 %v294, %v291
    %v328 = vpack.c.b16 %v298, %v295
    %v329 = vpack.c.b16 %v299, %v296
    %v330 = vpack.c.b16 %v300, %v297
    %v331 = vpack.c.b16 %v304, %v301
    %v332 = vpack.c.b16 %v305, %v302
    %v333 = vpack.c.b16 %v306, %v303
    %v334 = vpack.c.b16 %v310, %v307
    %v335 = vpack.c.b16 %v311, %v308
    %v336 = vpack.c.b16 %v312, %v309
    %361 = vmatprep.subr.bf16.mxu0 %v314
    %362 = vmatpush1.bf16.msra.mxu0 %v313
    %363 = vmatprep.subr.bf16.mxu0 %v317
    %364 = vmatpush1.bf16.msra.mxu0 %v316
    %365 = vmatprep.subr.bf16.mxu0 %v320
    %366 = vmatpush1.bf16.msra.mxu0 %v319
    %367 = vmatprep.subr.bf16.mxu0 %v323
    %368 = vmatpush1.bf16.msra.mxu0 %v322
    %369 = vmatprep.subr.bf16.mxu0 %v326
    %370 = vmatpush1.bf16.msra.mxu0 %v325
    %371 = vmatprep.subr.bf16.mxu0 %v329
    %372 = vmatpush1.bf16.msra.mxu0 %v328
    %373 = vmatprep.subr.bf16.mxu0 %v332
    %374 = vmatpush1.bf16.msra.mxu0 %v331
    %375 = vmatprep.subr.bf16.mxu0 %v335
    %376 = vmatpush1.bf16.msra.mxu0 %v334
    %377 = vmatprep.subr.bf16.mxu0 0
    %378 = vmatpush1.bf16.msra.mxu0 0
    %379 = vmatprep.subr.bf16.mxu0 0
    %380 = vmatpush1.bf16.msra.mxu0 0
    %381 = vmatprep.subr.bf16.mxu0 0
    %382 = vmatpush1.bf16.msra.mxu0 0
    %383 = vmatprep.subr.bf16.mxu0 0
    %384 = vmatpush1.bf16.msra.mxu0 0
    %385 = vmatprep.subr.bf16.mxu0 0
    %386 = vmatpush1.bf16.msra.mxu0 0
    %387 = vmatprep.subr.bf16.mxu0 0
    %388 = vmatpush1.bf16.msra.mxu0 0
    %389 = vmatprep.subr.bf16.mxu0 0
    %390 = vmatpush1.bf16.msra.mxu0 0
    %391 = vmatprep.subr.bf16.mxu0 0
    %392 = vmatpush1.bf16.msra.mxu0 0
    %393 = vmatprep.mubr.bf16.mxu0 0
    %394 = vmatmul.mubr.bf16.gmra.mrb[0].mxu0 %v182
    %v395 = vpop.f32.mrb[0].mxu0
    %v396 = vadd.f32 %v221, %v395
    %v397 = vpop.f32.mrb[0].mxu0
    %v398 = vadd.f32 %v225, %v397
    %v399 = vpop.f32.mrb[0].mxu0
    %v400 = vadd.f32 %v221, %v399
    %v401 = vpop.f32.mrb[0].mxu0
    %v402 = vadd.f32 %v225, %v401
    %403 = vmatprep.mubr.bf16.mxu0 0
    %404 = vmatmul.mubr.bf16.gmra.mrb[0].mxu0 %v183
    %v405 = vpop.f32.mrb[0].mxu0
    %v406 = vadd.f32 %v221, %v405
    %v407 = vpop.f32.mrb[0].mxu0
    %v408 = vadd.f32 %v225, %v407
    %v409 = vpop.f32.mrb[0].mxu0
    %v410 = vadd.f32 %v221, %v409
    %v411 = vpop.f32.mrb[0].mxu0
    %v412 = vadd.f32 %v225, %v411
    %413 = vdwg.mxu0
    %414 = vmatprep.subr.bf16.mxu0 0
    %415 = vmatpush1.bf16.msra.mxu0 %v315
    %416 = vmatprep.subr.bf16.mxu0 0
    %417 = vmatpush1.bf16.msra.mxu0 %v318
    %418 = vmatprep.subr.bf16.mxu0 0
    %419 = vmatpush1.bf16.msra.mxu0 %v321
    %420 = vmatprep.subr.bf16.mxu0 0
    %421 = vmatpush1.bf16.msra.mxu0 %v324
    %422 = vmatprep.subr.bf16.mxu0 0
    %423 = vmatpush1.bf16.msra.mxu0 %v327
    %424 = vmatprep.subr.bf16.mxu0 0
    %425 = vmatpush1.bf16.msra.mxu0 %v330
    %426 = vmatprep.subr.bf16.mxu0 0
    %427 = vmatpush1.bf16.msra.mxu0 %v333
    %428 = vmatprep.subr.bf16.mxu0 0
    %429 = vmatpush1.bf16.msra.mxu0 %v336
    %430 = vmatprep.subr.bf16.mxu0 0
    %431 = vmatpush1.bf16.msra.mxu0 0
    %432 = vmatprep.subr.bf16.mxu0 0
    %433 = vmatpush1.bf16.msra.mxu0 0
    %434 = vmatprep.subr.bf16.mxu0 0
    %435 = vmatpush1.bf16.msra.mxu0 0
    %436 = vmatprep.subr.bf16.mxu0 0
    %437 = vmatpush1.bf16.msra.mxu0 0
    %438 = vmatprep.subr.bf16.mxu0 0
    %439 = vmatpush1.bf16.msra.mxu0 0
    %440 = vmatprep.subr.bf16.mxu0 0
    %441 = vmatpush1.bf16.msra.mxu0 0
    %442 = vmatprep.subr.bf16.mxu0 0
    %443 = vmatpush1.bf16.msra.mxu0 0
    %444 = vmatprep.subr.bf16.mxu0 0
    %445 = vmatpush1.bf16.msra.mxu0 0
    %446 = vmatprep.mubr.bf16.mxu0 0
    %447 = vmatmul.mubr.bf16.gmra.mrb[0].mxu0 %v182
    %v448 = vpop.f32.mrb[0].mxu0
    %v449 = vadd.f32 %v229, %v448
    %v450 = vpop.f32.mrb[0].mxu0
    %v451 = vpop.f32.mrb[0].mxu0
    %v452 = vadd.f32 %v229, %v451
    %v453 = vpop.f32.mrb[0].mxu0
    %454 = vmatprep.mubr.bf16.mxu0 0
    %455 = vmatmul.mubr.bf16.gmra.mrb[0].mxu0 %v183
    %v456 = vpop.f32.mrb[0].mxu0
    %v457 = vadd.f32 %v229, %v456
    %v458 = vpop.f32.mrb[0].mxu0
    %v459 = vpop.f32.mrb[0].mxu0
    %v460 = vadd.f32 %v229, %v459
    %v461 = vpop.f32.mrb[0].mxu0
    %462 = vdwg.mxu0
    %v463 = vpack.c.bf16 %v400, %v396
    %v464 = vpack.c.bf16 %v410, %v406
    %v465 = vpack.c.bf16 %v402, %v398
    %v466 = vpack.c.bf16 %v412, %v408
    %vm467 = vcmask 523264
    %v469 = vsel %vm467, %v463, 0
    %v472 = vsel %vm467, %v464, 0
    %v475 = vsel %vm467, %v465, 0
    %v478 = vsel %vm467, %v466, 0
    %480 = vmatprep.subr.bf16.mxu0 0
    %481 = vmatpush1.bf16.xpose.msra.mxu0 %v475
    %482 = vmatprep.subr.bf16.mxu0 0
    %483 = vmatpush1.bf16.xpose.msra.mxu0 %v478
    %484 = vmatprep.subr.bf16.mxu0 0
    %485 = vmatpush1.bf16.xpose.msra.mxu0 0
    %486 = vmatprep.subr.bf16.mxu0 0
    %487 = vmatpush1.bf16.xpose.msra.mxu0 0
    %488 = vmatprep.subr.bf16.mxu0 0
    %489 = vmatpush1.bf16.xpose.msra.mxu0 0
    %490 = vmatprep.subr.bf16.mxu0 0
    %491 = vmatpush1.bf16.xpose.msra.mxu0 0
    %492 = vmatprep.subr.bf16.mxu0 0
    %493 = vmatpush1.bf16.xpose.msra.mxu0 0
    %494 = vmatprep.subr.bf16.mxu0 0
    %495 = vmatpush1.bf16.xpose.msra.mxu0 0
    %496 = vmatprep.subr.bf16.mxu0 0
    %497 = vmatpush1.bf16.xpose.msra.mxu0 0
    %498 = vmatprep.subr.bf16.mxu0 0
    %499 = vmatpush1.bf16.xpose.msra.mxu0 0
    %500 = vmatprep.subr.bf16.mxu0 0
    %501 = vmatpush1.bf16.xpose.msra.mxu0 0
    %502 = vmatprep.subr.bf16.mxu0 0
    %503 = vmatpush1.bf16.xpose.msra.mxu0 0
    %504 = vmatprep.subr.bf16.mxu0 0
    %505 = vmatpush1.bf16.xpose.msra.mxu0 0
    %506 = vmatprep.subr.bf16.mxu0 0
    %507 = vmatpush1.bf16.xpose.msra.mxu0 0
    %508 = vmatprep.subr.bf16.mxu0 0
    %509 = vmatpush1.bf16.xpose.msra.mxu0 0
    %510 = vmatprep.subr.bf16.mxu0 0
    %511 = vmatpush1.bf16.xpose.msra.mxu0 0
    %512 = vmatprep.mubr.bf16.mxu0 0
    %513 = vmatmul.mubr.bf16.gmra.mrb[0].mxu0 %v469
    %v514 = vpop.f32.mrb[0].mxu0
    %v515 = vadd.f32 0.0, %v514
    %v516 = vpop.f32.mrb[0].mxu0
    %v517 = vpop.f32.mrb[0].mxu0
    %v518 = vadd.f32 0.0, %v517
    %v519 = vpop.f32.mrb[0].mxu0
    %520 = vmatprep.mubr.bf16.mxu0 0
    %521 = vmatmul.mubr.bf16.gmra.mrb[0].mxu0 %v472
    %v522 = vpop.f32.mrb[0].mxu0
    %v523 = vadd.f32 0.0, %v522
    %v524 = vpop.f32.mrb[0].mxu0
    %v525 = vpop.f32.mrb[0].mxu0
    %v526 = vadd.f32 0.0, %v525
    %v527 = vpop.f32.mrb[0].mxu0
    %528 = vdwg.mxu0
    %v529 = vmul.f32 %v515, 0.125
    %v530 = vmul.f32 %v518, 0.125
    %v531 = vmul.f32 %v523, 0.125
    %v532 = vmul.f32 %v526, 0.125
    %v533 = vadd.f32 %v529, %v178
    %v534 = vadd.f32 %v530, %v179
    %v535 = vadd.f32 %v531, %v180
    %v536 = vadd.f32 %v532, %v181
    %vm537 = vcmask 261120
    %v538 = vsel %vm537, %v533, -inf
    %539 = vmax.xlane.f32.xlu0 %v538
    %v540 = vpop.xlane.xlu0 %539
    %v541 = vsel %vm537, %v534, -inf
    %542 = vmax.xlane.f32.xlu0 %v541
    %v543 = vpop.xlane.xlu0 %542
    %v544 = vsel %vm537, %v535, -inf
    %545 = vmax.xlane.f32.xlu0 %v544
    %v546 = vpop.xlane.xlu0 %545
    %v547 = vsel %vm537, %v536, -inf
    %548 = vmax.xlane.f32.xlu0 %v547
    %v549 = vpop.xlane.xlu0 %548
    %v550 = vsub.f32 %v533, %v540
    %v551 = vsub.f32 %v534, %v543
    %v552 = vsub.f32 %v535, %v546
    %v553 = vsub.f32 %v536, %v549
    %v554 = vmul.f32 %v550, 1.442695
    %v555 = vpow.pop %v554
    %v556 = vmul.f32 %v551, 1.442695
    %v557 = vpow.pop %v556
    %v558 = vmul.f32 %v552, 1.442695
    %v559 = vpow.pop %v558
    %v560 = vmul.f32 %v553, 1.442695
    %v561 = vpow.pop %v560
    %v562 = vsel %vm537, %v555, 0.0
    %563 = vadd.xlane.f32.xlu0 %v562
    %v564 = vpop.xlane.xlu0 %563
    %v565 = vsel %vm537, %v557, 0.0
    %566 = vadd.xlane.f32.xlu0 %v565
    %v567 = vpop.xlane.xlu0 %566
    %v568 = vsel %vm537, %v559, 0.0
    %569 = vadd.xlane.f32.xlu0 %v568
    %v570 = vpop.xlane.xlu0 %569
    %v571 = vsel %vm537, %v561, 0.0
    %572 = vadd.xlane.f32.xlu0 %v571
    %v573 = vpop.xlane.xlu0 %572
    %v574 = vrcp.pop %v564
    %v575 = vrcp.pop %v567
    %v576 = vrcp.pop %v570
    %v577 = vrcp.pop %v573
    %v578 = vmul.f32 %v555, %v574
    %v579 = vmul.f32 %v557, %v575
    %v580 = vmul.f32 %v559, %v576
    %v581 = vmul.f32 %v561, %v577
    %v582 = vpack.c.bf16 %v579, %v578
    %v583 = vpack.c.bf16 %v581, %v580
    %v584 = vpack.c.bf16 %v452, %v449
    %v585 = vpack.c.bf16 %v460, %v457
    %v587 = vsel %vm537, %v582, 0
    %v590 = vsel %vm537, %v583, 0
    %592 = vmatprep.subr.bf16.mxu0 0
    %593 = vmatpush1.bf16.msra.mxu0 %v584
    %594 = vmatprep.subr.bf16.mxu0 0
    %595 = vmatpush1.bf16.msra.mxu0 %v585
    %596 = vmatprep.subr.bf16.mxu0 0
    %597 = vmatpush1.bf16.msra.mxu0 0
    %598 = vmatprep.subr.bf16.mxu0 0
    %599 = vmatpush1.bf16.msra.mxu0 0
    %600 = vmatprep.subr.bf16.mxu0 0
    %601 = vmatpush1.bf16.msra.mxu0 0
    %602 = vmatprep.subr.bf16.mxu0 0
    %603 = vmatpush1.bf16.msra.mxu0 0
    %604 = vmatprep.subr.bf16.mxu0 0
    %605 = vmatpush1.bf16.msra.mxu0 0
    %606 = vmatprep.subr.bf16.mxu0 0
    %607 = vmatpush1.bf16.msra.mxu0 0
    %608 = vmatprep.subr.bf16.mxu0 0
    %609 = vmatpush1.bf16.msra.mxu0 0
    %610 = vmatprep.subr.bf16.mxu0 0
    %611 = vmatpush1.bf16.msra.mxu0 0
    %612 = vmatprep.subr.bf16.mxu0 0
    %613 = vmatpush1.bf16.msra.mxu0 0
    %614 = vmatprep.subr.bf16.mxu0 0
    %615 = vmatpush1.bf16.msra.mxu0 0
    %616 = vmatprep.subr.bf16.mxu0 0
    %617 = vmatpush1.bf16.msra.mxu0 0
    %618 = vmatprep.subr.bf16.mxu0 0
    %619 = vmatpush1.bf16.msra.mxu0 0
    %620 = vmatprep.subr.bf16.mxu0 0
    %621 = vmatpush1.bf16.msra.mxu0 0
    %622 = vmatprep.subr.bf16.mxu0 0
    %623 = vmatpush1.bf16.msra.mxu0 0
    %624 = vmatprep.mubr.bf16.mxu0 0
    %625 = vmatmul.mubr.bf16.gmra.mrb[0].mxu0 %v587
    %v626 = vpop.f32.mrb[0].mxu0
    %v627 = vadd.f32 0.0, %v626
    %v628 = vpop.f32.mrb[0].mxu0
    %v629 = vpop.f32.mrb[0].mxu0
    %v630 = vadd.f32 0.0, %v629
    %v631 = vpop.f32.mrb[0].mxu0
    %632 = vmatprep.mubr.bf16.mxu0 0
    %633 = vmatmul.mubr.bf16.gmra.mrb[0].mxu0 %v590
    %v634 = vpop.f32.mrb[0].mxu0
    %v635 = vadd.f32 0.0, %v634
    %v636 = vpop.f32.mrb[0].mxu0
    %v637 = vpop.f32.mrb[0].mxu0
    %v638 = vadd.f32 0.0, %v637
    %v639 = vpop.f32.mrb[0].mxu0
    %640 = vdwg.mxu0
    %643 = vrot.lane.b32.xlu0 %v463, 64
    %v644 = vpop.permute.xlu0 %643
    %645 = vrot.lane.b32.xlu0 %v464, 64
    %v646 = vpop.permute.xlu0 %645
    %649 = vrot.lane.b32.xlu0 %v465, 64
    %v650 = vpop.permute.xlu0 %649
    %651 = vrot.lane.b32.xlu0 %v466, 64
    %v652 = vpop.permute.xlu0 %651
    %v654 = vsel %vm467, %v644, 0
    %v657 = vsel %vm467, %v646, 0
    %v660 = vsel %vm467, %v650, 0
    %v663 = vsel %vm467, %v652, 0
    %665 = vmatprep.subr.bf16.mxu0 0
    %666 = vmatpush1.bf16.xpose.msra.mxu0 %v660
    %667 = vmatprep.subr.bf16.mxu0 0
    %668 = vmatpush1.bf16.xpose.msra.mxu0 %v663
    %669 = vmatprep.subr.bf16.mxu0 0
    %670 = vmatpush1.bf16.xpose.msra.mxu0 0
    %671 = vmatprep.subr.bf16.mxu0 0
    %672 = vmatpush1.bf16.xpose.msra.mxu0 0
    %673 = vmatprep.subr.bf16.mxu0 0
    %674 = vmatpush1.bf16.xpose.msra.mxu0 0
    %675 = vmatprep.subr.bf16.mxu0 0
    %676 = vmatpush1.bf16.xpose.msra.mxu0 0
    %677 = vmatprep.subr.bf16.mxu0 0
    %678 = vmatpush1.bf16.xpose.msra.mxu0 0
    %679 = vmatprep.subr.bf16.mxu0 0
    %680 = vmatpush1.bf16.xpose.msra.mxu0 0
    %681 = vmatprep.subr.bf16.mxu0 0
    %682 = vmatpush1.bf16.xpose.msra.mxu0 0
    %683 = vmatprep.subr.bf16.mxu0 0
    %684 = vmatpush1.bf16.xpose.msra.mxu0 0
    %685 = vmatprep.subr.bf16.mxu0 0
    %686 = vmatpush1.bf16.xpose.msra.mxu0 0
    %687 = vmatprep.subr.bf16.mxu0 0
    %688 = vmatpush1.bf16.xpose.msra.mxu0 0
    %689 = vmatprep.subr.bf16.mxu0 0
    %690 = vmatpush1.bf16.xpose.msra.mxu0 0
    %691 = vmatprep.subr.bf16.mxu0 0
    %692 = vmatpush1.bf16.xpose.msra.mxu0 0
    %693 = vmatprep.subr.bf16.mxu0 0
    %694 = vmatpush1.bf16.xpose.msra.mxu0 0
    %695 = vmatprep.subr.bf16.mxu0 0
    %696 = vmatpush1.bf16.xpose.msra.mxu0 0
    %697 = vmatprep.mubr.bf16.mxu0 0
    %698 = vmatmul.mubr.bf16.gmra.mrb[0].mxu0 %v654
    %v699 = vpop.f32.mrb[0].mxu0
    %v700 = vadd.f32 0.0, %v699
    %v701 = vpop.f32.mrb[0].mxu0
    %v702 = vpop.f32.mrb[0].mxu0
    %v703 = vadd.f32 0.0, %v702
    %v704 = vpop.f32.mrb[0].mxu0
    %705 = vmatprep.mubr.bf16.mxu0 0
    %706 = vmatmul.mubr.bf16.gmra.mrb[0].mxu0 %v657
    %v707 = vpop.f32.mrb[0].mxu0
    %v708 = vadd.f32 0.0, %v707
    %v709 = vpop.f32.mrb[0].mxu0
    %v710 = vpop.f32.mrb[0].mxu0
    %v711 = vadd.f32 0.0, %v710
    %v712 = vpop.f32.mrb[0].mxu0
    %713 = vdwg.mxu0
    %v714 = vmul.f32 %v700, 0.125
    %v715 = vmul.f32 %v703, 0.125
    %v716 = vmul.f32 %v708, 0.125
    %v717 = vmul.f32 %v711, 0.125
    %v718 = vadd.f32 %v714, %v178
    %v719 = vadd.f32 %v715, %v179
    %v720 = vadd.f32 %v716, %v180
    %v721 = vadd.f32 %v717, %v181
    %v722 = vsel %vm537, %v718, -inf
    %723 = vmax.xlane.f32.xlu0 %v722
    %v724 = vpop.xlane.xlu0 %723
    %v725 = vsel %vm537, %v719, -inf
    %726 = vmax.xlane.f32.xlu0 %v725
    %v727 = vpop.xlane.xlu0 %726
    %v728 = vsel %vm537, %v720, -inf
    %729 = vmax.xlane.f32.xlu0 %v728
    %v730 = vpop.xlane.xlu0 %729
    %v731 = vsel %vm537, %v721, -inf
    %732 = vmax.xlane.f32.xlu0 %v731
    %v733 = vpop.xlane.xlu0 %732
    %v734 = vsub.f32 %v718, %v724
    %v735 = vsub.f32 %v719, %v727
    %v736 = vsub.f32 %v720, %v730
    %v737 = vsub.f32 %v721, %v733
    %v738 = vmul.f32 %v734, 1.442695
    %v739 = vpow.pop %v738
    %v740 = vmul.f32 %v735, 1.442695
    %v741 = vpow.pop %v740
    %v742 = vmul.f32 %v736, 1.442695
    %v743 = vpow.pop %v742
    %v744 = vmul.f32 %v737, 1.442695
    %v745 = vpow.pop %v744
    %v746 = vsel %vm537, %v739, 0.0
    %747 = vadd.xlane.f32.xlu0 %v746
    %v748 = vpop.xlane.xlu0 %747
    %v749 = vsel %vm537, %v741, 0.0
    %750 = vadd.xlane.f32.xlu0 %v749
    %v751 = vpop.xlane.xlu0 %750
    %v752 = vsel %vm537, %v743, 0.0
    %753 = vadd.xlane.f32.xlu0 %v752
    %v754 = vpop.xlane.xlu0 %753
    %v755 = vsel %vm537, %v745, 0.0
    %756 = vadd.xlane.f32.xlu0 %v755
    %v757 = vpop.xlane.xlu0 %756
    %v758 = vrcp.pop %v748
    %v759 = vrcp.pop %v751
    %v760 = vrcp.pop %v754
    %v761 = vrcp.pop %v757
    %v762 = vmul.f32 %v739, %v758
    %v763 = vmul.f32 %v741, %v759
    %v764 = vmul.f32 %v743, %v760
    %v765 = vmul.f32 %v745, %v761
    %v766 = vpack.c.bf16 %v763, %v762
    %v767 = vpack.c.bf16 %v765, %v764
    %770 = vrot.lane.b32.xlu0 %v584, 64
    %v771 = vpop.permute.xlu0 %770
    %772 = vrot.lane.b32.xlu0 %v585, 64
    %v773 = vpop.permute.xlu0 %772
    %v777 = vsel %vm537, %v766, 0
    %v780 = vsel %vm537, %v767, 0
    %782 = vmatprep.subr.bf16.mxu0 0
    %783 = vmatpush1.bf16.msra.mxu0 %v771
    %784 = vmatprep.subr.bf16.mxu0 0
    %785 = vmatpush1.bf16.msra.mxu0 %v773
    %786 = vmatprep.subr.bf16.mxu0 0
    %787 = vmatpush1.bf16.msra.mxu0 0
    %788 = vmatprep.subr.bf16.mxu0 0
    %789 = vmatpush1.bf16.msra.mxu0 0
    %790 = vmatprep.subr.bf16.mxu0 0
    %791 = vmatpush1.bf16.msra.mxu0 0
    %792 = vmatprep.subr.bf16.mxu0 0
    %793 = vmatpush1.bf16.msra.mxu0 0
    %794 = vmatprep.subr.bf16.mxu0 0
    %795 = vmatpush1.bf16.msra.mxu0 0
    %796 = vmatprep.subr.bf16.mxu0 0
    %797 = vmatpush1.bf16.msra.mxu0 0
    %798 = vmatprep.subr.bf16.mxu0 0
    %799 = vmatpush1.bf16.msra.mxu0 0
    %800 = vmatprep.subr.bf16.mxu0 0
    %801 = vmatpush1.bf16.msra.mxu0 0
    %802 = vmatprep.subr.bf16.mxu0 0
    %803 = vmatpush1.bf16.msra.mxu0 0
    %804 = vmatprep.subr.bf16.mxu0 0
    %805 = vmatpush1.bf16.msra.mxu0 0
    %806 = vmatprep.subr.bf16.mxu0 0
    %807 = vmatpush1.bf16.msra.mxu0 0
    %808 = vmatprep.subr.bf16.mxu0 0
    %809 = vmatpush1.bf16.msra.mxu0 0
    %810 = vmatprep.subr.bf16.mxu0 0
    %811 = vmatpush1.bf16.msra.mxu0 0
    %812 = vmatprep.subr.bf16.mxu0 0
    %813 = vmatpush1.bf16.msra.mxu0 0
    %814 = vmatprep.mubr.bf16.mxu0 0
    %815 = vmatmul.mubr.bf16.gmra.mrb[0].mxu0 %v777
    %v816 = vpop.f32.mrb[0].mxu0
    %v817 = vadd.f32 0.0, %v816
    %v818 = vpop.f32.mrb[0].mxu0
    %v819 = vpop.f32.mrb[0].mxu0
    %v820 = vadd.f32 0.0, %v819
    %v821 = vpop.f32.mrb[0].mxu0
    %822 = vmatprep.mubr.bf16.mxu0 0
    %823 = vmatmul.mubr.bf16.gmra.mrb[0].mxu0 %v780
    %v824 = vpop.f32.mrb[0].mxu0
    %v825 = vadd.f32 0.0, %v824
    %v826 = vpop.f32.mrb[0].mxu0
    %v827 = vpop.f32.mrb[0].mxu0
    %v828 = vadd.f32 0.0, %v827
    %v829 = vpop.f32.mrb[0].mxu0
    %830 = vdwg.mxu0
    %835 = vrot.lane.b32.xlu0 %v817, 64
    %v836 = vpop.permute.xlu0 %835
    %837 = vrot.lane.b32.xlu0 %v820, 64
    %v838 = vpop.permute.xlu0 %837
    %839 = vrot.lane.b32.xlu0 %v825, 64
    %v840 = vpop.permute.xlu0 %839
    %841 = vrot.lane.b32.xlu0 %v828, 64
    %v842 = vpop.permute.xlu0 %841
    %v847 = vsel %vm467, %v627, %v836
    %v848 = vsel %vm467, %v630, %v838
    %v849 = vsel %vm467, %v635, %v840
    %v850 = vsel %vm467, %v638, %v842
    %v851 = vpack.c.bf16 %v848, %v847
    %v852 = vpack.c.bf16 %v850, %v849
    %v853 = vld [vmem:[%s7] sm:$0xf]
    %v854 = vld [vmem:[%s7 + $0x4] sm:$0xf]
    %v855 = vld [vmem:[%s7 + $0x8] sm:$0xf]
    %v856 = vld [vmem:[%s7 + $0xc] sm:$0xf]
    %v857 = vld [vmem:[%s7 + $0x10] sm:$0xf]
    %v858 = vld [vmem:[%s7 + $0x14] sm:$0xf]
    %v859 = vld [vmem:[%s7 + $0x18] sm:$0xf]
    %v860 = vld [vmem:[%s7 + $0x1c] sm:$0xf]
    %v861 = vld [vmem:[%s7 + $0x20] sm:$0xf]
    %v862 = vld [vmem:[%s7 + $0x24] sm:$0xf]
    %v863 = vld [vmem:[%s7 + $0x28] sm:$0xf]
    %v864 = vld [vmem:[%s7 + $0x2c] sm:$0xf]
    %v865 = vld [vmem:[%s7 + $0x30] sm:$0xf]
    %v866 = vld [vmem:[%s7 + $0x34] sm:$0xf]
    %v867 = vld [vmem:[%s7 + $0x38] sm:$0xf]
    %v868 = vld [vmem:[%s7 + $0x3c] sm:$0xf]
    %v869 = vld [vmem:[%s8] sm:$0x1]
    %v871 = vlaneseq
    %v872 = vshrl.u32 %v871, 7
    %v873 = vsub.s32 0, %v872
    %v874 = vrot.slane %v869, %v873
    %v892 = vunpack.c.l.b16 %v853
    %v893 = vunpack.c.l.b16 %v854
    %v894 = vunpack.c.l.b16 %v855
    %v895 = vunpack.c.l.b16 %v856
    %v896 = vunpack.c.l.b16 %v857
    %v897 = vunpack.c.l.b16 %v858
    %v898 = vunpack.c.l.b16 %v859
    %v899 = vunpack.c.l.b16 %v860
    %v900 = vunpack.c.l.b16 %v861
    %v901 = vunpack.c.l.b16 %v862
    %v902 = vunpack.c.l.b16 %v863
    %v903 = vunpack.c.l.b16 %v864
    %v904 = vunpack.c.l.b16 %v865
    %v905 = vunpack.c.l.b16 %v866
    %v906 = vunpack.c.l.b16 %v867
    %v907 = vunpack.c.l.b16 %v868
    %v908 = vpack.c.b16 %v893, %v892
    %v909 = vpack.c.b16 %v895, %v894
    %v910 = vpack.c.b16 %v897, %v896
    %v911 = vpack.c.b16 %v899, %v898
    %v912 = vpack.c.b16 %v901, %v900
    %v913 = vpack.c.b16 %v903, %v902
    %v914 = vpack.c.b16 %v905, %v904
    %v915 = vpack.c.b16 %v907, %v906
    %924 = vmatprep.subr.bf16.mxu0 0
    %925 = vmatpush1.bf16.msra.mxu0 %v908
    %926 = vmatprep.subr.bf16.mxu0 0
    %927 = vmatpush1.bf16.msra.mxu0 %v909
    %928 = vmatprep.subr.bf16.mxu0 0
    %929 = vmatpush1.bf16.msra.mxu0 %v910
    %930 = vmatprep.subr.bf16.mxu0 0
    %931 = vmatpush1.bf16.msra.mxu0 %v911
    %932 = vmatprep.subr.bf16.mxu0 0
    %933 = vmatpush1.bf16.msra.mxu0 %v912
    %934 = vmatprep.subr.bf16.mxu0 0
    %935 = vmatpush1.bf16.msra.mxu0 %v913
    %936 = vmatprep.subr.bf16.mxu0 0
    %937 = vmatpush1.bf16.msra.mxu0 %v914
    %938 = vmatprep.subr.bf16.mxu0 0
    %939 = vmatpush1.bf16.msra.mxu0 %v915
    %940 = vmatprep.subr.bf16.mxu0 0
    %941 = vmatpush1.bf16.msra.mxu0 0
    %942 = vmatprep.subr.bf16.mxu0 0
    %943 = vmatpush1.bf16.msra.mxu0 0
    %944 = vmatprep.subr.bf16.mxu0 0
    %945 = vmatpush1.bf16.msra.mxu0 0
    %946 = vmatprep.subr.bf16.mxu0 0
    %947 = vmatpush1.bf16.msra.mxu0 0
    %948 = vmatprep.subr.bf16.mxu0 0
    %949 = vmatpush1.bf16.msra.mxu0 0
    %950 = vmatprep.subr.bf16.mxu0 0
    %951 = vmatpush1.bf16.msra.mxu0 0
    %952 = vmatprep.subr.bf16.mxu0 0
    %953 = vmatpush1.bf16.msra.mxu0 0
    %954 = vmatprep.subr.bf16.mxu0 0
    %955 = vmatpush1.bf16.msra.mxu0 0
    %956 = vmatprep.mubr.bf16.mxu0 0
    %957 = vmatmul.mubr.bf16.gmra.mrb[0].mxu0 %v851
    %v958 = vpop.f32.mrb[0].mxu0
    %v959 = vadd.f32 %v874, %v958
    %v960 = vpop.f32.mrb[0].mxu0
    %v961 = vpop.f32.mrb[0].mxu0
    %v962 = vadd.f32 %v874, %v961
    %v963 = vpop.f32.mrb[0].mxu0
    %964 = vmatprep.mubr.bf16.mxu0 0
    %965 = vmatmul.mubr.bf16.gmra.mrb[0].mxu0 %v852
    %v966 = vpop.f32.mrb[0].mxu0
    %v967 = vadd.f32 %v874, %v966
    %v968 = vpop.f32.mrb[0].mxu0
    %v969 = vpop.f32.mrb[0].mxu0
    %v970 = vadd.f32 %v874, %v969
    %v971 = vpop.f32.mrb[0].mxu0
    %972 = vdwg.mxu0
    %v973 = vadd.f32 %v959, %v174
    %v974 = vadd.f32 %v962, %v175
    %v975 = vadd.f32 %v967, %v176
    %v976 = vadd.f32 %v970, %v177
    %v977 = vld [vmem:[%s9] sm:$0x1]
    %v978 = vld [vmem:[%s10] sm:$0x1]
    %979 = vadd.xlane.f32.xlu0 %v973
    %v980 = vpop.xlane.xlu0 %979
    %981 = vadd.xlane.f32.xlu0 %v974
    %v982 = vpop.xlane.xlu0 %981
    %983 = vadd.xlane.f32.xlu0 %v975
    %v984 = vpop.xlane.xlu0 %983
    %985 = vadd.xlane.f32.xlu0 %v976
    %v986 = vpop.xlane.xlu0 %985
    %v987 = vmul.f32 %v980, %v121
    %v988 = vmul.f32 %v982, %v121
    %v989 = vmul.f32 %v984, %v121
    %v990 = vmul.f32 %v986, %v121
    %v991 = vsub.f32 %v973, %v987
    %v992 = vsub.f32 %v974, %v988
    %v993 = vsub.f32 %v975, %v989
    %v994 = vsub.f32 %v976, %v990
    %v995 = vmul.f32 %v991, %v991
    %v996 = vmul.f32 %v992, %v992
    %v997 = vmul.f32 %v993, %v993
    %v998 = vmul.f32 %v994, %v994
    %999 = vadd.xlane.f32.xlu0 %v995
    %v1000 = vpop.xlane.xlu0 %999
    %1001 = vadd.xlane.f32.xlu0 %v996
    %v1002 = vpop.xlane.xlu0 %1001
    %1003 = vadd.xlane.f32.xlu0 %v997
    %v1004 = vpop.xlane.xlu0 %1003
    %1005 = vadd.xlane.f32.xlu0 %v998
    %v1006 = vpop.xlane.xlu0 %1005
    %v1007 = vmul.f32 %v1000, %v121
    %v1008 = vmul.f32 %v1002, %v121
    %v1009 = vmul.f32 %v1004, %v121
    %v1010 = vmul.f32 %v1006, %v121
    %v1011 = vadd.f32 %v1007, 1e-05
    %v1012 = vadd.f32 %v1008, 1e-05
    %v1013 = vadd.f32 %v1009, 1e-05
    %v1014 = vadd.f32 %v1010, 1e-05
    %v1015 = vrsqrt.pop %v1011
    %v1016 = vrsqrt.pop %v1012
    %v1017 = vrsqrt.pop %v1013
    %v1018 = vrsqrt.pop %v1014
    %v1019 = vmul.f32 %v991, %v1015
    %v1020 = vmul.f32 %v992, %v1016
    %v1021 = vmul.f32 %v993, %v1017
    %v1022 = vmul.f32 %v994, %v1018
    %v1024 = vlaneseq
    %v1025 = vshrl.u32 %v1024, 7
    %v1026 = vsub.s32 0, %v1025
    %v1027 = vrot.slane %v977, %v1026
    %v1029 = vmul.f32 %v1019, %v1027
    %v1030 = vmul.f32 %v1020, %v1027
    %v1031 = vmul.f32 %v1021, %v1027
    %v1032 = vmul.f32 %v1022, %v1027
    %v1034 = vlaneseq
    %v1035 = vshrl.u32 %v1034, 7
    %v1036 = vsub.s32 0, %v1035
    %v1037 = vrot.slane %v978, %v1036
    %v1039 = vadd.f32 %v1029, %v1037
    %v1040 = vadd.f32 %v1030, %v1037
    %v1041 = vadd.f32 %v1031, %v1037
    %v1042 = vadd.f32 %v1032, %v1037
    %v1043 = vpack.c.bf16 %v1040, %v1039
    %v1044 = vpack.c.bf16 %v1042, %v1041
    %v1045 = vld [vmem:[%s11] sm:$0xff]
    %v1046 = vld [vmem:[%s11 + $0x8] sm:$0xff]
    %v1047 = vld [vmem:[%s11 + $0x10] sm:$0xff]
    %v1048 = vld [vmem:[%s11 + $0x18] sm:$0xff]
    %v1049 = vld [vmem:[%s11 + $0x20] sm:$0xff]
    %v1050 = vld [vmem:[%s11 + $0x28] sm:$0xff]
    %v1051 = vld [vmem:[%s11 + $0x30] sm:$0xff]
    %v1052 = vld [vmem:[%s11 + $0x38] sm:$0xff]
    %v1053 = vld [vmem:[%s11 + $0x40] sm:$0xff]
    %v1054 = vld [vmem:[%s11 + $0x48] sm:$0xff]
    %v1055 = vld [vmem:[%s11 + $0x50] sm:$0xff]
    %v1056 = vld [vmem:[%s11 + $0x58] sm:$0xff]
    %v1057 = vld [vmem:[%s11 + $0x60] sm:$0xff]
    %v1058 = vld [vmem:[%s11 + $0x68] sm:$0xff]
    %v1059 = vld [vmem:[%s11 + $0x70] sm:$0xff]
    %v1060 = vld [vmem:[%s11 + $0x78] sm:$0xff]
    %v1061 = vld [vmem:[%s11 + $0x80] sm:$0xff]
    %v1062 = vld [vmem:[%s11 + $0x88] sm:$0xff]
    %v1063 = vld [vmem:[%s11 + $0x90] sm:$0xff]
    %v1064 = vld [vmem:[%s11 + $0x98] sm:$0xff]
    %v1065 = vld [vmem:[%s11 + $0xa0] sm:$0xff]
    %v1066 = vld [vmem:[%s11 + $0xa8] sm:$0xff]
    %v1067 = vld [vmem:[%s11 + $0xb0] sm:$0xff]
    %v1068 = vld [vmem:[%s11 + $0xb8] sm:$0xff]
    %v1069 = vld [vmem:[%s11 + $0xc0] sm:$0xff]
    %v1070 = vld [vmem:[%s11 + $0xc8] sm:$0xff]
    %v1071 = vld [vmem:[%s11 + $0xd0] sm:$0xff]
    %v1072 = vld [vmem:[%s11 + $0xd8] sm:$0xff]
    %v1073 = vld [vmem:[%s11 + $0xe0] sm:$0xff]
    %v1074 = vld [vmem:[%s11 + $0xe8] sm:$0xff]
    %v1075 = vld [vmem:[%s11 + $0xf0] sm:$0xff]
    %v1076 = vld [vmem:[%s11 + $0xf8] sm:$0xff]
    %v1077 = vld [vmem:[%s12] sm:$0xf]
    %v1079 = vlaneseq
    %v1080 = vshrl.u32 %v1079, 7
    %v1081 = vsub.s32 0, %v1080
    %v1082 = vrot.slane %v1077, %v1081
    %v1083 = vlaneseq
    %v1084 = vshrl.u32 %v1083, 7
    %v1085 = vsub.s32 1, %v1084
    %v1086 = vrot.slane %v1077, %v1085
    %v1087 = vlaneseq
    %v1088 = vshrl.u32 %v1087, 7
    %v1089 = vsub.s32 2, %v1088
    %v1090 = vrot.slane %v1077, %v1089
    %v1091 = vlaneseq
    %v1092 = vshrl.u32 %v1091, 7
    %v1093 = vsub.s32 3, %v1092
    %v1094 = vrot.slane %v1077, %v1093
    %v1131 = vunpack.c.l.b16 %v1045
    %v1132 = vunpack.c.h.b16 %v1045
    %v1133 = vunpack.c.l.b16 %v1046
    %v1134 = vunpack.c.h.b16 %v1046
    %v1135 = vunpack.c.l.b16 %v1047
    %v1136 = vunpack.c.h.b16 %v1047
    %v1137 = vunpack.c.l.b16 %v1048
    %v1138 = vunpack.c.h.b16 %v1048
    %v1139 = vunpack.c.l.b16 %v1049
    %v1140 = vunpack.c.h.b16 %v1049
    %v1141 = vunpack.c.l.b16 %v1050
    %v1142 = vunpack.c.h.b16 %v1050
    %v1143 = vunpack.c.l.b16 %v1051
    %v1144 = vunpack.c.h.b16 %v1051
    %v1145 = vunpack.c.l.b16 %v1052
    %v1146 = vunpack.c.h.b16 %v1052
    %v1147 = vunpack.c.l.b16 %v1053
    %v1148 = vunpack.c.h.b16 %v1053
    %v1149 = vunpack.c.l.b16 %v1054
    %v1150 = vunpack.c.h.b16 %v1054
    %v1151 = vunpack.c.l.b16 %v1055
    %v1152 = vunpack.c.h.b16 %v1055
    %v1153 = vunpack.c.l.b16 %v1056
    %v1154 = vunpack.c.h.b16 %v1056
    %v1155 = vunpack.c.l.b16 %v1057
    %v1156 = vunpack.c.h.b16 %v1057
    %v1157 = vunpack.c.l.b16 %v1058
    %v1158 = vunpack.c.h.b16 %v1058
    %v1159 = vunpack.c.l.b16 %v1059
    %v1160 = vunpack.c.h.b16 %v1059
    %v1161 = vunpack.c.l.b16 %v1060
    %v1162 = vunpack.c.h.b16 %v1060
    %v1163 = vunpack.c.l.b16 %v1061
    %v1164 = vunpack.c.h.b16 %v1061
    %v1165 = vunpack.c.l.b16 %v1062
    %v1166 = vunpack.c.h.b16 %v1062
    %v1167 = vunpack.c.l.b16 %v1063
    %v1168 = vunpack.c.h.b16 %v1063
    %v1169 = vunpack.c.l.b16 %v1064
    %v1170 = vunpack.c.h.b16 %v1064
    %v1171 = vunpack.c.l.b16 %v1065
    %v1172 = vunpack.c.h.b16 %v1065
    %v1173 = vunpack.c.l.b16 %v1066
    %v1174 = vunpack.c.h.b16 %v1066
    %v1175 = vunpack.c.l.b16 %v1067
    %v1176 = vunpack.c.h.b16 %v1067
    %v1177 = vunpack.c.l.b16 %v1068
    %v1178 = vunpack.c.h.b16 %v1068
    %v1179 = vunpack.c.l.b16 %v1069
    %v1180 = vunpack.c.h.b16 %v1069
    %v1181 = vunpack.c.l.b16 %v1070
    %v1182 = vunpack.c.h.b16 %v1070
    %v1183 = vunpack.c.l.b16 %v1071
    %v1184 = vunpack.c.h.b16 %v1071
    %v1185 = vunpack.c.l.b16 %v1072
    %v1186 = vunpack.c.h.b16 %v1072
    %v1187 = vunpack.c.l.b16 %v1073
    %v1188 = vunpack.c.h.b16 %v1073
    %v1189 = vunpack.c.l.b16 %v1074
    %v1190 = vunpack.c.h.b16 %v1074
    %v1191 = vunpack.c.l.b16 %v1075
    %v1192 = vunpack.c.h.b16 %v1075
    %v1193 = vunpack.c.l.b16 %v1076
    %v1194 = vunpack.c.h.b16 %v1076
    %v1195 = vpack.c.b16 %v1135, %v1131
    %v1196 = vpack.c.b16 %v1136, %v1132
    %v1197 = vpack.c.b16 %v1137, %v1133
    %v1198 = vpack.c.b16 %v1138, %v1134
    %v1199 = vpack.c.b16 %v1143, %v1139
    %v1200 = vpack.c.b16 %v1144, %v1140
    %v1201 = vpack.c.b16 %v1145, %v1141
    %v1202 = vpack.c.b16 %v1146, %v1142
    %v1203 = vpack.c.b16 %v1151, %v1147
    %v1204 = vpack.c.b16 %v1152, %v1148
    %v1205 = vpack.c.b16 %v1153, %v1149
    %v1206 = vpack.c.b16 %v1154, %v1150
    %v1207 = vpack.c.b16 %v1159, %v1155
    %v1208 = vpack.c.b16 %v1160, %v1156
    %v1209 = vpack.c.b16 %v1161, %v1157
    %v1210 = vpack.c.b16 %v1162, %v1158
    %v1211 = vpack.c.b16 %v1167, %v1163
    %v1212 = vpack.c.b16 %v1168, %v1164
    %v1213 = vpack.c.b16 %v1169, %v1165
    %v1214 = vpack.c.b16 %v1170, %v1166
    %v1215 = vpack.c.b16 %v1175, %v1171
    %v1216 = vpack.c.b16 %v1176, %v1172
    %v1217 = vpack.c.b16 %v1177, %v1173
    %v1218 = vpack.c.b16 %v1178, %v1174
    %v1219 = vpack.c.b16 %v1183, %v1179
    %v1220 = vpack.c.b16 %v1184, %v1180
    %v1221 = vpack.c.b16 %v1185, %v1181
    %v1222 = vpack.c.b16 %v1186, %v1182
    %v1223 = vpack.c.b16 %v1191, %v1187
    %v1224 = vpack.c.b16 %v1192, %v1188
    %v1225 = vpack.c.b16 %v1193, %v1189
    %v1226 = vpack.c.b16 %v1194, %v1190
    %1259 = vmatprep.subr.bf16.mxu0 %v1196
    %1260 = vmatpush1.bf16.msra.mxu0 %v1195
    %1261 = vmatprep.subr.bf16.mxu0 %v1200
    %1262 = vmatpush1.bf16.msra.mxu0 %v1199
    %1263 = vmatprep.subr.bf16.mxu0 %v1204
    %1264 = vmatpush1.bf16.msra.mxu0 %v1203
    %1265 = vmatprep.subr.bf16.mxu0 %v1208
    %1266 = vmatpush1.bf16.msra.mxu0 %v1207
    %1267 = vmatprep.subr.bf16.mxu0 %v1212
    %1268 = vmatpush1.bf16.msra.mxu0 %v1211
    %1269 = vmatprep.subr.bf16.mxu0 %v1216
    %1270 = vmatpush1.bf16.msra.mxu0 %v1215
    %1271 = vmatprep.subr.bf16.mxu0 %v1220
    %1272 = vmatpush1.bf16.msra.mxu0 %v1219
    %1273 = vmatprep.subr.bf16.mxu0 %v1224
    %1274 = vmatpush1.bf16.msra.mxu0 %v1223
    %1275 = vmatprep.subr.bf16.mxu0 0
    %1276 = vmatpush1.bf16.msra.mxu0 0
    %1277 = vmatprep.subr.bf16.mxu0 0
    %1278 = vmatpush1.bf16.msra.mxu0 0
    %1279 = vmatprep.subr.bf16.mxu0 0
    %1280 = vmatpush1.bf16.msra.mxu0 0
    %1281 = vmatprep.subr.bf16.mxu0 0
    %1282 = vmatpush1.bf16.msra.mxu0 0
    %1283 = vmatprep.subr.bf16.mxu0 0
    %1284 = vmatpush1.bf16.msra.mxu0 0
    %1285 = vmatprep.subr.bf16.mxu0 0
    %1286 = vmatpush1.bf16.msra.mxu0 0
    %1287 = vmatprep.subr.bf16.mxu0 0
    %1288 = vmatpush1.bf16.msra.mxu0 0
    %1289 = vmatprep.subr.bf16.mxu0 0
    %1290 = vmatpush1.bf16.msra.mxu0 0
    %1291 = vmatprep.mubr.bf16.mxu0 0
    %1292 = vmatmul.mubr.bf16.gmra.mrb[0].mxu0 %v1043
    %v1293 = vpop.f32.mrb[0].mxu0
    %v1294 = vadd.f32 %v1082, %v1293
    %v1295 = vpop.f32.mrb[0].mxu0
    %v1296 = vadd.f32 %v1086, %v1295
    %v1297 = vpop.f32.mrb[0].mxu0
    %v1298 = vadd.f32 %v1082, %v1297
    %v1299 = vpop.f32.mrb[0].mxu0
    %v1300 = vadd.f32 %v1086, %v1299
    %1301 = vmatprep.mubr.bf16.mxu0 0
    %1302 = vmatmul.mubr.bf16.gmra.mrb[0].mxu0 %v1044
    %v1303 = vpop.f32.mrb[0].mxu0
    %v1304 = vadd.f32 %v1082, %v1303
    %v1305 = vpop.f32.mrb[0].mxu0
    %v1306 = vadd.f32 %v1086, %v1305
    %v1307 = vpop.f32.mrb[0].mxu0
    %v1308 = vadd.f32 %v1082, %v1307
    %v1309 = vpop.f32.mrb[0].mxu0
    %v1310 = vadd.f32 %v1086, %v1309
    %1311 = vdwg.mxu0
    %1312 = vmatprep.subr.bf16.mxu0 %v1198
    %1313 = vmatpush1.bf16.msra.mxu0 %v1197
    %1314 = vmatprep.subr.bf16.mxu0 %v1202
    %1315 = vmatpush1.bf16.msra.mxu0 %v1201
    %1316 = vmatprep.subr.bf16.mxu0 %v1206
    %1317 = vmatpush1.bf16.msra.mxu0 %v1205
    %1318 = vmatprep.subr.bf16.mxu0 %v1210
    %1319 = vmatpush1.bf16.msra.mxu0 %v1209
    %1320 = vmatprep.subr.bf16.mxu0 %v1214
    %1321 = vmatpush1.bf16.msra.mxu0 %v1213
    %1322 = vmatprep.subr.bf16.mxu0 %v1218
    %1323 = vmatpush1.bf16.msra.mxu0 %v1217
    %1324 = vmatprep.subr.bf16.mxu0 %v1222
    %1325 = vmatpush1.bf16.msra.mxu0 %v1221
    %1326 = vmatprep.subr.bf16.mxu0 %v1226
    %1327 = vmatpush1.bf16.msra.mxu0 %v1225
    %1328 = vmatprep.subr.bf16.mxu0 0
    %1329 = vmatpush1.bf16.msra.mxu0 0
    %1330 = vmatprep.subr.bf16.mxu0 0
    %1331 = vmatpush1.bf16.msra.mxu0 0
    %1332 = vmatprep.subr.bf16.mxu0 0
    %1333 = vmatpush1.bf16.msra.mxu0 0
    %1334 = vmatprep.subr.bf16.mxu0 0
    %1335 = vmatpush1.bf16.msra.mxu0 0
    %1336 = vmatprep.subr.bf16.mxu0 0
    %1337 = vmatpush1.bf16.msra.mxu0 0
    %1338 = vmatprep.subr.bf16.mxu0 0
    %1339 = vmatpush1.bf16.msra.mxu0 0
    %1340 = vmatprep.subr.bf16.mxu0 0
    %1341 = vmatpush1.bf16.msra.mxu0 0
    %1342 = vmatprep.subr.bf16.mxu0 0
    %1343 = vmatpush1.bf16.msra.mxu0 0
    %1344 = vmatprep.mubr.bf16.mxu0 0
    %1345 = vmatmul.mubr.bf16.gmra.mrb[0].mxu0 %v1043
    %v1346 = vpop.f32.mrb[0].mxu0
    %v1347 = vadd.f32 %v1090, %v1346
    %v1348 = vpop.f32.mrb[0].mxu0
    %v1349 = vadd.f32 %v1094, %v1348
    %v1350 = vpop.f32.mrb[0].mxu0
    %v1351 = vadd.f32 %v1090, %v1350
    %v1352 = vpop.f32.mrb[0].mxu0
    %v1353 = vadd.f32 %v1094, %v1352
    %1354 = vmatprep.mubr.bf16.mxu0 0
    %1355 = vmatmul.mubr.bf16.gmra.mrb[0].mxu0 %v1044
    %v1356 = vpop.f32.mrb[0].mxu0
    %v1357 = vadd.f32 %v1090, %v1356
    %v1358 = vpop.f32.mrb[0].mxu0
    %v1359 = vadd.f32 %v1094, %v1358
    %v1360 = vpop.f32.mrb[0].mxu0
    %v1361 = vadd.f32 %v1090, %v1360
    %v1362 = vpop.f32.mrb[0].mxu0
    %v1363 = vadd.f32 %v1094, %v1362
    %1364 = vdwg.mxu0
    %v1365 = vmul.f32 %v1294, 0.5
    %v1366 = vmul.f32 %v1296, 0.5
    %v1367 = vmul.f32 %v1347, 0.5
    %v1368 = vmul.f32 %v1349, 0.5
    %v1369 = vmul.f32 %v1298, 0.5
    %v1370 = vmul.f32 %v1300, 0.5
    %v1371 = vmul.f32 %v1351, 0.5
    %v1372 = vmul.f32 %v1353, 0.5
    %v1373 = vmul.f32 %v1304, 0.5
    %v1374 = vmul.f32 %v1306, 0.5
    %v1375 = vmul.f32 %v1357, 0.5
    %v1376 = vmul.f32 %v1359, 0.5
    %v1377 = vmul.f32 %v1308, 0.5
    %v1378 = vmul.f32 %v1310, 0.5
    %v1379 = vmul.f32 %v1361, 0.5
    %v1380 = vmul.f32 %v1363, 0.5
    %v1381 = vmul.f32 %v1294, 0.044715
    %v1382 = vmul.f32 %v1296, 0.044715
    %v1383 = vmul.f32 %v1347, 0.044715
    %v1384 = vmul.f32 %v1349, 0.044715
    %v1385 = vmul.f32 %v1298, 0.044715
    %v1386 = vmul.f32 %v1300, 0.044715
    %v1387 = vmul.f32 %v1351, 0.044715
    %v1388 = vmul.f32 %v1353, 0.044715
    %v1389 = vmul.f32 %v1304, 0.044715
    %v1390 = vmul.f32 %v1306, 0.044715
    %v1391 = vmul.f32 %v1357, 0.044715
    %v1392 = vmul.f32 %v1359, 0.044715
    %v1393 = vmul.f32 %v1308, 0.044715
    %v1394 = vmul.f32 %v1310, 0.044715
    %v1395 = vmul.f32 %v1361, 0.044715
    %v1396 = vmul.f32 %v1363, 0.044715
    %v1397 = vmul.f32 %v1381, %v1294
    %v1398 = vmul.f32 %v1382, %v1296
    %v1399 = vmul.f32 %v1383, %v1347
    %v1400 = vmul.f32 %v1384, %v1349
    %v1401 = vmul.f32 %v1385, %v1298
    %v1402 = vmul.f32 %v1386, %v1300
    %v1403 = vmul.f32 %v1387, %v1351
    %v1404 = vmul.f32 %v1388, %v1353
    %v1405 = vmul.f32 %v1389, %v1304
    %v1406 = vmul.f32 %v1390, %v1306
    %v1407 = vmul.f32 %v1391, %v1357
    %v1408 = vmul.f32 %v1392, %v1359
    %v1409 = vmul.f32 %v1393, %v1308
    %v1410 = vmul.f32 %v1394, %v1310
    %v1411 = vmul.f32 %v1395, %v1361
    %v1412 = vmul.f32 %v1396, %v1363
    %v1413 = vmul.f32 %v1397, %v1294
    %v1414 = vmul.f32 %v1398, %v1296
    %v1415 = vmul.f32 %v1399, %v1347
    %v1416 = vmul.f32 %v1400, %v1349
    %v1417 = vmul.f32 %v1401, %v1298
    %v1418 = vmul.f32 %v1402, %v1300
    %v1419 = vmul.f32 %v1403, %v1351
    %v1420 = vmul.f32 %v1404, %v1353
    %v1421 = vmul.f32 %v1405, %v1304
    %v1422 = vmul.f32 %v1406, %v1306
    %v1423 = vmul.f32 %v1407, %v1357
    %v1424 = vmul.f32 %v1408, %v1359
    %v1425 = vmul.f32 %v1409, %v1308
    %v1426 = vmul.f32 %v1410, %v1310
    %v1427 = vmul.f32 %v1411, %v1361
    %v1428 = vmul.f32 %v1412, %v1363
    %v1429 = vadd.f32 %v1294, %v1413
    %v1430 = vadd.f32 %v1296, %v1414
    %v1431 = vadd.f32 %v1347, %v1415
    %v1432 = vadd.f32 %v1349, %v1416
    %v1433 = vadd.f32 %v1298, %v1417
    %v1434 = vadd.f32 %v1300, %v1418
    %v1435 = vadd.f32 %v1351, %v1419
    %v1436 = vadd.f32 %v1353, %v1420
    %v1437 = vadd.f32 %v1304, %v1421
    %v1438 = vadd.f32 %v1306, %v1422
    %v1439 = vadd.f32 %v1357, %v1423
    %v1440 = vadd.f32 %v1359, %v1424
    %v1441 = vadd.f32 %v1308, %v1425
    %v1442 = vadd.f32 %v1310, %v1426
    %v1443 = vadd.f32 %v1361, %v1427
    %v1444 = vadd.f32 %v1363, %v1428
    %v1445 = vmul.f32 %v1429, 0.7978846
    %v1446 = vmul.f32 %v1430, 0.7978846
    %v1447 = vmul.f32 %v1431, 0.7978846
    %v1448 = vmul.f32 %v1432, 0.7978846
    %v1449 = vmul.f32 %v1433, 0.7978846
    %v1450 = vmul.f32 %v1434, 0.7978846
    %v1451 = vmul.f32 %v1435, 0.7978846
    %v1452 = vmul.f32 %v1436, 0.7978846
    %v1453 = vmul.f32 %v1437, 0.7978846
    %v1454 = vmul.f32 %v1438, 0.7978846
    %v1455 = vmul.f32 %v1439, 0.7978846
    %v1456 = vmul.f32 %v1440, 0.7978846
    %v1457 = vmul.f32 %v1441, 0.7978846
    %v1458 = vmul.f32 %v1442, 0.7978846
    %v1459 = vmul.f32 %v1443, 0.7978846
    %v1460 = vmul.f32 %v1444, 0.7978846
    %v1461 = vtanh.pop %v1445
    %v1462 = vtanh.pop %v1446
    %v1463 = vtanh.pop %v1447
    %v1464 = vtanh.pop %v1448
    %v1465 = vtanh.pop %v1449
    %v1466 = vtanh.pop %v1450
    %v1467 = vtanh.pop %v1451
    %v1468 = vtanh.pop %v1452
    %v1469 = vtanh.pop %v1453
    %v1470 = vtanh.pop %v1454
    %v1471 = vtanh.pop %v1455
    %v1472 = vtanh.pop %v1456
    %v1473 = vtanh.pop %v1457
    %v1474 = vtanh.pop %v1458
    %v1475 = vtanh.pop %v1459
    %v1476 = vtanh.pop %v1460
    %v1477 = vadd.f32 %v1461, 1.0
    %v1478 = vadd.f32 %v1462, 1.0
    %v1479 = vadd.f32 %v1463, 1.0
    %v1480 = vadd.f32 %v1464, 1.0
    %v1481 = vadd.f32 %v1465, 1.0
    %v1482 = vadd.f32 %v1466, 1.0
    %v1483 = vadd.f32 %v1467, 1.0
    %v1484 = vadd.f32 %v1468, 1.0
    %v1485 = vadd.f32 %v1469, 1.0
    %v1486 = vadd.f32 %v1470, 1.0
    %v1487 = vadd.f32 %v1471, 1.0
    %v1488 = vadd.f32 %v1472, 1.0
    %v1489 = vadd.f32 %v1473, 1.0
    %v1490 = vadd.f32 %v1474, 1.0
    %v1491 = vadd.f32 %v1475, 1.0
    %v1492 = vadd.f32 %v1476, 1.0
    %v1493 = vmul.f32 %v1365, %v1477
    %v1494 = vmul.f32 %v1366, %v1478
    %v1495 = vmul.f32 %v1367, %v1479
    %v1496 = vmul.f32 %v1368, %v1480
    %v1497 = vmul.f32 %v1369, %v1481
    %v1498 = vmul.f32 %v1370, %v1482
    %v1499 = vmul.f32 %v1371, %v1483
    %v1500 = vmul.f32 %v1372, %v1484
    %v1501 = vmul.f32 %v1373, %v1485
    %v1502 = vmul.f32 %v1374, %v1486
    %v1503 = vmul.f32 %v1375, %v1487
    %v1504 = vmul.f32 %v1376, %v1488
    %v1505 = vmul.f32 %v1377, %v1489
    %v1506 = vmul.f32 %v1378, %v1490
    %v1507 = vmul.f32 %v1379, %v1491
    %v1508 = vmul.f32 %v1380, %v1492
    %v1509 = vpack.c.bf16 %v1497, %v1493
    %v1510 = vpack.c.bf16 %v1498, %v1494
    %v1511 = vpack.c.bf16 %v1499, %v1495
    %v1512 = vpack.c.bf16 %v1500, %v1496
    %v1513 = vpack.c.bf16 %v1505, %v1501
    %v1514 = vpack.c.bf16 %v1506, %v1502
    %v1515 = vpack.c.bf16 %v1507, %v1503
    %v1516 = vpack.c.bf16 %v1508, %v1504
    %v1517 = vld [vmem:[#allocation7] sm:$0xf]
    %v1518 = vld [vmem:[#allocation7 + $0x4] sm:$0xf]
    %v1519 = vld [vmem:[#allocation7 + $0x8] sm:$0xf]
    %v1520 = vld [vmem:[#allocation7 + $0xc] sm:$0xf]
    %v1521 = vld [vmem:[#allocation7 + $0x10] sm:$0xf]
    %v1522 = vld [vmem:[#allocation7 + $0x14] sm:$0xf]
    %v1523 = vld [vmem:[#allocation7 + $0x18] sm:$0xf]
    %v1524 = vld [vmem:[#allocation7 + $0x1c] sm:$0xf]
    %v1525 = vld [vmem:[#allocation7 + $0x20] sm:$0xf]
    %v1526 = vld [vmem:[#allocation7 + $0x24] sm:$0xf]
    %v1527 = vld [vmem:[#allocation7 + $0x28] sm:$0xf]
    %v1528 = vld [vmem:[#allocation7 + $0x2c] sm:$0xf]
    %v1529 = vld [vmem:[#allocation7 + $0x30] sm:$0xf]
    %v1530 = vld [vmem:[#allocation7 + $0x34] sm:$0xf]
    %v1531 = vld [vmem:[#allocation7 + $0x38] sm:$0xf]
    %v1532 = vld [vmem:[#allocation7 + $0x3c] sm:$0xf]
    %v1533 = vld [vmem:[#allocation7 + $0x40] sm:$0xf]
    %v1534 = vld [vmem:[#allocation7 + $0x44] sm:$0xf]
    %v1535 = vld [vmem:[#allocation7 + $0x48] sm:$0xf]
    %v1536 = vld [vmem:[#allocation7 + $0x4c] sm:$0xf]
    %v1537 = vld [vmem:[#allocation7 + $0x50] sm:$0xf]
    %v1538 = vld [vmem:[#allocation7 + $0x54] sm:$0xf]
    %v1539 = vld [vmem:[#allocation7 + $0x58] sm:$0xf]
    %v1540 = vld [vmem:[#allocation7 + $0x5c] sm:$0xf]
    %v1541 = vld [vmem:[#allocation7 + $0x60] sm:$0xf]
    %v1542 = vld [vmem:[#allocation7 + $0x64] sm:$0xf]
    %v1543 = vld [vmem:[#allocation7 + $0x68] sm:$0xf]
    %v1544 = vld [vmem:[#allocation7 + $0x6c] sm:$0xf]
    %v1545 = vld [vmem:[#allocation7 + $0x70] sm:$0xf]
    %v1546 = vld [vmem:[#allocation7 + $0x74] sm:$0xf]
    %v1547 = vld [vmem:[#allocation7 + $0x78] sm:$0xf]
    %v1548 = vld [vmem:[#allocation7 + $0x7c] sm:$0xf]
    %v1549 = vld [vmem:[#allocation7 + $0x80] sm:$0xf]
    %v1550 = vld [vmem:[#allocation7 + $0x84] sm:$0xf]
    %v1551 = vld [vmem:[#allocation7 + $0x88] sm:$0xf]
    %v1552 = vld [vmem:[#allocation7 + $0x8c] sm:$0xf]
    %v1553 = vld [vmem:[#allocation7 + $0x90] sm:$0xf]
    %v1554 = vld [vmem:[#allocation7 + $0x94] sm:$0xf]
    %v1555 = vld [vmem:[#allocation7 + $0x98] sm:$0xf]
    %v1556 = vld [vmem:[#allocation7 + $0x9c] sm:$0xf]
    %v1557 = vld [vmem:[#allocation7 + $0xa0] sm:$0xf]
    %v1558 = vld [vmem:[#allocation7 + $0xa4] sm:$0xf]
    %v1559 = vld [vmem:[#allocation7 + $0xa8] sm:$0xf]
    %v1560 = vld [vmem:[#allocation7 + $0xac] sm:$0xf]
    %v1561 = vld [vmem:[#allocation7 + $0xb0] sm:$0xf]
    %v1562 = vld [vmem:[#allocation7 + $0xb4] sm:$0xf]
    %v1563 = vld [vmem:[#allocation7 + $0xb8] sm:$0xf]
    %v1564 = vld [vmem:[#allocation7 + $0xbc] sm:$0xf]
    %v1565 = vld [vmem:[#allocation7 + $0xc0] sm:$0xf]
    %v1566 = vld [vmem:[#allocation7 + $0xc4] sm:$0xf]
    %v1567 = vld [vmem:[#allocation7 + $0xc8] sm:$0xf]
    %v1568 = vld [vmem:[#allocation7 + $0xcc] sm:$0xf]
    %v1569 = vld [vmem:[#allocation7 + $0xd0] sm:$0xf]
    %v1570 = vld [vmem:[#allocation7 + $0xd4] sm:$0xf]
    %v1571 = vld [vmem:[#allocation7 + $0xd8] sm:$0xf]
    %v1572 = vld [vmem:[#allocation7 + $0xdc] sm:$0xf]
    %v1573 = vld [vmem:[#allocation7 + $0xe0] sm:$0xf]
    %v1574 = vld [vmem:[#allocation7 + $0xe4] sm:$0xf]
    %v1575 = vld [vmem:[#allocation7 + $0xe8] sm:$0xf]
    %v1576 = vld [vmem:[#allocation7 + $0xec] sm:$0xf]
    %v1577 = vld [vmem:[#allocation7 + $0xf0] sm:$0xf]
    %v1578 = vld [vmem:[#allocation7 + $0xf4] sm:$0xf]
    %v1579 = vld [vmem:[#allocation7 + $0xf8] sm:$0xf]
    %v1580 = vld [vmem:[#allocation7 + $0xfc] sm:$0xf]
    %v1581 = vld [vmem:[%s14] sm:$0x1]
    %v1583 = vlaneseq
    %v1584 = vshrl.u32 %v1583, 7
    %v1585 = vsub.s32 0, %v1584
    %v1586 = vrot.slane %v1581, %v1585
    %v1652 = vunpack.c.l.b16 %v1517
    %v1653 = vunpack.c.l.b16 %v1518
    %v1654 = vunpack.c.l.b16 %v1519
    %v1655 = vunpack.c.l.b16 %v1520
    %v1656 = vunpack.c.l.b16 %v1521
    %v1657 = vunpack.c.l.b16 %v1522
    %v1658 = vunpack.c.l.b16 %v1523
    %v1659 = vunpack.c.l.b16 %v1524
    %v1660 = vunpack.c.l.b16 %v1525
    %v1661 = vunpack.c.l.b16 %v1526
    %v1662 = vunpack.c.l.b16 %v1527
    %v1663 = vunpack.c.l.b16 %v1528
    %v1664 = vunpack.c.l.b16 %v1529
    %v1665 = vunpack.c.l.b16 %v1530
    %v1666 = vunpack.c.l.b16 %v1531
    %v1667 = vunpack.c.l.b16 %v1532
    %v1668 = vunpack.c.l.b16 %v1533
    %v1669 = vunpack.c.l.b16 %v1534
    %v1670 = vunpack.c.l.b16 %v1535
    %v1671 = vunpack.c.l.b16 %v1536
    %v1672 = vunpack.c.l.b16 %v1537
    %v1673 = vunpack.c.l.b16 %v1538
    %v1674 = vunpack.c.l.b16 %v1539
    %v1675 = vunpack.c.l.b16 %v1540
    %v1676 = vunpack.c.l.b16 %v1541
    %v1677 = vunpack.c.l.b16 %v1542
    %v1678 = vunpack.c.l.b16 %v1543
    %v1679 = vunpack.c.l.b16 %v1544
    %v1680 = vunpack.c.l.b16 %v1545
    %v1681 = vunpack.c.l.b16 %v1546
    %v1682 = vunpack.c.l.b16 %v1547
    %v1683 = vunpack.c.l.b16 %v1548
    %v1684 = vunpack.c.l.b16 %v1549
    %v1685 = vunpack.c.l.b16 %v1550
    %v1686 = vunpack.c.l.b16 %v1551
    %v1687 = vunpack.c.l.b16 %v1552
    %v1688 = vunpack.c.l.b16 %v1553
    %v1689 = vunpack.c.l.b16 %v1554
    %v1690 = vunpack.c.l.b16 %v1555
    %v1691 = vunpack.c.l.b16 %v1556
    %v1692 = vunpack.c.l.b16 %v1557
    %v1693 = vunpack.c.l.b16 %v1558
    %v1694 = vunpack.c.l.b16 %v1559
    %v1695 = vunpack.c.l.b16 %v1560
    %v1696 = vunpack.c.l.b16 %v1561
    %v1697 = vunpack.c.l.b16 %v1562
    %v1698 = vunpack.c.l.b16 %v1563
    %v1699 = vunpack.c.l.b16 %v1564
    %v1700 = vunpack.c.l.b16 %v1565
    %v1701 = vunpack.c.l.b16 %v1566
    %v1702 = vunpack.c.l.b16 %v1567
    %v1703 = vunpack.c.l.b16 %v1568
    %v1704 = vunpack.c.l.b16 %v1569
    %v1705 = vunpack.c.l.b16 %v1570
    %v1706 = vunpack.c.l.b16 %v1571
    %v1707 = vunpack.c.l.b16 %v1572
    %v1708 = vunpack.c.l.b16 %v1573
    %v1709 = vunpack.c.l.b16 %v1574
    %v1710 = vunpack.c.l.b16 %v1575
    %v1711 = vunpack.c.l.b16 %v1576
    %v1712 = vunpack.c.l.b16 %v1577
    %v1713 = vunpack.c.l.b16 %v1578
    %v1714 = vunpack.c.l.b16 %v1579
    %v1715 = vunpack.c.l.b16 %v1580
    %v1716 = vpack.c.b16 %v1653, %v1652
    %v1717 = vpack.c.b16 %v1655, %v1654
    %v1718 = vpack.c.b16 %v1657, %v1656
    %v1719 = vpack.c.b16 %v1659, %v1658
    %v1720 = vpack.c.b16 %v1661, %v1660
    %v1721 = vpack.c.b16 %v1663, %v1662
    %v1722 = vpack.c.b16 %v1665, %v1664
    %v1723 = vpack.c.b16 %v1667, %v1666
    %v1724 = vpack.c.b16 %v1669, %v1668
    %v1725 = vpack.c.b16 %v1671, %v1670
    %v1726 = vpack.c.b16 %v1673, %v1672
    %v1727 = vpack.c.b16 %v1675, %v1674
    %v1728 = vpack.c.b16 %v1677, %v1676
    %v1729 = vpack.c.b16 %v1679, %v1678
    %v1730 = vpack.c.b16 %v1681, %v1680
    %v1731 = vpack.c.b16 %v1683, %v1682
    %v1732 = vpack.c.b16 %v1685, %v1684
    %v1733 = vpack.c.b16 %v1687, %v1686
    %v1734 = vpack.c.b16 %v1689, %v1688
    %v1735 = vpack.c.b16 %v1691, %v1690
    %v1736 = vpack.c.b16 %v1693, %v1692
    %v1737 = vpack.c.b16 %v1695, %v1694
    %v1738 = vpack.c.b16 %v1697, %v1696
    %v1739 = vpack.c.b16 %v1699, %v1698
    %v1740 = vpack.c.b16 %v1701, %v1700
    %v1741 = vpack.c.b16 %v1703, %v1702
    %v1742 = vpack.c.b16 %v1705, %v1704
    %v1743 = vpack.c.b16 %v1707, %v1706
    %v1744 = vpack.c.b16 %v1709, %v1708
    %v1745 = vpack.c.b16 %v1711, %v1710
    %v1746 = vpack.c.b16 %v1713, %v1712
    %v1747 = vpack.c.b16 %v1715, %v1714
    %1780 = vmatprep.subr.bf16.mxu0 0
    %1781 = vmatpush1.bf16.msra.mxu0 %v1716
    %1782 = vmatprep.subr.bf16.mxu0 0
    %1783 = vmatpush1.bf16.msra.mxu0 %v1717
    %1784 = vmatprep.subr.bf16.mxu0 0
    %1785 = vmatpush1.bf16.msra.mxu0 %v1718
    %1786 = vmatprep.subr.bf16.mxu0 0
    %1787 = vmatpush1.bf16.msra.mxu0 %v1719
    %1788 = vmatprep.subr.bf16.mxu0 0
    %1789 = vmatpush1.bf16.msra.mxu0 %v1720
    %1790 = vmatprep.subr.bf16.mxu0 0
    %1791 = vmatpush1.bf16.msra.mxu0 %v1721
    %1792 = vmatprep.subr.bf16.mxu0 0
    %1793 = vmatpush1.bf16.msra.mxu0 %v1722
    %1794 = vmatprep.subr.bf16.mxu0 0
    %1795 = vmatpush1.bf16.msra.mxu0 %v1723
    %1796 = vmatprep.subr.bf16.mxu0 0
    %1797 = vmatpush1.bf16.msra.mxu0 %v1724
    %1798 = vmatprep.subr.bf16.mxu0 0
    %1799 = vmatpush1.bf16.msra.mxu0 %v1725
    %1800 = vmatprep.subr.bf16.mxu0 0
    %1801 = vmatpush1.bf16.msra.mxu0 %v1726
    %1802 = vmatprep.subr.bf16.mxu0 0
    %1803 = vmatpush1.bf16.msra.mxu0 %v1727
    %1804 = vmatprep.subr.bf16.mxu0 0
    %1805 = vmatpush1.bf16.msra.mxu0 %v1728
    %1806 = vmatprep.subr.bf16.mxu0 0
    %1807 = vmatpush1.bf16.msra.mxu0 %v1729
    %1808 = vmatprep.subr.bf16.mxu0 0
    %1809 = vmatpush1.bf16.msra.mxu0 %v1730
    %1810 = vmatprep.subr.bf16.mxu0 0
    %1811 = vmatpush1.bf16.msra.mxu0 %v1731
    %1812 = vmatprep.mubr.bf16.mxu0 %v1510
    %1813 = vmatmul.mubr.bf16.gmra.mrb[0].mxu0 %v1509
    %v1814 = vpop.f32.mrb[0].mxu0
    %v1815 = vadd.f32 %v1586, %v1814
    %v1816 = vpop.f32.mrb[0].mxu0
    %v1817 = vpop.f32.mrb[0].mxu0
    %v1818 = vadd.f32 %v1586, %v1817
    %v1819 = vpop.f32.mrb[0].mxu0
    %1820 = vmatprep.mubr.bf16.mxu0 %v1514
    %1821 = vmatmul.mubr.bf16.gmra.mrb[0].mxu0 %v1513
    %v1822 = vpop.f32.mrb[0].mxu0
    %v1823 = vadd.f32 %v1586, %v1822
    %v1824 = vpop.f32.mrb[0].mxu0
    %v1825 = vpop.f32.mrb[0].mxu0
    %v1826 = vadd.f32 %v1586, %v1825
    %v1827 = vpop.f32.mrb[0].mxu0
    %1828 = vdwg.mxu0
    %1829 = vmatprep.subr.bf16.mxu0 0
    %1830 = vmatpush1.bf16.msra.mxu0 %v1732
    %1831 = vmatprep.subr.bf16.mxu0 0
    %1832 = vmatpush1.bf16.msra.mxu0 %v1733
    %1833 = vmatprep.subr.bf16.mxu0 0
    %1834 = vmatpush1.bf16.msra.mxu0 %v1734
    %1835 = vmatprep.subr.bf16.mxu0 0
    %1836 = vmatpush1.bf16.msra.mxu0 %v1735
    %1837 = vmatprep.subr.bf16.mxu0 0
    %1838 = vmatpush1.bf16.msra.mxu0 %v1736
    %1839 = vmatprep.subr.bf16.mxu0 0
    %1840 = vmatpush1.bf16.msra.mxu0 %v1737
    %1841 = vmatprep.subr.bf16.mxu0 0
    %1842 = vmatpush1.bf16.msra.mxu0 %v1738
    %1843 = vmatprep.subr.bf16.mxu0 0
    %1844 = vmatpush1.bf16.msra.mxu0 %v1739
    %1845 = vmatprep.subr.bf16.mxu0 0
    %1846 = vmatpush1.bf16.msra.mxu0 %v1740
    %1847 = vmatprep.subr.bf16.mxu0 0
    %1848 = vmatpush1.bf16.msra.mxu0 %v1741
    %1849 = vmatprep.subr.bf16.mxu0 0
    %1850 = vmatpush1.bf16.msra.mxu0 %v1742
    %1851 = vmatprep.subr.bf16.mxu0 0
    %1852 = vmatpush1.bf16.msra.mxu0 %v1743
    %1853 = vmatprep.subr.bf16.mxu0 0
    %1854 = vmatpush1.bf16.msra.mxu0 %v1744
    %1855 = vmatprep.subr.bf16.mxu0 0
    %1856 = vmatpush1.bf16.msra.mxu0 %v1745
    %1857 = vmatprep.subr.bf16.mxu0 0
    %1858 = vmatpush1.bf16.msra.mxu0 %v1746
    %1859 = vmatprep.subr.bf16.mxu0 0
    %1860 = vmatpush1.bf16.msra.mxu0 %v1747
    %1861 = vmatprep.mubr.bf16.mxu0 %v1512
    %1862 = vmatmul.mubr.bf16.gmra.mrb[0].mxu0 %v1511
    %v1863 = vpop.f32.mrb[0].mxu0
    %v1864 = vadd.f32 %v1815, %v1863
    %v1865 = vpop.f32.mrb[0].mxu0
    %v1866 = vpop.f32.mrb[0].mxu0
    %v1867 = vadd.f32 %v1818, %v1866
    %v1868 = vpop.f32.mrb[0].mxu0
    %1869 = vmatprep.mubr.bf16.mxu0 %v1516
    %1870 = vmatmul.mubr.bf16.gmra.mrb[0].mxu0 %v1515
    %v1871 = vpop.f32.mrb[0].mxu0
    %v1872 = vadd.f32 %v1823, %v1871
    %v1873 = vpop.f32.mrb[0].mxu0
    %v1874 = vpop.f32.mrb[0].mxu0
    %v1875 = vadd.f32 %v1826, %v1874
    %v1876 = vpop.f32.mrb[0].mxu0
    %1877 = vdwg.mxu0
    %v1878 = vadd.f32 %v1864, %v1039
    %v1879 = vadd.f32 %v1867, %v1040
    %v1880 = vadd.f32 %v1872, %v1041
    %v1881 = vadd.f32 %v1875, %v1042
    %v1882 = vld [vmem:[%s15] sm:$0x1]
    %v1883 = vld [vmem:[%s16] sm:$0x1]
    %1884 = vadd.xlane.f32.xlu0 %v1878
    %v1885 = vpop.xlane.xlu0 %1884
    %1886 = vadd.xlane.f32.xlu0 %v1879
    %v1887 = vpop.xlane.xlu0 %1886
    %1888 = vadd.xlane.f32.xlu0 %v1880
    %v1889 = vpop.xlane.xlu0 %1888
    %1890 = vadd.xlane.f32.xlu0 %v1881
    %v1891 = vpop.xlane.xlu0 %1890
    %v1892 = vmul.f32 %v1885, %v121
    %v1893 = vmul.f32 %v1887, %v121
    %v1894 = vmul.f32 %v1889, %v121
    %v1895 = vmul.f32 %v1891, %v121
    %v1896 = vsub.f32 %v1878, %v1892
    %v1897 = vsub.f32 %v1879, %v1893
    %v1898 = vsub.f32 %v1880, %v1894
    %v1899 = vsub.f32 %v1881, %v1895
    %v1900 = vmul.f32 %v1896, %v1896
    %v1901 = vmul.f32 %v1897, %v1897
    %v1902 = vmul.f32 %v1898, %v1898
    %v1903 = vmul.f32 %v1899, %v1899
    %1904 = vadd.xlane.f32.xlu0 %v1900
    %v1905 = vpop.xlane.xlu0 %1904
    %1906 = vadd.xlane.f32.xlu0 %v1901
    %v1907 = vpop.xlane.xlu0 %1906
    %1908 = vadd.xlane.f32.xlu0 %v1902
    %v1909 = vpop.xlane.xlu0 %1908
    %1910 = vadd.xlane.f32.xlu0 %v1903
    %v1911 = vpop.xlane.xlu0 %1910
    %v1912 = vmul.f32 %v1905, %v121
    %v1913 = vmul.f32 %v1907, %v121
    %v1914 = vmul.f32 %v1909, %v121
    %v1915 = vmul.f32 %v1911, %v121
    %v1916 = vadd.f32 %v1912, 1e-05
    %v1917 = vadd.f32 %v1913, 1e-05
    %v1918 = vadd.f32 %v1914, 1e-05
    %v1919 = vadd.f32 %v1915, 1e-05
    %v1920 = vrsqrt.pop %v1916
    %v1921 = vrsqrt.pop %v1917
    %v1922 = vrsqrt.pop %v1918
    %v1923 = vrsqrt.pop %v1919
    %v1924 = vmul.f32 %v1896, %v1920
    %v1925 = vmul.f32 %v1897, %v1921
    %v1926 = vmul.f32 %v1898, %v1922
    %v1927 = vmul.f32 %v1899, %v1923
    %v1929 = vlaneseq
    %v1930 = vshrl.u32 %v1929, 7
    %v1931 = vsub.s32 0, %v1930
    %v1932 = vrot.slane %v1882, %v1931
    %v1934 = vmul.f32 %v1924, %v1932
    %v1935 = vmul.f32 %v1925, %v1932
    %v1936 = vmul.f32 %v1926, %v1932
    %v1937 = vmul.f32 %v1927, %v1932
    %v1939 = vlaneseq
    %v1940 = vshrl.u32 %v1939, 7
    %v1941 = vsub.s32 0, %v1940
    %v1942 = vrot.slane %v1883, %v1941
    %v1944 = vadd.f32 %v1934, %v1942
    %v1945 = vadd.f32 %v1935, %v1942
    %v1946 = vadd.f32 %v1936, %v1942
    %v1947 = vadd.f32 %v1937, %v1942
    %v1948 = vpack.c.bf16 %v1945, %v1944
    %v1949 = vpack.c.bf16 %v1947, %v1946
    %s1950 = scalar_lea.vmem [#allocation6], 192
    %v1951 = vld [vmem:[%s1950] sm:$0xff]
    %v1952 = vld [vmem:[%s1950 + $0x8] sm:$0xf]
    %v1953 = vld [vmem:[%s1950 + $0xc] sm:$0xff]
    %v1954 = vld [vmem:[%s1950 + $0x14] sm:$0xf]
    %v1955 = vld [vmem:[%s1950 + $0x18] sm:$0xff]
    %v1956 = vld [vmem:[%s1950 + $0x20] sm:$0xf]
    %v1957 = vld [vmem:[%s1950 + $0x24] sm:$0xff]
    %v1958 = vld [vmem:[%s1950 + $0x2c] sm:$0xf]
    %v1959 = vld [vmem:[%s1950 + $0x30] sm:$0xff]
    %v1960 = vld [vmem:[%s1950 + $0x38] sm:$0xf]
    %v1961 = vld [vmem:[%s1950 + $0x3c] sm:$0xff]
    %v1962 = vld [vmem:[%s1950 + $0x44] sm:$0xf]
    %v1963 = vld [vmem:[%s1950 + $0x48] sm:$0xff]
    %v1964 = vld [vmem:[%s1950 + $0x50] sm:$0xf]
    %v1965 = vld [vmem:[%s1950 + $0x54] sm:$0xff]
    %v1966 = vld [vmem:[%s1950 + $0x5c] sm:$0xf]
    %v1967 = vld [vmem:[%s1950 + $0x60] sm:$0xff]
    %v1968 = vld [vmem:[%s1950 + $0x68] sm:$0xf]
    %v1969 = vld [vmem:[%s1950 + $0x6c] sm:$0xff]
    %v1970 = vld [vmem:[%s1950 + $0x74] sm:$0xf]
    %v1971 = vld [vmem:[%s1950 + $0x78] sm:$0xff]
    %v1972 = vld [vmem:[%s1950 + $0x80] sm:$0xf]
    %v1973 = vld [vmem:[%s1950 + $0x84] sm:$0xff]
    %v1974 = vld [vmem:[%s1950 + $0x8c] sm:$0xf]
    %v1975 = vld [vmem:[%s1950 + $0x90] sm:$0xff]
    %v1976 = vld [vmem:[%s1950 + $0x98] sm:$0xf]
    %v1977 = vld [vmem:[%s1950 + $0x9c] sm:$0xff]
    %v1978 = vld [vmem:[%s1950 + $0xa4] sm:$0xf]
    %v1979 = vld [vmem:[%s1950 + $0xa8] sm:$0xff]
    %v1980 = vld [vmem:[%s1950 + $0xb0] sm:$0xf]
    %v1981 = vld [vmem:[%s1950 + $0xb4] sm:$0xff]
    %v1982 = vld [vmem:[%s1950 + $0xbc] sm:$0xf]
    %s1983 = scalar_lea.vmem %s6, 3
    %v1984 = vld [vmem:[%s1983] sm:$0x7]
    %v1986 = vlaneseq
    %v1987 = vshrl.u32 %v1986, 7
    %v1988 = vsub.s32 0, %v1987
    %v1989 = vrot.slane %v1984, %v1988
    %v1990 = vlaneseq
    %v1991 = vshrl.u32 %v1990, 7
    %v1992 = vsub.s32 1, %v1991
    %v1993 = vrot.slane %v1984, %v1992
    %v1994 = vlaneseq
    %v1995 = vshrl.u32 %v1994, 7
    %v1996 = vsub.s32 2, %v1995
    %v1997 = vrot.slane %v1984, %v1996
    %v2033 = vunpack.c.l.b16 %v1951
    %v2034 = vunpack.c.h.b16 %v1951
    %v2035 = vunpack.c.l.b16 %v1952
    %v2036 = vunpack.c.l.b16 %v1953
    %v2037 = vunpack.c.h.b16 %v1953
    %v2038 = vunpack.c.l.b16 %v1954
    %v2039 = vunpack.c.l.b16 %v1955
    %v2040 = vunpack.c.h.b16 %v1955
    %v2041 = vunpack.c.l.b16 %v1956
    %v2042 = vunpack.c.l.b16 %v1957
    %v2043 = vunpack.c.h.b16 %v1957
    %v2044 = vunpack.c.l.b16 %v1958
    %v2045 = vunpack.c.l.b16 %v1959
    %v2046 = vunpack.c.h.b16 %v1959
    %v2047 = vunpack.c.l.b16 %v1960
    %v2048 = vunpack.c.l.b16 %v1961
    %v2049 = vunpack.c.h.b16 %v1961
    %v2050 = vunpack.c.l.b16 %v1962
    %v2051 = vunpack.c.l.b16 %v1963
    %v2052 = vunpack.c.h.b16 %v1963
    %v2053 = vunpack.c.l.b16 %v1964
    %v2054 = vunpack.c.l.b16 %v1965
    %v2055 = vunpack.c.h.b16 %v1965
    %v2056 = vunpack.c.l.b16 %v1966
    %v2057 = vunpack.c.l.b16 %v1967
    %v2058 = vunpack.c.h.b16 %v1967
    %v2059 = vunpack.c.l.b16 %v1968
    %v2060 = vunpack.c.l.b16 %v1969
    %v2061 = vunpack.c.h.b16 %v1969
    %v2062 = vunpack.c.l.b16 %v1970
    %v2063 = vunpack.c.l.b16 %v1971
    %v2064 = vunpack.c.h.b16 %v1971
    %v2065 = vunpack.c.l.b16 %v1972
    %v2066 = vunpack.c.l.b16 %v1973
    %v2067 = vunpack.c.h.b16 %v1973
    %v2068 = vunpack.c.l.b16 %v1974
    %v2069 = vunpack.c.l.b16 %v1975
    %v2070 = vunpack.c.h.b16 %v1975
    %v2071 = vunpack.c.l.b16 %v1976
    %v2072 = vunpack.c.l.b16 %v1977
    %v2073 = vunpack.c.h.b16 %v1977
    %v2074 = vunpack.c.l.b16 %v1978
    %v2075 = vunpack.c.l.b16 %v1979
    %v2076 = vunpack.c.h.b16 %v1979
    %v2077 = vunpack.c.l.b16 %v1980
    %v2078 = vunpack.c.l.b16 %v1981
    %v2079 = vunpack.c.h.b16 %v1981
    %v2080 = vunpack.c.l.b16 %v1982
    %v2081 = vpack.c.b16 %v2036, %v2033
    %v2082 = vpack.c.b16 %v2037, %v2034
    %v2083 = vpack.c.b16 %v2038, %v2035
    %v2084 = vpack.c.b16 %v2042, %v2039
    %v2085 = vpack.c.b16 %v2043, %v2040
    %v2086 = vpack.c.b16 %v2044, %v2041
    %v2087 = vpack.c.b16 %v2048, %v2045
    %v2088 = vpack.c.b16 %v2049, %v2046
    %v2089 = vpack.c.b16 %v2050, %v2047
    %v2090 = vpack.c.b16 %v2054, %v2051
    %v2091 = vpack.c.b16 %v2055, %v2052
    %v2092 = vpack.c.b16 %v2056, %v2053
    %v2093 = vpack.c.b16 %v2060, %v2057
    %v2094 = vpack.c.b16 %v2061, %v2058
    %v2095 = vpack.c.b16 %v2062, %v2059
    %v2096 = vpack.c.b16 %v2066, %v2063
    %v2097 = vpack.c.b16 %v2067, %v2064
    %v2098 = vpack.c.b16 %v2068, %v2065
    %v2099 = vpack.c.b16 %v2072, %v2069
    %v2100 = vpack.c.b16 %v2073, %v2070
    %v2101 = vpack.c.b16 %v2074, %v2071
    %v2102 = vpack.c.b16 %v2078, %v2075
    %v2103 = vpack.c.b16 %v2079, %v2076
    %v2104 = vpack.c.b16 %v2080, %v2077
    %2129 = vmatprep.subr.bf16.mxu0 %v2082
    %2130 = vmatpush1.bf16.msra.mxu0 %v2081
    %2131 = vmatprep.subr.bf16.mxu0 %v2085
    %2132 = vmatpush1.bf16.msra.mxu0 %v2084
    %2133 = vmatprep.subr.bf16.mxu0 %v2088
    %2134 = vmatpush1.bf16.msra.mxu0 %v2087
    %2135 = vmatprep.subr.bf16.mxu0 %v2091
    %2136 = vmatpush1.bf16.msra.mxu0 %v2090
    %2137 = vmatprep.subr.bf16.mxu0 %v2094
    %2138 = vmatpush1.bf16.msra.mxu0 %v2093
    %2139 = vmatprep.subr.bf16.mxu0 %v2097
    %2140 = vmatpush1.bf16.msra.mxu0 %v2096
    %2141 = vmatprep.subr.bf16.mxu0 %v2100
    %2142 = vmatpush1.bf16.msra.mxu0 %v2099
    %2143 = vmatprep.subr.bf16.mxu0 %v2103
    %2144 = vmatpush1.bf16.msra.mxu0 %v2102
    %2145 = vmatprep.subr.bf16.mxu0 0
    %2146 = vmatpush1.bf16.msra.mxu0 0
    %2147 = vmatprep.subr.bf16.mxu0 0
    %2148 = vmatpush1.bf16.msra.mxu0 0
    %2149 = vmatprep.subr.bf16.mxu0 0
    %2150 = vmatpush1.bf16.msra.mxu0 0
    %2151 = vmatprep.subr.bf16.mxu0 0
    %2152 = vmatpush1.bf16.msra.mxu0 0
    %2153 = vmatprep.subr.bf16.mxu0 0
    %2154 = vmatpush1.bf16.msra.mxu0 0
    %2155 = vmatprep.subr.bf16.mxu0 0
    %2156 = vmatpush1.bf16.msra.mxu0 0
    %2157 = vmatprep.subr.bf16.mxu0 0
    %2158 = vmatpush1.bf16.msra.mxu0 0
    %2159 = vmatprep.subr.bf16.mxu0 0
    %2160 = vmatpush1.bf16.msra.mxu0 0
    %2161 = vmatprep.mubr.bf16.mxu0 0
    %2162 = vmatmul.mubr.bf16.gmra.mrb[0].mxu0 %v1948
    %v2163 = vpop.f32.mrb[0].mxu0
    %v2164 = vadd.f32 %v1989, %v2163
    %v2165 = vpop.f32.mrb[0].mxu0
    %v2166 = vadd.f32 %v1993, %v2165
    %v2167 = vpop.f32.mrb[0].mxu0
    %v2168 = vadd.f32 %v1989, %v2167
    %v2169 = vpop.f32.mrb[0].mxu0
    %v2170 = vadd.f32 %v1993, %v2169
    %2171 = vmatprep.mubr.bf16.mxu0 0
    %2172 = vmatmul.mubr.bf16.gmra.mrb[0].mxu0 %v1949
    %v2173 = vpop.f32.mrb[0].mxu0
    %v2174 = vadd.f32 %v1989, %v2173
    %v2175 = vpop.f32.mrb[0].mxu0
    %v2176 = vadd.f32 %v1993, %v2175
    %v2177 = vpop.f32.mrb[0].mxu0
    %v2178 = vadd.f32 %v1989, %v2177
    %v2179 = vpop.f32.mrb[0].mxu0
    %v2180 = vadd.f32 %v1993, %v2179
    %2181 = vdwg.mxu0
    %2182 = vmatprep.subr.bf16.mxu0 0
    %2183 = vmatpush1.bf16.msra.mxu0 %v2083
    %2184 = vmatprep.subr.bf16.mxu0 0
    %2185 = vmatpush1.bf16.msra.mxu0 %v2086
    %2186 = vmatprep.subr.bf16.mxu0 0
    %2187 = vmatpush1.bf16.msra.mxu0 %v2089
    %2188 = vmatprep.subr.bf16.mxu0 0
    %2189 = vmatpush1.bf16.msra.mxu0 %v2092
    %2190 = vmatprep.subr.bf16.mxu0 0
    %2191 = vmatpush1.bf16.msra.mxu0 %v2095
    %2192 = vmatprep.subr.bf16.mxu0 0
    %2193 = vmatpush1.bf16.msra.mxu0 %v2098
    %2194 = vmatprep.subr.bf16.mxu0 0
    %2195 = vmatpush1.bf16.msra.mxu0 %v2101
    %2196 = vmatprep.subr.bf16.mxu0 0
    %2197 = vmatpush1.bf16.msra.mxu0 %v2104
    %2198 = vmatprep.subr.bf16.mxu0 0
    %2199 = vmatpush1.bf16.msra.mxu0 0
    %2200 = vmatprep.subr.bf16.mxu0 0
    %2201 = vmatpush1.bf16.msra.mxu0 0
    %2202 = vmatprep.subr.bf16.mxu0 0
    %2203 = vmatpush1.bf16.msra.mxu0 0
    %2204 = vmatprep.subr.bf16.mxu0 0
    %2205 = vmatpush1.bf16.msra.mxu0 0
    %2206 = vmatprep.subr.bf16.mxu0 0
    %2207 = vmatpush1.bf16.msra.mxu0 0
    %2208 = vmatprep.subr.bf16.mxu0 0
    %2209 = vmatpush1.bf16.msra.mxu0 0
    %2210 = vmatprep.subr.bf16.mxu0 0
    %2211 = vmatpush1.bf16.msra.mxu0 0
    %2212 = vmatprep.subr.bf16.mxu0 0
    %2213 = vmatpush1.bf16.msra.mxu0 0
    %2214 = vmatprep.mubr.bf16.mxu0 0
    %2215 = vmatmul.mubr.bf16.gmra.mrb[0].mxu0 %v1948
    %v2216 = vpop.f32.mrb[0].mxu0
    %v2217 = vadd.f32 %v1997, %v2216
    %v2218 = vpop.f32.mrb[0].mxu0
    %v2219 = vpop.f32.mrb[0].mxu0
    %v2220 = vadd.f32 %v1997, %v2219
    %v2221 = vpop.f32.mrb[0].mxu0
    %2222 = vmatprep.mubr.bf16.mxu0 0
    %2223 = vmatmul.mubr.bf16.gmra.mrb[0].mxu0 %v1949
    %v2224 = vpop.f32.mrb[0].mxu0
    %v2225 = vadd.f32 %v1997, %v2224
    %v2226 = vpop.f32.mrb[0].mxu0
    %v2227 = vpop.f32.mrb[0].mxu0
    %v2228 = vadd.f32 %v1997, %v2227
    %v2229 = vpop.f32.mrb[0].mxu0
    %2230 = vdwg.mxu0
    %v2231 = vpack.c.bf16 %v2168, %v2164
    %v2232 = vpack.c.bf16 %v2178, %v2174
    %v2233 = vpack.c.bf16 %v2170, %v2166
    %v2234 = vpack.c.bf16 %v2180, %v2176
    %v2236 = vsel %vm467, %v2231, 0
    %v2239 = vsel %vm467, %v2232, 0
    %v2242 = vsel %vm467, %v2233, 0
    %v2245 = vsel %vm467, %v2234, 0
    %2247 = vmatprep.subr.bf16.mxu0 0
    %2248 = vmatpush1.bf16.xpose.msra.mxu0 %v2242
    %2249 = vmatprep.subr.bf16.mxu0 0
    %2250 = vmatpush1.bf16.xpose.msra.mxu0 %v2245
    %2251 = vmatprep.subr.bf16.mxu0 0
    %2252 = vmatpush1.bf16.xpose.msra.mxu0 0
    %2253 = vmatprep.subr.bf16.mxu0 0
    %2254 = vmatpush1.bf16.xpose.msra.mxu0 0
    %2255 = vmatprep.subr.bf16.mxu0 0
    %2256 = vmatpush1.bf16.xpose.msra.mxu0 0
    %2257 = vmatprep.subr.bf16.mxu0 0
    %2258 = vmatpush1.bf16.xpose.msra.mxu0 0
    %2259 = vmatprep.subr.bf16.mxu0 0
    %2260 = vmatpush1.bf16.xpose.msra.mxu0 0
    %2261 = vmatprep.subr.bf16.mxu0 0
    %2262 = vmatpush1.bf16.xpose.msra.mxu0 0
    %2263 = vmatprep.subr.bf16.mxu0 0
    %2264 = vmatpush1.bf16.xpose.msra.mxu0 0
    %2265 = vmatprep.subr.bf16.mxu0 0
    %2266 = vmatpush1.bf16.xpose.msra.mxu0 0
    %2267 = vmatprep.subr.bf16.mxu0 0
    %2268 = vmatpush1.bf16.xpose.msra.mxu0 0
    %2269 = vmatprep.subr.bf16.mxu0 0
    %2270 = vmatpush1.bf16.xpose.msra.mxu0 0
    %2271 = vmatprep.subr.bf16.mxu0 0
    %2272 = vmatpush1.bf16.xpose.msra.mxu0 0
    %2273 = vmatprep.subr.bf16.mxu0 0
    %2274 = vmatpush1.bf16.xpose.msra.mxu0 0
    %2275 = vmatprep.subr.bf16.mxu0 0
    %2276 = vmatpush1.bf16.xpose.msra.mxu0 0
    %2277 = vmatprep.subr.bf16.mxu0 0
    %2278 = vmatpush1.bf16.xpose.msra.mxu0 0
    %2279 = vmatprep.mubr.bf16.mxu0 0
    %2280 = vmatmul.mubr.bf16.gmra.mrb[0].mxu0 %v2236
    %v2281 = vpop.f32.mrb[0].mxu0
    %v2282 = vadd.f32 0.0, %v2281
    %v2283 = vpop.f32.mrb[0].mxu0
    %v2284 = vpop.f32.mrb[0].mxu0
    %v2285 = vadd.f32 0.0, %v2284
    %v2286 = vpop.f32.mrb[0].mxu0
    %2287 = vmatprep.mubr.bf16.mxu0 0
    %2288 = vmatmul.mubr.bf16.gmra.mrb[0].mxu0 %v2239
    %v2289 = vpop.f32.mrb[0].mxu0
    %v2290 = vadd.f32 0.0, %v2289
    %v2291 = vpop.f32.mrb[0].mxu0
    %v2292 = vpop.f32.mrb[0].mxu0
    %v2293 = vadd.f32 0.0, %v2292
    %v2294 = vpop.f32.mrb[0].mxu0
    %2295 = vdwg.mxu0
    %v2296 = vmul.f32 %v2282, 0.125
    %v2297 = vmul.f32 %v2285, 0.125
    %v2298 = vmul.f32 %v2290, 0.125
    %v2299 = vmul.f32 %v2293, 0.125
    %v2300 = vadd.f32 %v2296, %v178
    %v2301 = vadd.f32 %v2297, %v179
    %v2302 = vadd.f32 %v2298, %v180
    %v2303 = vadd.f32 %v2299, %v181
    %v2304 = vsel %vm537, %v2300, -inf
    %2305 = vmax.xlane.f32.xlu0 %v2304
    %v2306 = vpop.xlane.xlu0 %2305
    %v2307 = vsel %vm537, %v2301, -inf
    %2308 = vmax.xlane.f32.xlu0 %v2307
    %v2309 = vpop.xlane.xlu0 %2308
    %v2310 = vsel %vm537, %v2302, -inf
    %2311 = vmax.xlane.f32.xlu0 %v2310
    %v2312 = vpop.xlane.xlu0 %2311
    %v2313 = vsel %vm537, %v2303, -inf
    %2314 = vmax.xlane.f32.xlu0 %v2313
    %v2315 = vpop.xlane.xlu0 %2314
    %v2316 = vsub.f32 %v2300, %v2306
    %v2317 = vsub.f32 %v2301, %v2309
    %v2318 = vsub.f32 %v2302, %v2312
    %v2319 = vsub.f32 %v2303, %v2315
    %v2320 = vmul.f32 %v2316, 1.442695
    %v2321 = vpow.pop %v2320
    %v2322 = vmul.f32 %v2317, 1.442695
    %v2323 = vpow.pop %v2322
    %v2324 = vmul.f32 %v2318, 1.442695
    %v2325 = vpow.pop %v2324
    %v2326 = vmul.f32 %v2319, 1.442695
    %v2327 = vpow.pop %v2326
    %v2328 = vsel %vm537, %v2321, 0.0
    %2329 = vadd.xlane.f32.xlu0 %v2328
    %v2330 = vpop.xlane.xlu0 %2329
    %v2331 = vsel %vm537, %v2323, 0.0
    %2332 = vadd.xlane.f32.xlu0 %v2331
    %v2333 = vpop.xlane.xlu0 %2332
    %v2334 = vsel %vm537, %v2325, 0.0
    %2335 = vadd.xlane.f32.xlu0 %v2334
    %v2336 = vpop.xlane.xlu0 %2335
    %v2337 = vsel %vm537, %v2327, 0.0
    %2338 = vadd.xlane.f32.xlu0 %v2337
    %v2339 = vpop.xlane.xlu0 %2338
    %v2340 = vrcp.pop %v2330
    %v2341 = vrcp.pop %v2333
    %v2342 = vrcp.pop %v2336
    %v2343 = vrcp.pop %v2339
    %v2344 = vmul.f32 %v2321, %v2340
    %v2345 = vmul.f32 %v2323, %v2341
    %v2346 = vmul.f32 %v2325, %v2342
    %v2347 = vmul.f32 %v2327, %v2343
    %v2348 = vpack.c.bf16 %v2345, %v2344
    %v2349 = vpack.c.bf16 %v2347, %v2346
    %v2350 = vpack.c.bf16 %v2220, %v2217
    %v2351 = vpack.c.bf16 %v2228, %v2225
    %v2353 = vsel %vm537, %v2348, 0
    %v2356 = vsel %vm537, %v2349, 0
    %2358 = vmatprep.subr.bf16.mxu0 0
    %2359 = vmatpush1.bf16.msra.mxu0 %v2350
    %2360 = vmatprep.subr.bf16.mxu0 0
    %2361 = vmatpush1.bf16.msra.mxu0 %v2351
    %2362 = vmatprep.subr.bf16.mxu0 0
    %2363 = vmatpush1.bf16.msra.mxu0 0
    %2364 = vmatprep.subr.bf16.mxu0 0
    %2365 = vmatpush1.bf16.msra.mxu0 0
    %2366 = vmatprep.subr.bf16.mxu0 0
    %2367 = vmatpush1.bf16.msra.mxu0 0
    %2368 = vmatprep.subr.bf16.mxu0 0
    %2369 = vmatpush1.bf16.msra.mxu0 0
    %2370 = vmatprep.subr.bf16.mxu0 0
    %2371 = vmatpush1.bf16.msra.mxu0 0
    %2372 = vmatprep.subr.bf16.mxu0 0
    %2373 = vmatpush1.bf16.msra.mxu0 0
    %2374 = vmatprep.subr.bf16.mxu0 0
    %2375 = vmatpush1.bf16.msra.mxu0 0
    %2376 = vmatprep.subr.bf16.mxu0 0
    %2377 = vmatpush1.bf16.msra.mxu0 0
    %2378 = vmatprep.subr.bf16.mxu0 0
    %2379 = vmatpush1.bf16.msra.mxu0 0
    %2380 = vmatprep.subr.bf16.mxu0 0
    %2381 = vmatpush1.bf16.msra.mxu0 0
    %2382 = vmatprep.subr.bf16.mxu0 0
    %2383 = vmatpush1.bf16.msra.mxu0 0
    %2384 = vmatprep.subr.bf16.mxu0 0
    %2385 = vmatpush1.bf16.msra.mxu0 0
    %2386 = vmatprep.subr.bf16.mxu0 0
    %2387 = vmatpush1.bf16.msra.mxu0 0
    %2388 = vmatprep.subr.bf16.mxu0 0
    %2389 = vmatpush1.bf16.msra.mxu0 0
    %2390 = vmatprep.mubr.bf16.mxu0 0
    %2391 = vmatmul.mubr.bf16.gmra.mrb[0].mxu0 %v2353
    %v2392 = vpop.f32.mrb[0].mxu0
    %v2393 = vadd.f32 0.0, %v2392
    %v2394 = vpop.f32.mrb[0].mxu0
    %v2395 = vpop.f32.mrb[0].mxu0
    %v2396 = vadd.f32 0.0, %v2395
    %v2397 = vpop.f32.mrb[0].mxu0
    %2398 = vmatprep.mubr.bf16.mxu0 0
    %2399 = vmatmul.mubr.bf16.gmra.mrb[0].mxu0 %v2356
    %v2400 = vpop.f32.mrb[0].mxu0
    %v2401 = vadd.f32 0.0, %v2400
    %v2402 = vpop.f32.mrb[0].mxu0
    %v2403 = vpop.f32.mrb[0].mxu0
    %v2404 = vadd.f32 0.0, %v2403
    %v2405 = vpop.f32.mrb[0].mxu0
    %2406 = vdwg.mxu0
    %2409 = vrot.lane.b32.xlu0 %v2231, 64
    %v2410 = vpop.permute.xlu0 %2409
    %2411 = vrot.lane.b32.xlu0 %v2232, 64
    %v2412 = vpop.permute.xlu0 %2411
    %2415 = vrot.lane.b32.xlu0 %v2233, 64
    %v2416 = vpop.permute.xlu0 %2415
    %2417 = vrot.lane.b32.xlu0 %v2234, 64
    %v2418 = vpop.permute.xlu0 %2417
    %v2420 = vsel %vm467, %v2410, 0
    %v2423 = vsel %vm467, %v2412, 0
    %v2426 = vsel %vm467, %v2416, 0
    %v2429 = vsel %vm467, %v2418, 0
    %2431 = vmatprep.subr.bf16.mxu0 0
    %2432 = vmatpush1.bf16.xpose.msra.mxu0 %v2426
    %2433 = vmatprep.subr.bf16.mxu0 0
    %2434 = vmatpush1.bf16.xpose.msra.mxu0 %v2429
    %2435 = vmatprep.subr.bf16.mxu0 0
    %2436 = vmatpush1.bf16.xpose.msra.mxu0 0
    %2437 = vmatprep.subr.bf16.mxu0 0
    %2438 = vmatpush1.bf16.xpose.msra.mxu0 0
    %2439 = vmatprep.subr.bf16.mxu0 0
    %2440 = vmatpush1.bf16.xpose.msra.mxu0 0
    %2441 = vmatprep.subr.bf16.mxu0 0
    %2442 = vmatpush1.bf16.xpose.msra.mxu0 0
    %2443 = vmatprep.subr.bf16.mxu0 0
    %2444 = vmatpush1.bf16.xpose.msra.mxu0 0
    %2445 = vmatprep.subr.bf16.mxu0 0
    %2446 = vmatpush1.bf16.xpose.msra.mxu0 0
    %2447 = vmatprep.subr.bf16.mxu0 0
    %2448 = vmatpush1.bf16.xpose.msra.mxu0 0
    %2449 = vmatprep.subr.bf16.mxu0 0
    %2450 = vmatpush1.bf16.xpose.msra.mxu0 0
    %2451 = vmatprep.subr.bf16.mxu0 0
    %2452 = vmatpush1.bf16.xpose.msra.mxu0 0
    %2453 = vmatprep.subr.bf16.mxu0 0
    %2454 = vmatpush1.bf16.xpose.msra.mxu0 0
    %2455 = vmatprep.subr.bf16.mxu0 0
    %2456 = vmatpush1.bf16.xpose.msra.mxu0 0
    %2457 = vmatprep.subr.bf16.mxu0 0
    %2458 = vmatpush1.bf16.xpose.msra.mxu0 0
    %2459 = vmatprep.subr.bf16.mxu0 0
    %2460 = vmatpush1.bf16.xpose.msra.mxu0 0
    %2461 = vmatprep.subr.bf16.mxu0 0
    %2462 = vmatpush1.bf16.xpose.msra.mxu0 0
    %2463 = vmatprep.mubr.bf16.mxu0 0
    %2464 = vmatmul.mubr.bf16.gmra.mrb[0].mxu0 %v2420
    %v2465 = vpop.f32.mrb[0].mxu0
    %v2466 = vadd.f32 0.0, %v2465
    %v2467 = vpop.f32.mrb[0].mxu0
    %v2468 = vpop.f32.mrb[0].mxu0
    %v2469 = vadd.f32 0.0, %v2468
    %v2470 = vpop.f32.mrb[0].mxu0
    %2471 = vmatprep.mubr.bf16.mxu0 0
    %2472 = vmatmul.mubr.bf16.gmra.mrb[0].mxu0 %v2423
    %v2473 = vpop.f32.mrb[0].mxu0
    %v2474 = vadd.f32 0.0, %v2473
    %v2475 = vpop.f32.mrb[0].mxu0
    %v2476 = vpop.f32.mrb[0].mxu0
    %v2477 = vadd.f32 0.0, %v2476
    %v2478 = vpop.f32.mrb[0].mxu0
    %2479 = vdwg.mxu0
    %v2480 = vmul.f32 %v2466, 0.125
    %v2481 = vmul.f32 %v2469, 0.125
    %v2482 = vmul.f32 %v2474, 0.125
    %v2483 = vmul.f32 %v2477, 0.125
    %v2484 = vadd.f32 %v2480, %v178
    %v2485 = vadd.f32 %v2481, %v179
    %v2486 = vadd.f32 %v2482, %v180
    %v2487 = vadd.f32 %v2483, %v181
    %v2488 = vsel %vm537, %v2484, -inf
    %2489 = vmax.xlane.f32.xlu0 %v2488
    %v2490 = vpop.xlane.xlu0 %2489
    %v2491 = vsel %vm537, %v2485, -inf
    %2492 = vmax.xlane.f32.xlu0 %v2491
    %v2493 = vpop.xlane.xlu0 %2492
    %v2494 = vsel %vm537, %v2486, -inf
    %2495 = vmax.xlane.f32.xlu0 %v2494
    %v2496 = vpop.xlane.xlu0 %2495
    %v2497 = vsel %vm537, %v2487, -inf
    %2498 = vmax.xlane.f32.xlu0 %v2497
    %v2499 = vpop.xlane.xlu0 %2498
    %v2500 = vsub.f32 %v2484, %v2490
    %v2501 = vsub.f32 %v2485, %v2493
    %v2502 = vsub.f32 %v2486, %v2496
    %v2503 = vsub.f32 %v2487, %v2499
    %v2504 = vmul.f32 %v2500, 1.442695
    %v2505 = vpow.pop %v2504
    %v2506 = vmul.f32 %v2501, 1.442695
    %v2507 = vpow.pop %v2506
    %v2508 = vmul.f32 %v2502, 1.442695
    %v2509 = vpow.pop %v2508
    %v2510 = vmul.f32 %v2503, 1.442695
    %v2511 = vpow.pop %v2510
    %v2512 = vsel %vm537, %v2505, 0.0
    %2513 = vadd.xlane.f32.xlu0 %v2512
    %v2514 = vpop.xlane.xlu0 %2513
    %v2515 = vsel %vm537, %v2507, 0.0
    %2516 = vadd.xlane.f32.xlu0 %v2515
    %v2517 = vpop.xlane.xlu0 %2516
    %v2518 = vsel %vm537, %v2509, 0.0
    %2519 = vadd.xlane.f32.xlu0 %v2518
    %v2520 = vpop.xlane.xlu0 %2519
    %v2521 = vsel %vm537, %v2511, 0.0
    %2522 = vadd.xlane.f32.xlu0 %v2521
    %v2523 = vpop.xlane.xlu0 %2522
    %v2524 = vrcp.pop %v2514
    %v2525 = vrcp.pop %v2517
    %v2526 = vrcp.pop %v2520
    %v2527 = vrcp.pop %v2523
    %v2528 = vmul.f32 %v2505, %v2524
    %v2529 = vmul.f32 %v2507, %v2525
    %v2530 = vmul.f32 %v2509, %v2526
    %v2531 = vmul.f32 %v2511, %v2527
    %v2532 = vpack.c.bf16 %v2529, %v2528
    %v2533 = vpack.c.bf16 %v2531, %v2530
    %2536 = vrot.lane.b32.xlu0 %v2350, 64
    %v2537 = vpop.permute.xlu0 %2536
    %2538 = vrot.lane.b32.xlu0 %v2351, 64
    %v2539 = vpop.permute.xlu0 %2538
    %v2543 = vsel %vm537, %v2532, 0
    %v2546 = vsel %vm537, %v2533, 0
    %2548 = vmatprep.subr.bf16.mxu0 0
    %2549 = vmatpush1.bf16.msra.mxu0 %v2537
    %2550 = vmatprep.subr.bf16.mxu0 0
    %2551 = vmatpush1.bf16.msra.mxu0 %v2539
    %2552 = vmatprep.subr.bf16.mxu0 0
    %2553 = vmatpush1.bf16.msra.mxu0 0
    %2554 = vmatprep.subr.bf16.mxu0 0
    %2555 = vmatpush1.bf16.msra.mxu0 0
    %2556 = vmatprep.subr.bf16.mxu0 0
    %2557 = vmatpush1.bf16.msra.mxu0 0
    %2558 = vmatprep.subr.bf16.mxu0 0
    %2559 = vmatpush1.bf16.msra.mxu0 0
    %2560 = vmatprep.subr.bf16.mxu0 0
    %2561 = vmatpush1.bf16.msra.mxu0 0
    %2562 = vmatprep.subr.bf16.mxu0 0
    %2563 = vmatpush1.bf16.msra.mxu0 0
    %2564 = vmatprep.subr.bf16.mxu0 0
    %2565 = vmatpush1.bf16.msra.mxu0 0
    %2566 = vmatprep.subr.bf16.mxu0 0
    %2567 = vmatpush1.bf16.msra.mxu0 0
    %2568 = vmatprep.subr.bf16.mxu0 0
    %2569 = vmatpush1.bf16.msra.mxu0 0
    %2570 = vmatprep.subr.bf16.mxu0 0
    %2571 = vmatpush1.bf16.msra.mxu0 0
    %2572 = vmatprep.subr.bf16.mxu0 0
    %2573 = vmatpush1.bf16.msra.mxu0 0
    %2574 = vmatprep.subr.bf16.mxu0 0
    %2575 = vmatpush1.bf16.msra.mxu0 0
    %2576 = vmatprep.subr.bf16.mxu0 0
    %2577 = vmatpush1.bf16.msra.mxu0 0
    %2578 = vmatprep.subr.bf16.mxu0 0
    %2579 = vmatpush1.bf16.msra.mxu0 0
    %2580 = vmatprep.mubr.bf16.mxu0 0
    %2581 = vmatmul.mubr.bf16.gmra.mrb[0].mxu0 %v2543
    %v2582 = vpop.f32.mrb[0].mxu0
    %v2583 = vadd.f32 0.0, %v2582
    %v2584 = vpop.f32.mrb[0].mxu0
    %v2585 = vpop.f32.mrb[0].mxu0
    %v2586 = vadd.f32 0.0, %v2585
    %v2587 = vpop.f32.mrb[0].mxu0
    %2588 = vmatprep.mubr.bf16.mxu0 0
    %2589 = vmatmul.mubr.bf16.gmra.mrb[0].mxu0 %v2546
    %v2590 = vpop.f32.mrb[0].mxu0
    %v2591 = vadd.f32 0.0, %v2590
    %v2592 = vpop.f32.mrb[0].mxu0
    %v2593 = vpop.f32.mrb[0].mxu0
    %v2594 = vadd.f32 0.0, %v2593
    %v2595 = vpop.f32.mrb[0].mxu0
    %2596 = vdwg.mxu0
    %2601 = vrot.lane.b32.xlu0 %v2583, 64
    %v2602 = vpop.permute.xlu0 %2601
    %2603 = vrot.lane.b32.xlu0 %v2586, 64
    %v2604 = vpop.permute.xlu0 %2603
    %2605 = vrot.lane.b32.xlu0 %v2591, 64
    %v2606 = vpop.permute.xlu0 %2605
    %2607 = vrot.lane.b32.xlu0 %v2594, 64
    %v2608 = vpop.permute.xlu0 %2607
    %v2613 = vsel %vm467, %v2393, %v2602
    %v2614 = vsel %vm467, %v2396, %v2604
    %v2615 = vsel %vm467, %v2401, %v2606
    %v2616 = vsel %vm467, %v2404, %v2608
    %v2617 = vpack.c.bf16 %v2614, %v2613
    %v2618 = vpack.c.bf16 %v2616, %v2615
    %s2619 = scalar_lea.vmem %s7, 64
    %v2620 = vld [vmem:[%s2619] sm:$0xf]
    %v2621 = vld [vmem:[%s2619 + $0x4] sm:$0xf]
    %v2622 = vld [vmem:[%s2619 + $0x8] sm:$0xf]
    %v2623 = vld [vmem:[%s2619 + $0xc] sm:$0xf]
    %v2624 = vld [vmem:[%s2619 + $0x10] sm:$0xf]
    %v2625 = vld [vmem:[%s2619 + $0x14] sm:$0xf]
    %v2626 = vld [vmem:[%s2619 + $0x18] sm:$0xf]
    %v2627 = vld [vmem:[%s2619 + $0x1c] sm:$0xf]
    %v2628 = vld [vmem:[%s2619 + $0x20] sm:$0xf]
    %v2629 = vld [vmem:[%s2619 + $0x24] sm:$0xf]
    %v2630 = vld [vmem:[%s2619 + $0x28] sm:$0xf]
    %v2631 = vld [vmem:[%s2619 + $0x2c] sm:$0xf]
    %v2632 = vld [vmem:[%s2619 + $0x30] sm:$0xf]
    %v2633 = vld [vmem:[%s2619 + $0x34] sm:$0xf]
    %v2634 = vld [vmem:[%s2619 + $0x38] sm:$0xf]
    %v2635 = vld [vmem:[%s2619 + $0x3c] sm:$0xf]
    %s2636 = scalar_lea.vmem %s8, 1
    %v2637 = vld [vmem:[%s2636] sm:$0x1]
    %v2639 = vlaneseq
    %v2640 = vshrl.u32 %v2639, 7
    %v2641 = vsub.s32 0, %v2640
    %v2642 = vrot.slane %v2637, %v2641
    %v2660 = vunpack.c.l.b16 %v2620
    %v2661 = vunpack.c.l.b16 %v2621
    %v2662 = vunpack.c.l.b16 %v2622
    %v2663 = vunpack.c.l.b16 %v2623
    %v2664 = vunpack.c.l.b16 %v2624
    %v2665 = vunpack.c.l.b16 %v2625
    %v2666 = vunpack.c.l.b16 %v2626
    %v2667 = vunpack.c.l.b16 %v2627
    %v2668 = vunpack.c.l.b16 %v2628
    %v2669 = vunpack.c.l.b16 %v2629
    %v2670 = vunpack.c.l.b16 %v2630
    %v2671 = vunpack.c.l.b16 %v2631
    %v2672 = vunpack.c.l.b16 %v2632
    %v2673 = vunpack.c.l.b16 %v2633
    %v2674 = vunpack.c.l.b16 %v2634
    %v2675 = vunpack.c.l.b16 %v2635
    %v2676 = vpack.c.b16 %v2661, %v2660
    %v2677 = vpack.c.b16 %v2663, %v2662
    %v2678 = vpack.c.b16 %v2665, %v2664
    %v2679 = vpack.c.b16 %v2667, %v2666
    %v2680 = vpack.c.b16 %v2669, %v2668
    %v2681 = vpack.c.b16 %v2671, %v2670
    %v2682 = vpack.c.b16 %v2673, %v2672
    %v2683 = vpack.c.b16 %v2675, %v2674
    %2692 = vmatprep.subr.bf16.mxu0 0
    %2693 = vmatpush1.bf16.msra.mxu0 %v2676
    %2694 = vmatprep.subr.bf16.mxu0 0
    %2695 = vmatpush1.bf16.msra.mxu0 %v2677
    %2696 = vmatprep.subr.bf16.mxu0 0
    %2697 = vmatpush1.bf16.msra.mxu0 %v2678
    %2698 = vmatprep.subr.bf16.mxu0 0
    %2699 = vmatpush1.bf16.msra.mxu0 %v2679
    %2700 = vmatprep.subr.bf16.mxu0 0
    %2701 = vmatpush1.bf16.msra.mxu0 %v2680
    %2702 = vmatprep.subr.bf16.mxu0 0
    %2703 = vmatpush1.bf16.msra.mxu0 %v2681
    %2704 = vmatprep.subr.bf16.mxu0 0
    %2705 = vmatpush1.bf16.msra.mxu0 %v2682
    %2706 = vmatprep.subr.bf16.mxu0 0
    %2707 = vmatpush1.bf16.msra.mxu0 %v2683
    %2708 = vmatprep.subr.bf16.mxu0 0
    %2709 = vmatpush1.bf16.msra.mxu0 0
    %2710 = vmatprep.subr.bf16.mxu0 0
    %2711 = vmatpush1.bf16.msra.mxu0 0
    %2712 = vmatprep.subr.bf16.mxu0 0
    %2713 = vmatpush1.bf16.msra.mxu0 0
    %2714 = vmatprep.subr.bf16.mxu0 0
    %2715 = vmatpush1.bf16.msra.mxu0 0
    %2716 = vmatprep.subr.bf16.mxu0 0
    %2717 = vmatpush1.bf16.msra.mxu0 0
    %2718 = vmatprep.subr.bf16.mxu0 0
    %2719 = vmatpush1.bf16.msra.mxu0 0
    %2720 = vmatprep.subr.bf16.mxu0 0
    %2721 = vmatpush1.bf16.msra.mxu0 0
    %2722 = vmatprep.subr.bf16.mxu0 0
    %2723 = vmatpush1.bf16.msra.mxu0 0
    %2724 = vmatprep.mubr.bf16.mxu0 0
    %2725 = vmatmul.mubr.bf16.gmra.mrb[0].mxu0 %v2617
    %v2726 = vpop.f32.mrb[0].mxu0
    %v2727 = vadd.f32 %v2642, %v2726
    %v2728 = vpop.f32.mrb[0].mxu0
    %v2729 = vpop.f32.mrb[0].mxu0
    %v2730 = vadd.f32 %v2642, %v2729
    %v2731 = vpop.f32.mrb[0].mxu0
    %2732 = vmatprep.mubr.bf16.mxu0 0
    %2733 = vmatmul.mubr.bf16.gmra.mrb[0].mxu0 %v2618
    %v2734 = vpop.f32.mrb[0].mxu0
    %v2735 = vadd.f32 %v2642, %v2734
    %v2736 = vpop.f32.mrb[0].mxu0
    %v2737 = vpop.f32.mrb[0].mxu0
    %v2738 = vadd.f32 %v2642, %v2737
    %v2739 = vpop.f32.mrb[0].mxu0
    %2740 = vdwg.mxu0
    %v2741 = vadd.f32 %v2727, %v1944
    %v2742 = vadd.f32 %v2730, %v1945
    %v2743 = vadd.f32 %v2735, %v1946
    %v2744 = vadd.f32 %v2738, %v1947
    %s2745 = scalar_lea.vmem %s9, 1
    %v2746 = vld [vmem:[%s2745] sm:$0x1]
    %s2747 = scalar_lea.vmem %s10, 1
    %v2748 = vld [vmem:[%s2747] sm:$0x1]
    %2749 = vadd.xlane.f32.xlu0 %v2741
    %v2750 = vpop.xlane.xlu0 %2749
    %2751 = vadd.xlane.f32.xlu0 %v2742
    %v2752 = vpop.xlane.xlu0 %2751
    %2753 = vadd.xlane.f32.xlu0 %v2743
    %v2754 = vpop.xlane.xlu0 %2753
    %2755 = vadd.xlane.f32.xlu0 %v2744
    %v2756 = vpop.xlane.xlu0 %2755
    %v2757 = vmul.f32 %v2750, %v121
    %v2758 = vmul.f32 %v2752, %v121
    %v2759 = vmul.f32 %v2754, %v121
    %v2760 = vmul.f32 %v2756, %v121
    %v2761 = vsub.f32 %v2741, %v2757
    %v2762 = vsub.f32 %v2742, %v2758
    %v2763 = vsub.f32 %v2743, %v2759
    %v2764 = vsub.f32 %v2744, %v2760
    %v2765 = vmul.f32 %v2761, %v2761
    %v2766 = vmul.f32 %v2762, %v2762
    %v2767 = vmul.f32 %v2763, %v2763
    %v2768 = vmul.f32 %v2764, %v2764
    %2769 = vadd.xlane.f32.xlu0 %v2765
    %v2770 = vpop.xlane.xlu0 %2769
    %2771 = vadd.xlane.f32.xlu0 %v2766
    %v2772 = vpop.xlane.xlu0 %2771
    %2773 = vadd.xlane.f32.xlu0 %v2767
    %v2774 = vpop.xlane.xlu0 %2773
    %2775 = vadd.xlane.f32.xlu0 %v2768
    %v2776 = vpop.xlane.xlu0 %2775
    %v2777 = vmul.f32 %v2770, %v121
    %v2778 = vmul.f32 %v2772, %v121
    %v2779 = vmul.f32 %v2774, %v121
    %v2780 = vmul.f32 %v2776, %v121
    %v2781 = vadd.f32 %v2777, 1e-05
    %v2782 = vadd.f32 %v2778, 1e-05
    %v2783 = vadd.f32 %v2779, 1e-05
    %v2784 = vadd.f32 %v2780, 1e-05
    %v2785 = vrsqrt.pop %v2781
    %v2786 = vrsqrt.pop %v2782
    %v2787 = vrsqrt.pop %v2783
    %v2788 = vrsqrt.pop %v2784
    %v2789 = vmul.f32 %v2761, %v2785
    %v2790 = vmul.f32 %v2762, %v2786
    %v2791 = vmul.f32 %v2763, %v2787
    %v2792 = vmul.f32 %v2764, %v2788
    %v2794 = vlaneseq
    %v2795 = vshrl.u32 %v2794, 7
    %v2796 = vsub.s32 0, %v2795
    %v2797 = vrot.slane %v2746, %v2796
    %v2799 = vmul.f32 %v2789, %v2797
    %v2800 = vmul.f32 %v2790, %v2797
    %v2801 = vmul.f32 %v2791, %v2797
    %v2802 = vmul.f32 %v2792, %v2797
    %v2804 = vlaneseq
    %v2805 = vshrl.u32 %v2804, 7
    %v2806 = vsub.s32 0, %v2805
    %v2807 = vrot.slane %v2748, %v2806
    %v2809 = vadd.f32 %v2799, %v2807
    %v2810 = vadd.f32 %v2800, %v2807
    %v2811 = vadd.f32 %v2801, %v2807
    %v2812 = vadd.f32 %v2802, %v2807
    %v2813 = vpack.c.bf16 %v2810, %v2809
    %v2814 = vpack.c.bf16 %v2812, %v2811
    %s2815 = scalar_lea.vmem %s11, 256
    %v2816 = vld [vmem:[%s2815] sm:$0xff]
    %v2817 = vld [vmem:[%s2815 + $0x8] sm:$0xff]
    %v2818 = vld [vmem:[%s2815 + $0x10] sm:$0xff]
    %v2819 = vld [vmem:[%s2815 + $0x18] sm:$0xff]
    %v2820 = vld [vmem:[%s2815 + $0x20] sm:$0xff]
    %v2821 = vld [vmem:[%s2815 + $0x28] sm:$0xff]
    %v2822 = vld [vmem:[%s2815 + $0x30] sm:$0xff]
    %v2823 = vld [vmem:[%s2815 + $0x38] sm:$0xff]
    %v2824 = vld [vmem:[%s2815 + $0x40] sm:$0xff]
    %v2825 = vld [vmem:[%s2815 + $0x48] sm:$0xff]
    %v2826 = vld [vmem:[%s2815 + $0x50] sm:$0xff]
    %v2827 = vld [vmem:[%s2815 + $0x58] sm:$0xff]
    %v2828 = vld [vmem:[%s2815 + $0x60] sm:$0xff]
    %v2829 = vld [vmem:[%s2815 + $0x68] sm:$0xff]
    %v2830 = vld [vmem:[%s2815 + $0x70] sm:$0xff]
    %v2831 = vld [vmem:[%s2815 + $0x78] sm:$0xff]
    %v2832 = vld [vmem:[%s2815 + $0x80] sm:$0xff]
    %v2833 = vld [vmem:[%s2815 + $0x88] sm:$0xff]
    %v2834 = vld [vmem:[%s2815 + $0x90] sm:$0xff]
    %v2835 = vld [vmem:[%s2815 + $0x98] sm:$0xff]
    %v2836 = vld [vmem:[%s2815 + $0xa0] sm:$0xff]
    %v2837 = vld [vmem:[%s2815 + $0xa8] sm:$0xff]
    %v2838 = vld [vmem:[%s2815 + $0xb0] sm:$0xff]
    %v2839 = vld [vmem:[%s2815 + $0xb8] sm:$0xff]
    %v2840 = vld [vmem:[%s2815 + $0xc0] sm:$0xff]
    %v2841 = vld [vmem:[%s2815 + $0xc8] sm:$0xff]
    %v2842 = vld [vmem:[%s2815 + $0xd0] sm:$0xff]
    %v2843 = vld [vmem:[%s2815 + $0xd8] sm:$0xff]
    %v2844 = vld [vmem:[%s2815 + $0xe0] sm:$0xff]
    %v2845 = vld [vmem:[%s2815 + $0xe8] sm:$0xff]
    %v2846 = vld [vmem:[%s2815 + $0xf0] sm:$0xff]
    %v2847 = vld [vmem:[%s2815 + $0xf8] sm:$0xff]
    %s2848 = scalar_lea.vmem %s12, 4
    %v2849 = vld [vmem:[%s2848] sm:$0xf]
    %v2851 = vlaneseq
    %v2852 = vshrl.u32 %v2851, 7
    %v2853 = vsub.s32 0, %v2852
    %v2854 = vrot.slane %v2849, %v2853
    %v2855 = vlaneseq
    %v2856 = vshrl.u32 %v2855, 7
    %v2857 = vsub.s32 1, %v2856
    %v2858 = vrot.slane %v2849, %v2857
    %v2859 = vlaneseq
    %v2860 = vshrl.u32 %v2859, 7
    %v2861 = vsub.s32 2, %v2860
    %v2862 = vrot.slane %v2849, %v2861
    %v2863 = vlaneseq
    %v2864 = vshrl.u32 %v2863, 7
    %v2865 = vsub.s32 3, %v2864
    %v2866 = vrot.slane %v2849, %v2865
    %v2903 = vunpack.c.l.b16 %v2816
    %v2904 = vunpack.c.h.b16 %v2816
    %v2905 = vunpack.c.l.b16 %v2817
    %v2906 = vunpack.c.h.b16 %v2817
    %v2907 = vunpack.c.l.b16 %v2818
    %v2908 = vunpack.c.h.b16 %v2818
    %v2909 = vunpack.c.l.b16 %v2819
    %v2910 = vunpack.c.h.b16 %v2819
    %v2911 = vunpack.c.l.b16 %v2820
    %v2912 = vunpack.c.h.b16 %v2820
    %v2913 = vunpack.c.l.b16 %v2821
    %v2914 = vunpack.c.h.b16 %v2821
    %v2915 = vunpack.c.l.b16 %v2822
    %v2916 = vunpack.c.h.b16 %v2822
    %v2917 = vunpack.c.l.b16 %v2823
    %v2918 = vunpack.c.h.b16 %v2823
    %v2919 = vunpack.c.l.b16 %v2824
    %v2920 = vunpack.c.h.b16 %v2824
    %v2921 = vunpack.c.l.b16 %v2825
    %v2922 = vunpack.c.h.b16 %v2825
    %v2923 = vunpack.c.l.b16 %v2826
    %v2924 = vunpack.c.h.b16 %v2826
    %v2925 = vunpack.c.l.b16 %v2827
    %v2926 = vunpack.c.h.b16 %v2827
    %v2927 = vunpack.c.l.b16 %v2828
    %v2928 = vunpack.c.h.b16 %v2828
    %v2929 = vunpack.c.l.b16 %v2829
    %v2930 = vunpack.c.h.b16 %v2829
    %v2931 = vunpack.c.l.b16 %v2830
    %v2932 = vunpack.c.h.b16 %v2830
    %v2933 = vunpack.c.l.b16 %v2831
    %v2934 = vunpack.c.h.b16 %v2831
    %v2935 = vunpack.c.l.b16 %v2832
    %v2936 = vunpack.c.h.b16 %v2832
    %v2937 = vunpack.c.l.b16 %v2833
    %v2938 = vunpack.c.h.b16 %v2833
    %v2939 = vunpack.c.l.b16 %v2834
    %v2940 = vunpack.c.h.b16 %v2834
    %v2941 = vunpack.c.l.b16 %v2835
    %v2942 = vunpack.c.h.b16 %v2835
    %v2943 = vunpack.c.l.b16 %v2836
    %v2944 = vunpack.c.h.b16 %v2836
    %v2945 = vunpack.c.l.b16 %v2837
    %v2946 = vunpack.c.h.b16 %v2837
    %v2947 = vunpack.c.l.b16 %v2838
    %v2948 = vunpack.c.h.b16 %v2838
    %v2949 = vunpack.c.l.b16 %v2839
    %v2950 = vunpack.c.h.b16 %v2839
    %v2951 = vunpack.c.l.b16 %v2840
    %v2952 = vunpack.c.h.b16 %v2840
    %v2953 = vunpack.c.l.b16 %v2841
    %v2954 = vunpack.c.h.b16 %v2841
    %v2955 = vunpack.c.l.b16 %v2842
    %v2956 = vunpack.c.h.b16 %v2842
    %v2957 = vunpack.c.l.b16 %v2843
    %v2958 = vunpack.c.h.b16 %v2843
    %v2959 = vunpack.c.l.b16 %v2844
    %v2960 = vunpack.c.h.b16 %v2844
    %v2961 = vunpack.c.l.b16 %v2845
    %v2962 = vunpack.c.h.b16 %v2845
    %v2963 = vunpack.c.l.b16 %v2846
    %v2964 = vunpack.c.h.b16 %v2846
    %v2965 = vunpack.c.l.b16 %v2847
    %v2966 = vunpack.c.h.b16 %v2847
    %v2967 = vpack.c.b16 %v2907, %v2903
    %v2968 = vpack.c.b16 %v2908, %v2904
    %v2969 = vpack.c.b16 %v2909, %v2905
    %v2970 = vpack.c.b16 %v2910, %v2906
    %v2971 = vpack.c.b16 %v2915, %v2911
    %v2972 = vpack.c.b16 %v2916, %v2912
    %v2973 = vpack.c.b16 %v2917, %v2913
    %v2974 = vpack.c.b16 %v2918, %v2914
    %v2975 = vpack.c.b16 %v2923, %v2919
    %v2976 = vpack.c.b16 %v2924, %v2920
    %v2977 = vpack.c.b16 %v2925, %v2921
    %v2978 = vpack.c.b16 %v2926, %v2922
    %v2979 = vpack.c.b16 %v2931, %v2927
    %v2980 = vpack.c.b16 %v2932, %v2928
    %v2981 = vpack.c.b16 %v2933, %v2929
    %v2982 = vpack.c.b16 %v2934, %v2930
    %v2983 = vpack.c.b16 %v2939, %v2935
    %v2984 = vpack.c.b16 %v2940, %v2936
    %v2985 = vpack.c.b16 %v2941, %v2937
    %v2986 = vpack.c.b16 %v2942, %v2938
    %v2987 = vpack.c.b16 %v2947, %v2943
    %v2988 = vpack.c.b16 %v2948, %v2944
    %v2989 = vpack.c.b16 %v2949, %v2945
    %v2990 = vpack.c.b16 %v2950, %v2946
    %v2991 = vpack.c.b16 %v2955, %v2951
    %v2992 = vpack.c.b16 %v2956, %v2952
    %v2993 = vpack.c.b16 %v2957, %v2953
    %v2994 = vpack.c.b16 %v2958, %v2954
    %v2995 = vpack.c.b16 %v2963, %v2959
    %v2996 = vpack.c.b16 %v2964, %v2960
    %v2997 = vpack.c.b16 %v2965, %v2961
    %v2998 = vpack.c.b16 %v2966, %v2962
    %3031 = vmatprep.subr.bf16.mxu0 %v2968
    %3032 = vmatpush1.bf16.msra.mxu0 %v2967
    %3033 = vmatprep.subr.bf16.mxu0 %v2972
    %3034 = vmatpush1.bf16.msra.mxu0 %v2971
    %3035 = vmatprep.subr.bf16.mxu0 %v2976
    %3036 = vmatpush1.bf16.msra.mxu0 %v2975
    %3037 = vmatprep.subr.bf16.mxu0 %v2980
    %3038 = vmatpush1.bf16.msra.mxu0 %v2979
    %3039 = vmatprep.subr.bf16.mxu0 %v2984
    %3040 = vmatpush1.bf16.msra.mxu0 %v2983
    %3041 = vmatprep.subr.bf16.mxu0 %v2988
    %3042 = vmatpush1.bf16.msra.mxu0 %v2987
    %3043 = vmatprep.subr.bf16.mxu0 %v2992
    %3044 = vmatpush1.bf16.msra.mxu0 %v2991
    %3045 = vmatprep.subr.bf16.mxu0 %v2996
    %3046 = vmatpush1.bf16.msra.mxu0 %v2995
    %3047 = vmatprep.subr.bf16.mxu0 0
    %3048 = vmatpush1.bf16.msra.mxu0 0
    %3049 = vmatprep.subr.bf16.mxu0 0
    %3050 = vmatpush1.bf16.msra.mxu0 0
    %3051 = vmatprep.subr.bf16.mxu0 0
    %3052 = vmatpush1.bf16.msra.mxu0 0
    %3053 = vmatprep.subr.bf16.mxu0 0
    %3054 = vmatpush1.bf16.msra.mxu0 0
    %3055 = vmatprep.subr.bf16.mxu0 0
    %3056 = vmatpush1.bf16.msra.mxu0 0
    %3057 = vmatprep.subr.bf16.mxu0 0
    %3058 = vmatpush1.bf16.msra.mxu0 0
    %3059 = vmatprep.subr.bf16.mxu0 0
    %3060 = vmatpush1.bf16.msra.mxu0 0
    %3061 = vmatprep.subr.bf16.mxu0 0
    %3062 = vmatpush1.bf16.msra.mxu0 0
    %3063 = vmatprep.mubr.bf16.mxu0 0
    %3064 = vmatmul.mubr.bf16.gmra.mrb[0].mxu0 %v2813
    %v3065 = vpop.f32.mrb[0].mxu0
    %v3066 = vadd.f32 %v2854, %v3065
    %v3067 = vpop.f32.mrb[0].mxu0
    %v3068 = vadd.f32 %v2858, %v3067
    %v3069 = vpop.f32.mrb[0].mxu0
    %v3070 = vadd.f32 %v2854, %v3069
    %v3071 = vpop.f32.mrb[0].mxu0
    %v3072 = vadd.f32 %v2858, %v3071
    %3073 = vmatprep.mubr.bf16.mxu0 0
    %3074 = vmatmul.mubr.bf16.gmra.mrb[0].mxu0 %v2814
    %v3075 = vpop.f32.mrb[0].mxu0
    %v3076 = vadd.f32 %v2854, %v3075
    %v3077 = vpop.f32.mrb[0].mxu0
    %v3078 = vadd.f32 %v2858, %v3077
    %v3079 = vpop.f32.mrb[0].mxu0
    %v3080 = vadd.f32 %v2854, %v3079
    %v3081 = vpop.f32.mrb[0].mxu0
    %v3082 = vadd.f32 %v2858, %v3081
    %3083 = vdwg.mxu0
    %3084 = vmatprep.subr.bf16.mxu0 %v2970
    %3085 = vmatpush1.bf16.msra.mxu0 %v2969
    %3086 = vmatprep.subr.bf16.mxu0 %v2974
    %3087 = vmatpush1.bf16.msra.mxu0 %v2973
    %3088 = vmatprep.subr.bf16.mxu0 %v2978
    %3089 = vmatpush1.bf16.msra.mxu0 %v2977
    %3090 = vmatprep.subr.bf16.mxu0 %v2982
    %3091 = vmatpush1.bf16.msra.mxu0 %v2981
    %3092 = vmatprep.subr.bf16.mxu0 %v2986
    %3093 = vmatpush1.bf16.msra.mxu0 %v2985
    %3094 = vmatprep.subr.bf16.mxu0 %v2990
    %3095 = vmatpush1.bf16.msra.mxu0 %v2989
    %3096 = vmatprep.subr.bf16.mxu0 %v2994
    %3097 = vmatpush1.bf16.msra.mxu0 %v2993
    %3098 = vmatprep.subr.bf16.mxu0 %v2998
    %3099 = vmatpush1.bf16.msra.mxu0 %v2997
    %3100 = vmatprep.subr.bf16.mxu0 0
    %3101 = vmatpush1.bf16.msra.mxu0 0
    %3102 = vmatprep.subr.bf16.mxu0 0
    %3103 = vmatpush1.bf16.msra.mxu0 0
    %3104 = vmatprep.subr.bf16.mxu0 0
    %3105 = vmatpush1.bf16.msra.mxu0 0
    %3106 = vmatprep.subr.bf16.mxu0 0
    %3107 = vmatpush1.bf16.msra.mxu0 0
    %3108 = vmatprep.subr.bf16.mxu0 0
    %3109 = vmatpush1.bf16.msra.mxu0 0
    %3110 = vmatprep.subr.bf16.mxu0 0
    %3111 = vmatpush1.bf16.msra.mxu0 0
    %3112 = vmatprep.subr.bf16.mxu0 0
    %3113 = vmatpush1.bf16.msra.mxu0 0
    %3114 = vmatprep.subr.bf16.mxu0 0
    %3115 = vmatpush1.bf16.msra.mxu0 0
    %3116 = vmatprep.mubr.bf16.mxu0 0
    %3117 = vmatmul.mubr.bf16.gmra.mrb[0].mxu0 %v2813
    %v3118 = vpop.f32.mrb[0].mxu0
    %v3119 = vadd.f32 %v2862, %v3118
    %v3120 = vpop.f32.mrb[0].mxu0
    %v3121 = vadd.f32 %v2866, %v3120
    %v3122 = vpop.f32.mrb[0].mxu0
    %v3123 = vadd.f32 %v2862, %v3122
    %v3124 = vpop.f32.mrb[0].mxu0
    %v3125 = vadd.f32 %v2866, %v3124
    %3126 = vmatprep.mubr.bf16.mxu0 0
    %3127 = vmatmul.mubr.bf16.gmra.mrb[0].mxu0 %v2814
    %v3128 = vpop.f32.mrb[0].mxu0
    %v3129 = vadd.f32 %v2862, %v3128
    %v3130 = vpop.f32.mrb[0].mxu0
    %v3131 = vadd.f32 %v2866, %v3130
    %v3132 = vpop.f32.mrb[0].mxu0
    %v3133 = vadd.f32 %v2862, %v3132
    %v3134 = vpop.f32.mrb[0].mxu0
    %v3135 = vadd.f32 %v2866, %v3134
    %3136 = vdwg.mxu0
    %v3137 = vmul.f32 %v3066, 0.5
    %v3138 = vmul.f32 %v3068, 0.5
    %v3139 = vmul.f32 %v3119, 0.5
    %v3140 = vmul.f32 %v3121, 0.5
    %v3141 = vmul.f32 %v3070, 0.5
    %v3142 = vmul.f32 %v3072, 0.5
    %v3143 = vmul.f32 %v3123, 0.5
    %v3144 = vmul.f32 %v3125, 0.5
    %v3145 = vmul.f32 %v3076, 0.5
    %v3146 = vmul.f32 %v3078, 0.5
    %v3147 = vmul.f32 %v3129, 0.5
    %v3148 = vmul.f32 %v3131, 0.5
    %v3149 = vmul.f32 %v3080, 0.5
    %v3150 = vmul.f32 %v3082, 0.5
    %v3151 = vmul.f32 %v3133, 0.5
    %v3152 = vmul.f32 %v3135, 0.5
    %v3153 = vmul.f32 %v3066, 0.044715
    %v3154 = vmul.f32 %v3068, 0.044715
    %v3155 = vmul.f32 %v3119, 0.044715
    %v3156 = vmul.f32 %v3121, 0.044715
    %v3157 = vmul.f32 %v3070, 0.044715
    %v3158 = vmul.f32 %v3072, 0.044715
    %v3159 = vmul.f32 %v3123, 0.044715
    %v3160 = vmul.f32 %v3125, 0.044715
    %v3161 = vmul.f32 %v3076, 0.044715
    %v3162 = vmul.f32 %v3078, 0.044715
    %v3163 = vmul.f32 %v3129, 0.044715
    %v3164 = vmul.f32 %v3131, 0.044715
    %v3165 = vmul.f32 %v3080, 0.044715
    %v3166 = vmul.f32 %v3082, 0.044715
    %v3167 = vmul.f32 %v3133, 0.044715
    %v3168 = vmul.f32 %v3135, 0.044715
    %v3169 = vmul.f32 %v3153, %v3066
    %v3170 = vmul.f32 %v3154, %v3068
    %v3171 = vmul.f32 %v3155, %v3119
    %v3172 = vmul.f32 %v3156, %v3121
    %v3173 = vmul.f32 %v3157, %v3070
    %v3174 = vmul.f32 %v3158, %v3072
    %v3175 = vmul.f32 %v3159, %v3123
    %v3176 = vmul.f32 %v3160, %v3125
    %v3177 = vmul.f32 %v3161, %v3076
    %v3178 = vmul.f32 %v3162, %v3078
    %v3179 = vmul.f32 %v3163, %v3129
    %v3180 = vmul.f32 %v3164, %v3131
    %v3181 = vmul.f32 %v3165, %v3080
    %v3182 = vmul.f32 %v3166, %v3082
    %v3183 = vmul.f32 %v3167, %v3133
    %v3184 = vmul.f32 %v3168, %v3135
    %v3185 = vmul.f32 %v3169, %v3066
    %v3186 = vmul.f32 %v3170, %v3068
    %v3187 = vmul.f32 %v3171, %v3119
    %v3188 = vmul.f32 %v3172, %v3121
    %v3189 = vmul.f32 %v3173, %v3070
    %v3190 = vmul.f32 %v3174, %v3072
    %v3191 = vmul.f32 %v3175, %v3123
    %v3192 = vmul.f32 %v3176, %v3125
    %v3193 = vmul.f32 %v3177, %v3076
    %v3194 = vmul.f32 %v3178, %v3078
    %v3195 = vmul.f32 %v3179, %v3129
    %v3196 = vmul.f32 %v3180, %v3131
    %v3197 = vmul.f32 %v3181, %v3080
    %v3198 = vmul.f32 %v3182, %v3082
    %v3199 = vmul.f32 %v3183, %v3133
    %v3200 = vmul.f32 %v3184, %v3135
    %v3201 = vadd.f32 %v3066, %v3185
    %v3202 = vadd.f32 %v3068, %v3186
    %v3203 = vadd.f32 %v3119, %v3187
    %v3204 = vadd.f32 %v3121, %v3188
    %v3205 = vadd.f32 %v3070, %v3189
    %v3206 = vadd.f32 %v3072, %v3190
    %v3207 = vadd.f32 %v3123, %v3191
    %v3208 = vadd.f32 %v3125, %v3192
    %v3209 = vadd.f32 %v3076, %v3193
    %v3210 = vadd.f32 %v3078, %v3194
    %v3211 = vadd.f32 %v3129, %v3195
    %v3212 = vadd.f32 %v3131, %v3196
    %v3213 = vadd.f32 %v3080, %v3197
    %v3214 = vadd.f32 %v3082, %v3198
    %v3215 = vadd.f32 %v3133, %v3199
    %v3216 = vadd.f32 %v3135, %v3200
    %v3217 = vmul.f32 %v3201, 0.7978846
    %v3218 = vmul.f32 %v3202, 0.7978846
    %v3219 = vmul.f32 %v3203, 0.7978846
    %v3220 = vmul.f32 %v3204, 0.7978846
    %v3221 = vmul.f32 %v3205, 0.7978846
    %v3222 = vmul.f32 %v3206, 0.7978846
    %v3223 = vmul.f32 %v3207, 0.7978846
    %v3224 = vmul.f32 %v3208, 0.7978846
    %v3225 = vmul.f32 %v3209, 0.7978846
    %v3226 = vmul.f32 %v3210, 0.7978846
    %v3227 = vmul.f32 %v3211, 0.7978846
    %v3228 = vmul.f32 %v3212, 0.7978846
    %v3229 = vmul.f32 %v3213, 0.7978846
    %v3230 = vmul.f32 %v3214, 0.7978846
    %v3231 = vmul.f32 %v3215, 0.7978846
    %v3232 = vmul.f32 %v3216, 0.7978846
    %v3233 = vtanh.pop %v3217
    %v3234 = vtanh.pop %v3218
    %v3235 = vtanh.pop %v3219
    %v3236 = vtanh.pop %v3220
    %v3237 = vtanh.pop %v3221
    %v3238 = vtanh.pop %v3222
    %v3239 = vtanh.pop %v3223
    %v3240 = vtanh.pop %v3224
    %v3241 = vtanh.pop %v3225
    %v3242 = vtanh.pop %v3226
    %v3243 = vtanh.pop %v3227
    %v3244 = vtanh.pop %v3228
    %v3245 = vtanh.pop %v3229
    %v3246 = vtanh.pop %v3230
    %v3247 = vtanh.pop %v3231
    %v3248 = vtanh.pop %v3232
    %v3249 = vadd.f32 %v3233, 1.0
    %v3250 = vadd.f32 %v3234, 1.0
    %v3251 = vadd.f32 %v3235, 1.0
    %v3252 = vadd.f32 %v3236, 1.0
    %v3253 = vadd.f32 %v3237, 1.0
    %v3254 = vadd.f32 %v3238, 1.0
    %v3255 = vadd.f32 %v3239, 1.0
    %v3256 = vadd.f32 %v3240, 1.0
    %v3257 = vadd.f32 %v3241, 1.0
    %v3258 = vadd.f32 %v3242, 1.0
    %v3259 = vadd.f32 %v3243, 1.0
    %v3260 = vadd.f32 %v3244, 1.0
    %v3261 = vadd.f32 %v3245, 1.0
    %v3262 = vadd.f32 %v3246, 1.0
    %v3263 = vadd.f32 %v3247, 1.0
    %v3264 = vadd.f32 %v3248, 1.0
    %v3265 = vmul.f32 %v3137, %v3249
    %v3266 = vmul.f32 %v3138, %v3250
    %v3267 = vmul.f32 %v3139, %v3251
    %v3268 = vmul.f32 %v3140, %v3252
    %v3269 = vmul.f32 %v3141, %v3253
    %v3270 = vmul.f32 %v3142, %v3254
    %v3271 = vmul.f32 %v3143, %v3255
    %v3272 = vmul.f32 %v3144, %v3256
    %v3273 = vmul.f32 %v3145, %v3257
    %v3274 = vmul.f32 %v3146, %v3258
    %v3275 = vmul.f32 %v3147, %v3259
    %v3276 = vmul.f32 %v3148, %v3260
    %v3277 = vmul.f32 %v3149, %v3261
    %v3278 = vmul.f32 %v3150, %v3262
    %v3279 = vmul.f32 %v3151, %v3263
    %v3280 = vmul.f32 %v3152, %v3264
    %v3281 = vpack.c.bf16 %v3269, %v3265
    %v3282 = vpack.c.bf16 %v3270, %v3266
    %v3283 = vpack.c.bf16 %v3271, %v3267
    %v3284 = vpack.c.bf16 %v3272, %v3268
    %v3285 = vpack.c.bf16 %v3277, %v3273
    %v3286 = vpack.c.bf16 %v3278, %v3274
    %v3287 = vpack.c.bf16 %v3279, %v3275
    %v3288 = vpack.c.bf16 %v3280, %v3276
    %s3289 = scalar_lea.vmem [#allocation7], 256
    %v3290 = vld [vmem:[%s3289] sm:$0xf]
    %v3291 = vld [vmem:[%s3289 + $0x4] sm:$0xf]
    %v3292 = vld [vmem:[%s3289 + $0x8] sm:$0xf]
    %v3293 = vld [vmem:[%s3289 + $0xc] sm:$0xf]
    %v3294 = vld [vmem:[%s3289 + $0x10] sm:$0xf]
    %v3295 = vld [vmem:[%s3289 + $0x14] sm:$0xf]
    %v3296 = vld [vmem:[%s3289 + $0x18] sm:$0xf]
    %v3297 = vld [vmem:[%s3289 + $0x1c] sm:$0xf]
    %v3298 = vld [vmem:[%s3289 + $0x20] sm:$0xf]
    %v3299 = vld [vmem:[%s3289 + $0x24] sm:$0xf]
    %v3300 = vld [vmem:[%s3289 + $0x28] sm:$0xf]
    %v3301 = vld [vmem:[%s3289 + $0x2c] sm:$0xf]
    %v3302 = vld [vmem:[%s3289 + $0x30] sm:$0xf]
    %v3303 = vld [vmem:[%s3289 + $0x34] sm:$0xf]
    %v3304 = vld [vmem:[%s3289 + $0x38] sm:$0xf]
    %v3305 = vld [vmem:[%s3289 + $0x3c] sm:$0xf]
    %v3306 = vld [vmem:[%s3289 + $0x40] sm:$0xf]
    %v3307 = vld [vmem:[%s3289 + $0x44] sm:$0xf]
    %v3308 = vld [vmem:[%s3289 + $0x48] sm:$0xf]
    %v3309 = vld [vmem:[%s3289 + $0x4c] sm:$0xf]
    %v3310 = vld [vmem:[%s3289 + $0x50] sm:$0xf]
    %v3311 = vld [vmem:[%s3289 + $0x54] sm:$0xf]
    %v3312 = vld [vmem:[%s3289 + $0x58] sm:$0xf]
    %v3313 = vld [vmem:[%s3289 + $0x5c] sm:$0xf]
    %v3314 = vld [vmem:[%s3289 + $0x60] sm:$0xf]
    %v3315 = vld [vmem:[%s3289 + $0x64] sm:$0xf]
    %v3316 = vld [vmem:[%s3289 + $0x68] sm:$0xf]
    %v3317 = vld [vmem:[%s3289 + $0x6c] sm:$0xf]
    %v3318 = vld [vmem:[%s3289 + $0x70] sm:$0xf]
    %v3319 = vld [vmem:[%s3289 + $0x74] sm:$0xf]
    %v3320 = vld [vmem:[%s3289 + $0x78] sm:$0xf]
    %v3321 = vld [vmem:[%s3289 + $0x7c] sm:$0xf]
    %v3322 = vld [vmem:[%s3289 + $0x80] sm:$0xf]
    %v3323 = vld [vmem:[%s3289 + $0x84] sm:$0xf]
    %v3324 = vld [vmem:[%s3289 + $0x88] sm:$0xf]
    %v3325 = vld [vmem:[%s3289 + $0x8c] sm:$0xf]
    %v3326 = vld [vmem:[%s3289 + $0x90] sm:$0xf]
    %v3327 = vld [vmem:[%s3289 + $0x94] sm:$0xf]
    %v3328 = vld [vmem:[%s3289 + $0x98] sm:$0xf]
    %v3329 = vld [vmem:[%s3289 + $0x9c] sm:$0xf]
    %v3330 = vld [vmem:[%s3289 + $0xa0] sm:$0xf]
    %v3331 = vld [vmem:[%s3289 + $0xa4] sm:$0xf]
    %v3332 = vld [vmem:[%s3289 + $0xa8] sm:$0xf]
    %v3333 = vld [vmem:[%s3289 + $0xac] sm:$0xf]
    %v3334 = vld [vmem:[%s3289 + $0xb0] sm:$0xf]
    %v3335 = vld [vmem:[%s3289 + $0xb4] sm:$0xf]
    %v3336 = vld [vmem:[%s3289 + $0xb8] sm:$0xf]
    %v3337 = vld [vmem:[%s3289 + $0xbc] sm:$0xf]
    %v3338 = vld [vmem:[%s3289 + $0xc0] sm:$0xf]
    %v3339 = vld [vmem:[%s3289 + $0xc4] sm:$0xf]
    %v3340 = vld [vmem:[%s3289 + $0xc8] sm:$0xf]
    %v3341 = vld [vmem:[%s3289 + $0xcc] sm:$0xf]
    %v3342 = vld [vmem:[%s3289 + $0xd0] sm:$0xf]
    %v3343 = vld [vmem:[%s3289 + $0xd4] sm:$0xf]
    %v3344 = vld [vmem:[%s3289 + $0xd8] sm:$0xf]
    %v3345 = vld [vmem:[%s3289 + $0xdc] sm:$0xf]
    %v3346 = vld [vmem:[%s3289 + $0xe0] sm:$0xf]
    %v3347 = vld [vmem:[%s3289 + $0xe4] sm:$0xf]
    %v3348 = vld [vmem:[%s3289 + $0xe8] sm:$0xf]
    %v3349 = vld [vmem:[%s3289 + $0xec] sm:$0xf]
    %v3350 = vld [vmem:[%s3289 + $0xf0] sm:$0xf]
    %v3351 = vld [vmem:[%s3289 + $0xf4] sm:$0xf]
    %v3352 = vld [vmem:[%s3289 + $0xf8] sm:$0xf]
    %v3353 = vld [vmem:[%s3289 + $0xfc] sm:$0xf]
    %s3354 = scalar_lea.vmem %s14, 1
    %v3355 = vld [vmem:[%s3354] sm:$0x1]
    %v3357 = vlaneseq
    %v3358 = vshrl.u32 %v3357, 7
    %v3359 = vsub.s32 0, %v3358
    %v3360 = vrot.slane %v3355, %v3359
    %v3426 = vunpack.c.l.b16 %v3290
    %v3427 = vunpack.c.l.b16 %v3291
    %v3428 = vunpack.c.l.b16 %v3292
    %v3429 = vunpack.c.l.b16 %v3293
    %v3430 = vunpack.c.l.b16 %v3294
    %v3431 = vunpack.c.l.b16 %v3295
    %v3432 = vunpack.c.l.b16 %v3296
    %v3433 = vunpack.c.l.b16 %v3297
    %v3434 = vunpack.c.l.b16 %v3298
    %v3435 = vunpack.c.l.b16 %v3299
    %v3436 = vunpack.c.l.b16 %v3300
    %v3437 = vunpack.c.l.b16 %v3301
    %v3438 = vunpack.c.l.b16 %v3302
    %v3439 = vunpack.c.l.b16 %v3303
    %v3440 = vunpack.c.l.b16 %v3304
    %v3441 = vunpack.c.l.b16 %v3305
    %v3442 = vunpack.c.l.b16 %v3306
    %v3443 = vunpack.c.l.b16 %v3307
    %v3444 = vunpack.c.l.b16 %v3308
    %v3445 = vunpack.c.l.b16 %v3309
    %v3446 = vunpack.c.l.b16 %v3310
    %v3447 = vunpack.c.l.b16 %v3311
    %v3448 = vunpack.c.l.b16 %v3312
    %v3449 = vunpack.c.l.b16 %v3313
    %v3450 = vunpack.c.l.b16 %v3314
    %v3451 = vunpack.c.l.b16 %v3315
    %v3452 = vunpack.c.l.b16 %v3316
    %v3453 = vunpack.c.l.b16 %v3317
    %v3454 = vunpack.c.l.b16 %v3318
    %v3455 = vunpack.c.l.b16 %v3319
    %v3456 = vunpack.c.l.b16 %v3320
    %v3457 = vunpack.c.l.b16 %v3321
    %v3458 = vunpack.c.l.b16 %v3322
    %v3459 = vunpack.c.l.b16 %v3323
    %v3460 = vunpack.c.l.b16 %v3324
    %v3461 = vunpack.c.l.b16 %v3325
    %v3462 = vunpack.c.l.b16 %v3326
    %v3463 = vunpack.c.l.b16 %v3327
    %v3464 = vunpack.c.l.b16 %v3328
    %v3465 = vunpack.c.l.b16 %v3329
    %v3466 = vunpack.c.l.b16 %v3330
    %v3467 = vunpack.c.l.b16 %v3331
    %v3468 = vunpack.c.l.b16 %v3332
    %v3469 = vunpack.c.l.b16 %v3333
    %v3470 = vunpack.c.l.b16 %v3334
    %v3471 = vunpack.c.l.b16 %v3335
    %v3472 = vunpack.c.l.b16 %v3336
    %v3473 = vunpack.c.l.b16 %v3337
    %v3474 = vunpack.c.l.b16 %v3338
    %v3475 = vunpack.c.l.b16 %v3339
    %v3476 = vunpack.c.l.b16 %v3340
    %v3477 = vunpack.c.l.b16 %v3341
    %v3478 = vunpack.c.l.b16 %v3342
    %v3479 = vunpack.c.l.b16 %v3343
    %v3480 = vunpack.c.l.b16 %v3344
    %v3481 = vunpack.c.l.b16 %v3345
    %v3482 = vunpack.c.l.b16 %v3346
    %v3483 = vunpack.c.l.b16 %v3347
    %v3484 = vunpack.c.l.b16 %v3348
    %v3485 = vunpack.c.l.b16 %v3349
    %v3486 = vunpack.c.l.b16 %v3350
    %v3487 = vunpack.c.l.b16 %v3351
    %v3488 = vunpack.c.l.b16 %v3352
    %v3489 = vunpack.c.l.b16 %v3353
    %v3490 = vpack.c.b16 %v3427, %v3426
    %v3491 = vpack.c.b16 %v3429, %v3428
    %v3492 = vpack.c.b16 %v3431, %v3430
    %v3493 = vpack.c.b16 %v3433, %v3432
    %v3494 = vpack.c.b16 %v3435, %v3434
    %v3495 = vpack.c.b16 %v3437, %v3436
    %v3496 = vpack.c.b16 %v3439, %v3438
    %v3497 = vpack.c.b16 %v3441, %v3440
    %v3498 = vpack.c.b16 %v3443, %v3442
    %v3499 = vpack.c.b16 %v3445, %v3444
    %v3500 = vpack.c.b16 %v3447, %v3446
    %v3501 = vpack.c.b16 %v3449, %v3448
    %v3502 = vpack.c.b16 %v3451, %v3450
    %v3503 = vpack.c.b16 %v3453, %v3452
    %v3504 = vpack.c.b16 %v3455, %v3454
    %v3505 = vpack.c.b16 %v3457, %v3456
    %v3506 = vpack.c.b16 %v3459, %v3458
    %v3507 = vpack.c.b16 %v3461, %v3460
    %v3508 = vpack.c.b16 %v3463, %v3462
    %v3509 = vpack.c.b16 %v3465, %v3464
    %v3510 = vpack.c.b16 %v3467, %v3466
    %v3511 = vpack.c.b16 %v3469, %v3468
    %v3512 = vpack.c.b16 %v3471, %v3470
    %v3513 = vpack.c.b16 %v3473, %v3472
    %v3514 = vpack.c.b16 %v3475, %v3474
    %v3515 = vpack.c.b16 %v3477, %v3476
    %v3516 = vpack.c.b16 %v3479, %v3478
    %v3517 = vpack.c.b16 %v3481, %v3480
    %v3518 = vpack.c.b16 %v3483, %v3482
    %v3519 = vpack.c.b16 %v3485, %v3484
    %v3520 = vpack.c.b16 %v3487, %v3486
    %v3521 = vpack.c.b16 %v3489, %v3488
    %3554 = vmatprep.subr.bf16.mxu0 0
    %3555 = vmatpush1.bf16.msra.mxu0 %v3490
    %3556 = vmatprep.subr.bf16.mxu0 0
    %3557 = vmatpush1.bf16.msra.mxu0 %v3491
    %3558 = vmatprep.subr.bf16.mxu0 0
    %3559 = vmatpush1.bf16.msra.mxu0 %v3492
    %3560 = vmatprep.subr.bf16.mxu0 0
    %3561 = vmatpush1.bf16.msra.mxu0 %v3493
    %3562 = vmatprep.subr.bf16.mxu0 0
    %3563 = vmatpush1.bf16.msra.mxu0 %v3494
    %3564 = vmatprep.subr.bf16.mxu0 0
    %3565 = vmatpush1.bf16.msra.mxu0 %v3495
    %3566 = vmatprep.subr.bf16.mxu0 0
    %3567 = vmatpush1.bf16.msra.mxu0 %v3496
    %3568 = vmatprep.subr.bf16.mxu0 0
    %3569 = vmatpush1.bf16.msra.mxu0 %v3497
    %3570 = vmatprep.subr.bf16.mxu0 0
    %3571 = vmatpush1.bf16.msra.mxu0 %v3498
    %3572 = vmatprep.subr.bf16.mxu0 0
    %3573 = vmatpush1.bf16.msra.mxu0 %v3499
    %3574 = vmatprep.subr.bf16.mxu0 0
    %3575 = vmatpush1.bf16.msra.mxu0 %v3500
    %3576 = vmatprep.subr.bf16.mxu0 0
    %3577 = vmatpush1.bf16.msra.mxu0 %v3501
    %3578 = vmatprep.subr.bf16.mxu0 0
    %3579 = vmatpush1.bf16.msra.mxu0 %v3502
    %3580 = vmatprep.subr.bf16.mxu0 0
    %3581 = vmatpush1.bf16.msra.mxu0 %v3503
    %3582 = vmatprep.subr.bf16.mxu0 0
    %3583 = vmatpush1.bf16.msra.mxu0 %v3504
    %3584 = vmatprep.subr.bf16.mxu0 0
    %3585 = vmatpush1.bf16.msra.mxu0 %v3505
    %3586 = vmatprep.mubr.bf16.mxu0 %v3282
    %3587 = vmatmul.mubr.bf16.gmra.mrb[0].mxu0 %v3281
    %v3588 = vpop.f32.mrb[0].mxu0
    %v3589 = vadd.f32 %v3360, %v3588
    %v3590 = vpop.f32.mrb[0].mxu0
    %v3591 = vpop.f32.mrb[0].mxu0
    %v3592 = vadd.f32 %v3360, %v3591
    %v3593 = vpop.f32.mrb[0].mxu0
    %3594 = vmatprep.mubr.bf16.mxu0 %v3286
    %3595 = vmatmul.mubr.bf16.gmra.mrb[0].mxu0 %v3285
    %v3596 = vpop.f32.mrb[0].mxu0
    %v3597 = vadd.f32 %v3360, %v3596
    %v3598 = vpop.f32.mrb[0].mxu0
    %v3599 = vpop.f32.mrb[0].mxu0
    %v3600 = vadd.f32 %v3360, %v3599
    %v3601 = vpop.f32.mrb[0].mxu0
    %3602 = vdwg.mxu0
    %3603 = vmatprep.subr.bf16.mxu0 0
    %3604 = vmatpush1.bf16.msra.mxu0 %v3506
    %3605 = vmatprep.subr.bf16.mxu0 0
    %3606 = vmatpush1.bf16.msra.mxu0 %v3507
    %3607 = vmatprep.subr.bf16.mxu0 0
    %3608 = vmatpush1.bf16.msra.mxu0 %v3508
    %3609 = vmatprep.subr.bf16.mxu0 0
    %3610 = vmatpush1.bf16.msra.mxu0 %v3509
    %3611 = vmatprep.subr.bf16.mxu0 0
    %3612 = vmatpush1.bf16.msra.mxu0 %v3510
    %3613 = vmatprep.subr.bf16.mxu0 0
    %3614 = vmatpush1.bf16.msra.mxu0 %v3511
    %3615 = vmatprep.subr.bf16.mxu0 0
    %3616 = vmatpush1.bf16.msra.mxu0 %v3512
    %3617 = vmatprep.subr.bf16.mxu0 0
    %3618 = vmatpush1.bf16.msra.mxu0 %v3513
    %3619 = vmatprep.subr.bf16.mxu0 0
    %3620 = vmatpush1.bf16.msra.mxu0 %v3514
    %3621 = vmatprep.subr.bf16.mxu0 0
    %3622 = vmatpush1.bf16.msra.mxu0 %v3515
    %3623 = vmatprep.subr.bf16.mxu0 0
    %3624 = vmatpush1.bf16.msra.mxu0 %v3516
    %3625 = vmatprep.subr.bf16.mxu0 0
    %3626 = vmatpush1.bf16.msra.mxu0 %v3517
    %3627 = vmatprep.subr.bf16.mxu0 0
    %3628 = vmatpush1.bf16.msra.mxu0 %v3518
    %3629 = vmatprep.subr.bf16.mxu0 0
    %3630 = vmatpush1.bf16.msra.mxu0 %v3519
    %3631 = vmatprep.subr.bf16.mxu0 0
    %3632 = vmatpush1.bf16.msra.mxu0 %v3520
    %3633 = vmatprep.subr.bf16.mxu0 0
    %3634 = vmatpush1.bf16.msra.mxu0 %v3521
    %3635 = vmatprep.mubr.bf16.mxu0 %v3284
    %3636 = vmatmul.mubr.bf16.gmra.mrb[0].mxu0 %v3283
    %v3637 = vpop.f32.mrb[0].mxu0
    %v3638 = vadd.f32 %v3589, %v3637
    %v3639 = vpop.f32.mrb[0].mxu0
    %v3640 = vpop.f32.mrb[0].mxu0
    %v3641 = vadd.f32 %v3592, %v3640
    %v3642 = vpop.f32.mrb[0].mxu0
    %3643 = vmatprep.mubr.bf16.mxu0 %v3288
    %3644 = vmatmul.mubr.bf16.gmra.mrb[0].mxu0 %v3287
    %v3645 = vpop.f32.mrb[0].mxu0
    %v3646 = vadd.f32 %v3597, %v3645
    %v3647 = vpop.f32.mrb[0].mxu0
    %v3648 = vpop.f32.mrb[0].mxu0
    %v3649 = vadd.f32 %v3600, %v3648
    %v3650 = vpop.f32.mrb[0].mxu0
    %3651 = vdwg.mxu0
    %v3652 = vadd.f32 %v3638, %v2809
    %v3653 = vadd.f32 %v3641, %v2810
    %v3654 = vadd.f32 %v3646, %v2811
    %v3655 = vadd.f32 %v3649, %v2812
    %s3656 = scalar_lea.vmem %s15, 1
    %v3657 = vld [vmem:[%s3656] sm:$0x1]
    %s3658 = scalar_lea.vmem %s16, 1
    %v3659 = vld [vmem:[%s3658] sm:$0x1]
    %3660 = vadd.xlane.f32.xlu0 %v3652
    %v3661 = vpop.xlane.xlu0 %3660
    %3662 = vadd.xlane.f32.xlu0 %v3653
    %v3663 = vpop.xlane.xlu0 %3662
    %3664 = vadd.xlane.f32.xlu0 %v3654
    %v3665 = vpop.xlane.xlu0 %3664
    %3666 = vadd.xlane.f32.xlu0 %v3655
    %v3667 = vpop.xlane.xlu0 %3666
    %v3668 = vmul.f32 %v3661, %v121
    %v3669 = vmul.f32 %v3663, %v121
    %v3670 = vmul.f32 %v3665, %v121
    %v3671 = vmul.f32 %v3667, %v121
    %v3672 = vsub.f32 %v3652, %v3668
    %v3673 = vsub.f32 %v3653, %v3669
    %v3674 = vsub.f32 %v3654, %v3670
    %v3675 = vsub.f32 %v3655, %v3671
    %v3676 = vmul.f32 %v3672, %v3672
    %v3677 = vmul.f32 %v3673, %v3673
    %v3678 = vmul.f32 %v3674, %v3674
    %v3679 = vmul.f32 %v3675, %v3675
    %3680 = vadd.xlane.f32.xlu0 %v3676
    %v3681 = vpop.xlane.xlu0 %3680
    %3682 = vadd.xlane.f32.xlu0 %v3677
    %v3683 = vpop.xlane.xlu0 %3682
    %3684 = vadd.xlane.f32.xlu0 %v3678
    %v3685 = vpop.xlane.xlu0 %3684
    %3686 = vadd.xlane.f32.xlu0 %v3679
    %v3687 = vpop.xlane.xlu0 %3686
    %v3688 = vmul.f32 %v3681, %v121
    %v3689 = vmul.f32 %v3683, %v121
    %v3690 = vmul.f32 %v3685, %v121
    %v3691 = vmul.f32 %v3687, %v121
    %v3692 = vadd.f32 %v3688, 1e-05
    %v3693 = vadd.f32 %v3689, 1e-05
    %v3694 = vadd.f32 %v3690, 1e-05
    %v3695 = vadd.f32 %v3691, 1e-05
    %v3696 = vrsqrt.pop %v3692
    %v3697 = vrsqrt.pop %v3693
    %v3698 = vrsqrt.pop %v3694
    %v3699 = vrsqrt.pop %v3695
    %v3700 = vmul.f32 %v3672, %v3696
    %v3701 = vmul.f32 %v3673, %v3697
    %v3702 = vmul.f32 %v3674, %v3698
    %v3703 = vmul.f32 %v3675, %v3699
    %v3705 = vlaneseq
    %v3706 = vshrl.u32 %v3705, 7
    %v3707 = vsub.s32 0, %v3706
    %v3708 = vrot.slane %v3657, %v3707
    %v3710 = vmul.f32 %v3700, %v3708
    %v3711 = vmul.f32 %v3701, %v3708
    %v3712 = vmul.f32 %v3702, %v3708
    %v3713 = vmul.f32 %v3703, %v3708
    %v3715 = vlaneseq
    %v3716 = vshrl.u32 %v3715, 7
    %v3717 = vsub.s32 0, %v3716
    %v3718 = vrot.slane %v3659, %v3717
    %v3720 = vadd.f32 %v3710, %v3718
    %v3721 = vadd.f32 %v3711, %v3718
    %v3722 = vadd.f32 %v3712, %v3718
    %v3723 = vadd.f32 %v3713, %v3718
    %v3725 = vrot.slane %v3721, 7
    %v3728 = vrot.slane %v3722, 6
    %v3731 = vrot.slane %v3723, 5
    %vm3733 = vcmask 1040384
    %v3734 = vsel %vm3733, %v3720, %v3725
    %vm3735 = vcmask 1041408
    %v3736 = vsel %vm3735, %v3734, %v3728
    %vm3737 = vcmask 1042432
    %v3738 = vsel %vm3737, %v3736, %v3731
    %v3739 = vpack.c.bf16 %v3738, %v3738
    %v3740 = vld [vmem:[%s17] sm:$0xf]
    %v3741 = vld [vmem:[%s17 + $0x4] sm:$0xf]
    %v3742 = vld [vmem:[%s17 + $0x8] sm:$0xf]
    %v3743 = vld [vmem:[%s17 + $0xc] sm:$0xf]
    %v3744 = vld [vmem:[%s17 + $0x10] sm:$0xf]
    %v3745 = vld [vmem:[%s17 + $0x14] sm:$0xf]
    %v3746 = vld [vmem:[%s17 + $0x18] sm:$0xf]
    %v3747 = vld [vmem:[%s17 + $0x1c] sm:$0xf]
    %v3748 = vld [vmem:[%s17 + $0x20] sm:$0xf]
    %v3749 = vld [vmem:[%s17 + $0x24] sm:$0xf]
    %v3750 = vld [vmem:[%s17 + $0x28] sm:$0xf]
    %v3751 = vld [vmem:[%s17 + $0x2c] sm:$0xf]
    %v3752 = vld [vmem:[%s17 + $0x30] sm:$0xf]
    %v3753 = vld [vmem:[%s17 + $0x34] sm:$0xf]
    %v3754 = vld [vmem:[%s17 + $0x38] sm:$0xf]
    %v3755 = vld [vmem:[%s17 + $0x3c] sm:$0xf]
    %v3756 = vld [vmem:[%s18] sm:$0x1]
    %v3758 = vlaneseq
    %v3759 = vshrl.u32 %v3758, 7
    %v3760 = vsub.s32 0, %v3759
    %v3761 = vrot.slane %v3756, %v3760
    %v3779 = vunpack.c.l.b16 %v3740
    %v3780 = vunpack.c.l.b16 %v3741
    %v3781 = vunpack.c.l.b16 %v3742
    %v3782 = vunpack.c.l.b16 %v3743
    %v3783 = vunpack.c.l.b16 %v3744
    %v3784 = vunpack.c.l.b16 %v3745
    %v3785 = vunpack.c.l.b16 %v3746
    %v3786 = vunpack.c.l.b16 %v3747
    %v3787 = vunpack.c.l.b16 %v3748
    %v3788 = vunpack.c.l.b16 %v3749
    %v3789 = vunpack.c.l.b16 %v3750
    %v3790 = vunpack.c.l.b16 %v3751
    %v3791 = vunpack.c.l.b16 %v3752
    %v3792 = vunpack.c.l.b16 %v3753
    %v3793 = vunpack.c.l.b16 %v3754
    %v3794 = vunpack.c.l.b16 %v3755
    %v3795 = vpack.c.b16 %v3780, %v3779
    %v3796 = vpack.c.b16 %v3782, %v3781
    %v3797 = vpack.c.b16 %v3784, %v3783
    %v3798 = vpack.c.b16 %v3786, %v3785
    %v3799 = vpack.c.b16 %v3788, %v3787
    %v3800 = vpack.c.b16 %v3790, %v3789
    %v3801 = vpack.c.b16 %v3792, %v3791
    %v3802 = vpack.c.b16 %v3794, %v3793
    %3811 = vmatprep.subr.bf16.mxu0 0
    %3812 = vmatpush1.bf16.msra.mxu0 %v3795
    %3813 = vmatprep.subr.bf16.mxu0 0
    %3814 = vmatpush1.bf16.msra.mxu0 %v3796
    %3815 = vmatprep.subr.bf16.mxu0 0
    %3816 = vmatpush1.bf16.msra.mxu0 %v3797
    %3817 = vmatprep.subr.bf16.mxu0 0
    %3818 = vmatpush1.bf16.msra.mxu0 %v3798
    %3819 = vmatprep.subr.bf16.mxu0 0
    %3820 = vmatpush1.bf16.msra.mxu0 %v3799
    %3821 = vmatprep.subr.bf16.mxu0 0
    %3822 = vmatpush1.bf16.msra.mxu0 %v3800
    %3823 = vmatprep.subr.bf16.mxu0 0
    %3824 = vmatpush1.bf16.msra.mxu0 %v3801
    %3825 = vmatprep.subr.bf16.mxu0 0
    %3826 = vmatpush1.bf16.msra.mxu0 %v3802
    %3827 = vmatprep.subr.bf16.mxu0 0
    %3828 = vmatpush1.bf16.msra.mxu0 0
    %3829 = vmatprep.subr.bf16.mxu0 0
    %3830 = vmatpush1.bf16.msra.mxu0 0
    %3831 = vmatprep.subr.bf16.mxu0 0
    %3832 = vmatpush1.bf16.msra.mxu0 0
    %3833 = vmatprep.subr.bf16.mxu0 0
    %3834 = vmatpush1.bf16.msra.mxu0 0
    %3835 = vmatprep.subr.bf16.mxu0 0
    %3836 = vmatpush1.bf16.msra.mxu0 0
    %3837 = vmatprep.subr.bf16.mxu0 0
    %3838 = vmatpush1.bf16.msra.mxu0 0
    %3839 = vmatprep.subr.bf16.mxu0 0
    %3840 = vmatpush1.bf16.msra.mxu0 0
    %3841 = vmatprep.subr.bf16.mxu0 0
    %3842 = vmatpush1.bf16.msra.mxu0 0
    %3843 = vmatprep.mubr.bf16.mxu0 0
    %3844 = vmatmul.mubr.bf16.gmra.mrb[0].mxu0 %v3739
    %v3845 = vpop.f32.mrb[0].mxu0
    %v3846 = vadd.f32 %v3761, %v3845
    %v3847 = vpop.f32.mrb[0].mxu0
    %v3848 = vpop.f32.mrb[0].mxu0
    %v3849 = vpop.f32.mrb[0].mxu0
    %3850 = vdwg.mxu0
    %v3851 = vtanh.pop %v3846
    %v3853 = vrot.slane %v3851, 2
    %v3855 = vmul.f32 %v3851, %v3853
    %v3856 = vsel %vm3735, %v3855, 0.0
    %3857 = vadd.xlane.f32.xlu0 %v3856
    %v3858 = vpop.xlane.xlu0 %3857
    %v3859 = vmul.f32 %v3851, %v3851
    %v3860 = vsel %vm3735, %v3859, 0.0
    %3861 = vadd.xlane.f32.xlu0 %v3860
    %v3862 = vpop.xlane.xlu0 %3861
    %vm3863 = vcmask 1043458
    %v3864 = vsel %vm3863, %v3859, 0.0
    %3865 = vadd.xlane.f32.xlu0 %v3864
    %v3866 = vpop.xlane.xlu0 %3865
    %v3868 = vrot.slane %v3866, 2
    %v3870 = vmul.f32 %v3862, %v3868
    %v3871 = vmax.f32 %v3870, 1e-12
    %v3872 = vrsqrt.pop %v3871
    %v3873 = vmul.f32 %v3858, %v3872
    %vm3874 = vcmask 1024
    %3875 = vst.msk [vmem:[%s19] sm:$0x3] %vm3874, %v3873
    %s3876 = sld [smem:[#allocation2]]
    %v3877 = vstv %s3876
    %s3878 = sld [smem:[#allocation2 + $0x1]]
    %v3879 = vstv %s3878
    %v3880 = vsel %vm3733, %v3877, %v3879
    %vm3881 = vcmp.gt.f32.partialorder %v3880, 0.0
    %v3882 = vsub.f32 1.0, %v3873
    %v3883 = vmax.f32 %v3873, 0.0
    %v3884 = vsel %vm3881, %v3882, %v3883
    %v3885 = vsel %vm3874, %v3884, 0.0
    %v3886 = vrot.slane %v3885, 4
    %v3887 = vadd.f32 %v3885, %v3886
    %v3888 = vrot.slane %v3887, 2
    %v3889 = vadd.f32 %v3887, %v3888
    %v3890 = vrot.slane %v3889, 1
    %v3891 = vadd.f32 %v3889, %v3890
    %v3892 = vmul.f32 %v3891, 0.5
    %vm3893 = vcmask 0
    %3894 = vst.msk [vmem:[#allocation9] sm:$0x1] %vm3893, %v3892
    // Predicated region
    $region90: #{roberta_forward.1} parent=1 // pred_check
      _
    $region91: #{roberta_forward.1} parent=1 // pred_check_branch
      %3896 = sbr.rel (0) target = $region93
    $region92: #{roberta_forward.1} parent=1 // pred_region
      _
    $region93: #{roberta_forward.1} parent=1 // pred_fallthru
      _
    // Predicated region
    $region94: #{roberta_forward.1} parent=1 // pred_check
      _
    $region95: #{roberta_forward.1} parent=1 // pred_check_branch
      %3898 = sbr.rel (0) target = $region97
    $region96: #{roberta_forward.1} parent=1 // pred_region
      %s3900 = ssub.s32 16, 16
      %3901 = vsyncadd [#allocation4], %s3900
      %s3903 = sshll.u32 [#allocation9], 4
      %s3904 = int_to_ptr.vmem [resolvable:$true] %s3903
      %3906 = dma.vmem_to_hbm [thread:$0]  %s3904, 16, %s20, [#allocation4]
    $region97: #{roberta_forward.1} parent=1 // pred_fallthru
      _
    // Predicated region
    $region98: #{roberta_forward.1} parent=1 // pred_check
      _
    $region99: #{roberta_forward.1} parent=1 // pred_check_branch
      %3908 = sbr.rel (0) target = $region101
    $region100: #{roberta_forward.1} parent=1 // pred_region
      _
    $region101: #{roberta_forward.1} parent=1 // pred_fallthru
      _
    // Predicated region
    $region102: #{roberta_forward.1} parent=1 // pred_check
      _
    $region103: #{roberta_forward.1} parent=1 // pred_check_branch
      %3910 = sbr.rel (0) target = $region105
    $region104: #{roberta_forward.1} parent=1 // pred_region
      %3911 = dma.done [#allocation4], 16
    $region105: #{roberta_forward.1} parent=1 // pred_fallthru
      _
    %3912 = vsyncpa [#allocation3], 1
    %3913 = vsyncpa [#allocation8], 1
    %3914 = vsyncpa [#allocation4], 1
    %3915 = vsyncpa [#allocation5], 1

</llo_original>
